<compile_context>
chip_gen: v5e
topology: v5e:2x2
jax: 0.10.0
libtpu: 0.0.40
codegen_flags: <defaults>
</compile_context>

<pallas_src>
import functools

import jax
import jax.numpy as jnp
from jax.experimental import pallas as pl
from jax.experimental.pallas import tpu as pltpu  # noqa: F401  (TPU backend)

# ----------------------------- configuration --------------------------------
HIDDEN_DIMS = [8, 16, 16, 32]   # config.hidden_dims (original order)
LATENT_DIM = 16                 # config.latent_dim
NUM_CLASSES = 10                # config.num_classes
COND_DIM = 8                    # config.condition_embedding_dim
BN_EPS = 1e-5
LRELU_SLOPE = 0.01


# ------------------------------ Pallas kernels -------------------------------
def _gemm_bn_lrelu_kernel(w_ref, cols_ref, bias_ref, gamma_ref, beta_ref,
                          o_ref, *, phases, eps, slope):
    """out = LeakyReLU(BN(W @ cols + bias)).

    W: (R, K) bf16, cols: (K, M) bf16, bias/gamma/beta: (R, 1) f32.
    Rows are grouped phase-major: r = phase*C + channel, C = R // phases.
    BatchNorm uses biased batch statistics over all M columns and all
    `phases` row-groups of a channel (training-mode BN over N*H*W).
    All epilogue math stays in f32 (v5e-safe).
    """
    acc = jnp.dot(w_ref[...], cols_ref[...],
                  preferred_element_type=jnp.float32)
    acc = acc + bias_ref[...]
    R, M = acc.shape
    C = R // phases
    inv_cnt = 1.0 / float(M * phases)

    row_sum = jnp.sum(acc, axis=1, keepdims=True)          # (R, 1)
    row_sqsum = jnp.sum(acc * acc, axis=1, keepdims=True)  # (R, 1)
    if phases == 1:
        mean = row_sum * inv_cnt
        meansq = row_sqsum * inv_cnt
    else:
        ch_sum = row_sum[0:C]
        ch_sqsum = row_sqsum[0:C]
        for p in range(1, phases):
            ch_sum = ch_sum + row_sum[p * C:(p + 1) * C]
            ch_sqsum = ch_sqsum + row_sqsum[p * C:(p + 1) * C]
        mean = jnp.concatenate([ch_sum * inv_cnt] * phases, axis=0)
        meansq = jnp.concatenate([ch_sqsum * inv_cnt] * phases, axis=0)

    var = meansq - mean * mean                              # biased, like torch
    y = (acc - mean) * jax.lax.rsqrt(var + eps) * gamma_ref[...] + beta_ref[...]
    o_ref[...] = jnp.where(y >= 0, y, slope * y)


def _gemm_bias_kernel(w_ref, x_ref, bias_ref, o_ref, *, activation):
    acc = jnp.dot(w_ref[...], x_ref[...], preferred_element_type=jnp.float32)
    acc = acc + bias_ref[...]
    if activation == "tanh":
        acc = jnp.tanh(acc)
    o_ref[...] = acc


def fused_gemm_bn_lrelu(w, cols, bias, gamma, beta, *, phases):
    """(R,K)@(K,M) + bias -> BN -> LeakyReLU, single block (shapes are tiny)."""
    R, K = w.shape
    _, M = cols.shape
    return pl.pallas_call(
        functools.partial(_gemm_bn_lrelu_kernel, phases=phases,
                          eps=BN_EPS, slope=LRELU_SLOPE),
        out_shape=jax.ShapeDtypeStruct((R, M), jnp.float32),
        grid=(1,),
        in_specs=[
            pl.BlockSpec((R, K), lambda i: (0, 0)),
            pl.BlockSpec((K, M), lambda i: (0, 0)),
            pl.BlockSpec((R, 1), lambda i: (0, 0)),
            pl.BlockSpec((R, 1), lambda i: (0, 0)),
            pl.BlockSpec((R, 1), lambda i: (0, 0)),
        ],
        out_specs=pl.BlockSpec((R, M), lambda i: (0, 0)),
    )(w, cols.astype(jnp.bfloat16), bias, gamma, beta)


def gemm_bias(w, x, bias, activation="none"):
    """(R,K)@(K,M) + bias (+ optional tanh)."""
    R, K = w.shape
    _, M = x.shape
    return pl.pallas_call(
        functools.partial(_gemm_bias_kernel, activation=activation),
        out_shape=jax.ShapeDtypeStruct((R, M), jnp.float32),
        grid=(1,),
        in_specs=[
            pl.BlockSpec((R, K), lambda i: (0, 0)),
            pl.BlockSpec((K, M), lambda i: (0, 0)),
            pl.BlockSpec((R, 1), lambda i: (0, 0)),
        ],
        out_specs=pl.BlockSpec((R, M), lambda i: (0, 0)),
    )(w, x.astype(jnp.bfloat16), bias)


# ------------------------------ conv as GEMM ---------------------------------
def _im2col_cnhw(x, k, stride, pad_lo, pad_hi):
    """x: (C, N, H, W)  ->  cols: (C*k*k, N*Ho*Wo) with c-major (c, kh, kw)
    row ordering and lane-dense (n, i, j) column ordering."""
    C, N, H, W = x.shape
    xp = jnp.pad(x, ((0, 0), (0, 0), (pad_lo, pad_hi), (pad_lo, pad_hi)))
    Hp, Wp = H + pad_lo + pad_hi, W + pad_lo + pad_hi
    Ho = (Hp - k) // stride + 1
    Wo = (Wp - k) // stride + 1
    patches = []
    for i in range(k):
        for j in range(k):
            patches.append(
                xp[:, :,
                   i:i + stride * (Ho - 1) + 1:stride,
                   j:j + stride * (Wo - 1) + 1:stride])
    cols = jnp.stack(patches, axis=1)                  # (C, k*k, N, Ho, Wo)
    return cols.reshape(C * k * k, N * Ho * Wo), Ho, Wo


def conv_bn_lrelu(x, layer, *, stride, pad):
    """Conv2d(k=3) + BN + LeakyReLU on a CNHW slab. layer['w']: (C_out, C_in*9)."""
    C_out = layer["b"].shape[0]
    B = x.shape[1]
    cols, Ho, Wo = _im2col_cnhw(x, 3, stride, pad, pad)
    out = fused_gemm_bn_lrelu(layer["w"], cols, layer["b"],
                              layer["gamma"], layer["beta"], phases=1)
    return out.reshape(C_out, B, Ho, Wo)


def convt_bn_lrelu(x, layer):
    """ConvTranspose2d(k=3, s=2, p=1, op=1) + BN + LeakyReLU via the 4-phase
    decomposition: one GEMM over 2x2 patches of the un-dilated input."""
    C_in, B, H, W = x.shape
    C_out = layer["w"].shape[0] // 4
    cols, _, _ = _im2col_cnhw(x, 2, 1, 0, 1)           # (C_in*4, B*H*W)
    out = fused_gemm_bn_lrelu(layer["w"], cols, layer["b"],
                              layer["gamma"], layer["beta"], phases=4)
    # rows are (a, b, c_out) phase-major; interleave phases back to space
    out = out.reshape(2, 2, C_out, B, H, W)
    out = out.transpose(2, 3, 4, 0, 5, 1).reshape(C_out, B, 2 * H, 2 * W)
    return out


def _convt_phase_weight(w):
    """PyTorch ConvTranspose2d weight (C_in, C_out, 3, 3) [s=2, p=1, op=1]
    -> dense 4-phase GEMM weight (4*C_out, C_in*4).

    Output pixel (2i+a, 2j+b) = sum over (dh, dw) in {0,1}^2 of the
    bottom/right zero-padded input at (i+dh, j+dw) times the tap
    w[:, :, kh(a,dh), kw(b,dw)], with kh(0,0)=1, kh(1,0)=2, kh(1,1)=0 and
    kh(0,1) contributing zero (same for kw)."""
    C_in, C_out = w.shape[0], w.shape[1]
    zero = jnp.zeros((C_in, C_out), w.dtype)
    kidx = {(0, 0): 1, (1, 0): 2, (1, 1): 0}
    blocks = []
    for a in (0, 1):
        for b in (0, 1):
            taps = []
            for dh in (0, 1):
                for dw in (0, 1):
                    kh = kidx.get((a, dh))
                    kw = kidx.get((b, dw))
                    taps.append(zero if (kh is None or kw is None)
                                else w[:, :, kh, kw])
            blk = jnp.stack(taps, axis=1).reshape(C_in * 4, C_out)  # (ci,dh,dw)
            blocks.append(blk.T)                                    # (C_out, C_in*4)
    return jnp.concatenate(blocks, axis=0)    # rows: phase-major then c_out


# ------------------------------ parameters -----------------------------------
def init_params(key):
    """Raw PyTorch-layout parameters, reproducing the construction order of the
    reference (including the in-place hidden_dims.reverse() done by the base
    VAE's Decoder BEFORE the CVAE rebuilds encoder/decoder)."""
    keys = iter(jax.random.split(key, 128))

    def nrm(shape, scale=0.05):
        return scale * jax.random.normal(next(keys), shape, jnp.float32)

    hd = list(HIDDEN_DIMS)
    hd.reverse()                                   # after VAE.__init__

    params = {}
    enc = []
    in_ch = 3 + COND_DIM
    for h in hd:
        enc.append(dict(w=nrm((h, in_ch, 3, 3)), b=nrm((h,)),
                        gamma=jnp.ones((h,), jnp.float32),
                        beta=jnp.zeros((h,), jnp.float32)))
        in_ch = h
    params["enc"] = enc
    flatten_dim = hd[-1]
    params["fc_mu"] = dict(w=nrm((LATENT_DIM, flatten_dim)), b=nrm((LATENT_DIM,)))
    params["fc_var"] = dict(w=nrm((LATENT_DIM, flatten_dim)), b=nrm((LATENT_DIM,)))

    dd = list(hd)
    params["dec_input"] = dict(w=nrm((dd[-1], LATENT_DIM + COND_DIM)),
                               b=nrm((dd[-1],)))
    dd.reverse()
    dec = []
    for i in range(len(dd) - 1):
        dec.append(dict(w=nrm((dd[i], dd[i + 1], 3, 3)), b=nrm((dd[i + 1],)),
                        gamma=jnp.ones((dd[i + 1],), jnp.float32),
                        beta=jnp.zeros((dd[i + 1],), jnp.float32)))
    params["dec"] = dec
    params["final_ct"] = dict(w=nrm((dd[-1], dd[-1], 3, 3)), b=nrm((dd[-1],)),
                              gamma=jnp.ones((dd[-1],), jnp.float32),
                              beta=jnp.zeros((dd[-1],), jnp.float32))
    params["final_conv"] = dict(w=nrm((3, dd[-1], 3, 3)), b=nrm((3,)))
    params["emb"] = nrm((NUM_CLASSES, COND_DIM), scale=1.0)
    return params


def prepare_params(raw):
    """One-time weight prep: GEMM-ready layouts, bf16 MXU operands, stacked
    fc_mu/fc_var, 4-phase convT weights, per-phase-tiled BN params."""
    prep = {}

    def conv_layer(l):
        c = l["w"].shape[0]
        return dict(w=l["w"].reshape(c, -1).astype(jnp.bfloat16),
                    b=l["b"].reshape(c, 1),
                    gamma=l["gamma"].reshape(c, 1),
                    beta=l["beta"].reshape(c, 1))

    def convt_layer(l):
        c = l["w"].shape[1]
        return dict(w=_convt_phase_weight(l["w"]).astype(jnp.bfloat16),
                    b=jnp.tile(l["b"], 4).reshape(4 * c, 1),
                    gamma=jnp.tile(l["gamma"], 4).reshape(4 * c, 1),
                    beta=jnp.tile(l["beta"], 4).reshape(4 * c, 1))

    prep["enc"] = [conv_layer(l) for l in raw["enc"]]
    prep["fc_mv_w"] = jnp.concatenate(
        [raw["fc_mu"]["w"], raw["fc_var"]["w"]], axis=0).astype(jnp.bfloat16)
    prep["fc_mv_b"] = jnp.concatenate(
        [raw["fc_mu"]["b"], raw["fc_var"]["b"]]).reshape(-1, 1)
    prep["dec_in_w"] = raw["dec_input"]["w"].astype(jnp.bfloat16)
    prep["dec_in_b"] = raw["dec_input"]["b"].reshape(-1, 1)
    prep["dec"] = [convt_layer(l) for l in raw["dec"]]
    prep["final_ct"] = convt_layer(raw["final_ct"])
    prep["final_conv_w"] = raw["final_conv"]["w"].reshape(3, -1).astype(jnp.bfloat16)
    prep["final_conv_b"] = raw["final_conv"]["b"].reshape(3, 1)
    prep["emb"] = raw["emb"]
    return prep


# ------------------------------ forward pass ----------------------------------
def cvae_forward(params, x, c, noise_key):
    B, _, H, W = x.shape
    # condition embedding, broadcast to a spatial map, concat on channels.
    c_embed = params["emb"][c]                                  # (B, cond)
    x_t = jnp.transpose(x, (1, 0, 2, 3))                        # (3, B, H, W)
    c_map = jnp.broadcast_to(c_embed.T[:, :, None, None],
                             (COND_DIM, B, H, W))
    h = jnp.concatenate([x_t, c_map], axis=0)                   # (3+cond, B, H, W)

    # encoder: [Conv2d(s=2,p=1,k=3) -> BN -> LeakyReLU] * 4, one kernel each.
    for layer in params["enc"]:
        h = conv_bn_lrelu(h, layer, stride=2, pad=1)

    # flatten (encoder collapses 16x16 -> 1x1; valid for H=W=16 only).
    flat_t = h.reshape(h.shape[0], B)                           # (C_enc, B)

    # fc_mu and fc_var stacked into one GEMM.
    mv = gemm_bias(params["fc_mv_w"], flat_t, params["fc_mv_b"])   # (2*latent, B)
    mu_t, logvar_t = mv[:LATENT_DIM], mv[LATENT_DIM:]

    # reparameterize
    eps = jax.random.normal(noise_key, mu_t.shape, jnp.float32)
    z_t = mu_t + eps * jnp.exp(0.5 * logvar_t)
    z_c_t = jnp.concatenate([z_t, c_embed.T], axis=0)           # (latent+cond, B)

    # decoder input linear -> (C, B, 1, 1) CNHW slab (no transpose needed)
    d = gemm_bias(params["dec_in_w"], z_c_t, params["dec_in_b"])
    d = d.reshape(d.shape[0], B, 1, 1)

    # decoder: [ConvT(s=2,p=1,op=1) -> BN -> LeakyReLU] * 3, one kernel each.
    for layer in params["dec"]:
        d = convt_bn_lrelu(d, layer)

    # final layer: ConvT -> BN -> LeakyReLU -> Conv(3) -> Tanh
    d = convt_bn_lrelu(d, params["final_ct"])
    cols, Ho, Wo = _im2col_cnhw(d, 3, 1, 1, 1)
    out = gemm_bias(params["final_conv_w"], cols, params["final_conv_b"],
                    activation="tanh")                          # (3, B*H*W)
    recon = out.reshape(3, B, Ho, Wo).transpose(1, 0, 2, 3)     # back to NCHW
    return recon, mu_t.T, logvar_t.T


# ----------------------------------- main -------------------------------------
if __name__ == "__main__":
    root = jax.random.PRNGKey(0)
    k_param, k_x, k_c, k_noise = jax.random.split(root, 4)

    params = prepare_params(init_params(k_param))
    B, H, W = 2, 16, 16
    x = jax.random.normal(k_x, (B, 3, H, W), jnp.float32)       # NCHW
    c = jax.random.randint(k_c, (B,), 0, NUM_CLASSES, jnp.int32)

    fwd = jax.jit(cvae_forward)
    recon, mu, log_var = fwd(params, x, c, k_noise)
    jax.block_until_ready((recon, mu, log_var))

    assert recon.shape == (B, 3, H, W), recon.shape
    assert mu.shape == (B, LATENT_DIM), mu.shape
    assert log_var.shape == (B, LATENT_DIM), log_var.shape
    assert bool(jnp.all(jnp.isfinite(recon)))
    assert bool(jnp.all(jnp.abs(recon) <= 1.0))
    print("KERNEL_OK")
</pallas_src>

<mosaic_0001>
module attributes {stable_mosaic.version = 11 : i64} {
  func.func @_gemm_bn_lrelu_kernel(%arg0: i32, %arg1: memref<32x99xbf16, #tpu.memory_space<vmem>>, %arg2: memref<99x128xbf16, #tpu.memory_space<vmem>>, %arg3: memref<32x1xf32, #tpu.memory_space<vmem>>, %arg4: memref<32x1xf32, #tpu.memory_space<vmem>>, %arg5: memref<32x1xf32, #tpu.memory_space<vmem>>, %arg6: memref<32x128xf32, #tpu.memory_space<vmem>>) attributes {dimension_semantics = [#tpu.dimension_semantics<arbitrary>], iteration_bounds = array<i64: 1>, scalar_prefetch = 0 : i64, scratch_operands = 0 : i64, tpu.core_type = #tpu.core_type<tc>, window_params = [{pipeline_mode = #tpu.pipeline_mode<synchronous>, transform_indices = @transform_0, window_bounds = array<i64: 32, 99>}, {pipeline_mode = #tpu.pipeline_mode<synchronous>, transform_indices = @transform_1, window_bounds = array<i64: 99, 128>}, {pipeline_mode = #tpu.pipeline_mode<synchronous>, transform_indices = @transform_2, window_bounds = array<i64: 32, 1>}, {pipeline_mode = #tpu.pipeline_mode<synchronous>, transform_indices = @transform_3, window_bounds = array<i64: 32, 1>}, {pipeline_mode = #tpu.pipeline_mode<synchronous>, transform_indices = @transform_4, window_bounds = array<i64: 32, 1>}, {pipeline_mode = #tpu.pipeline_mode<synchronous>, transform_indices = @transform_5, window_bounds = array<i64: 32, 128>}]} {
    %c0 = arith.constant 0 : index
    %c0_0 = arith.constant 0 : index
    %0 = vector.load %arg1[%c0, %c0_0] : memref<32x99xbf16, #tpu.memory_space<vmem>>, vector<32x99xbf16>
    %c0_1 = arith.constant 0 : index
    %c0_2 = arith.constant 0 : index
    %1 = vector.load %arg2[%c0_1, %c0_2] : memref<99x128xbf16, #tpu.memory_space<vmem>>, vector<99x128xbf16>
    %cst = arith.constant dense<0.000000e+00> : vector<32x128xf32>
    %2 = tpu.matmul %0, %1, %cst {dimension_numbers = #tpu.dot_dimension_numbers<[1], [0], [0], [1], [0, 0, 1, 1], [], []>} : vector<32x99xbf16>, vector<99x128xbf16>, vector<32x128xf32> -> vector<32x128xf32>
    %c0_3 = arith.constant 0 : index
    %c0_4 = arith.constant 0 : index
    %3 = vector.load %arg3[%c0_3, %c0_4] : memref<32x1xf32, #tpu.memory_space<vmem>>, vector<32x1xf32>
    %4 = vector.broadcast %3 : vector<32x1xf32> to vector<32x128xf32>
    %5 = arith.addf %2, %4 : vector<32x128xf32>
    %cst_5 = arith.constant dense<0.000000e+00> : vector<32xf32>
    %6 = vector.multi_reduction <add>, %5, %cst_5 [1] : vector<32x128xf32> to vector<32xf32>
    %7 = vector.shape_cast %6 : vector<32xf32> to vector<32x1xf32>
    %8 = arith.mulf %5, %5 : vector<32x128xf32>
    %cst_6 = arith.constant dense<0.000000e+00> : vector<32xf32>
    %9 = vector.multi_reduction <add>, %8, %cst_6 [1] : vector<32x128xf32> to vector<32xf32>
    %10 = vector.shape_cast %9 : vector<32xf32> to vector<32x1xf32>
    %cst_7 = arith.constant 7.812500e-03 : f32
    %11 = vector.broadcast %cst_7 : f32 to vector<32x1xf32>
    %12 = arith.mulf %7, %11 : vector<32x1xf32>
    %cst_8 = arith.constant 7.812500e-03 : f32
    %13 = vector.broadcast %cst_8 : f32 to vector<32x1xf32>
    %14 = arith.mulf %10, %13 : vector<32x1xf32>
    %15 = arith.mulf %12, %12 : vector<32x1xf32>
    %16 = arith.subf %14, %15 : vector<32x1xf32>
    %17 = vector.broadcast %12 : vector<32x1xf32> to vector<32x128xf32>
    %18 = arith.subf %5, %17 : vector<32x128xf32>
    %cst_9 = arith.constant 9.99999974E-6 : f32
    %19 = vector.broadcast %cst_9 : f32 to vector<32x1xf32>
    %20 = arith.addf %16, %19 : vector<32x1xf32>
    %21 = math.rsqrt %20 : vector<32x1xf32>
    %22 = vector.broadcast %21 : vector<32x1xf32> to vector<32x128xf32>
    %23 = arith.mulf %18, %22 : vector<32x128xf32>
    %c0_10 = arith.constant 0 : index
    %c0_11 = arith.constant 0 : index
    %24 = vector.load %arg4[%c0_10, %c0_11] : memref<32x1xf32, #tpu.memory_space<vmem>>, vector<32x1xf32>
    %25 = vector.broadcast %24 : vector<32x1xf32> to vector<32x128xf32>
    %26 = arith.mulf %23, %25 : vector<32x128xf32>
    %c0_12 = arith.constant 0 : index
    %c0_13 = arith.constant 0 : index
    %27 = vector.load %arg5[%c0_12, %c0_13] : memref<32x1xf32, #tpu.memory_space<vmem>>, vector<32x1xf32>
    %28 = vector.broadcast %27 : vector<32x1xf32> to vector<32x128xf32>
    %29 = arith.addf %26, %28 : vector<32x128xf32>
    %cst_14 = arith.constant 0.000000e+00 : f32
    %30 = vector.broadcast %cst_14 : f32 to vector<32x128xf32>
    %31 = arith.cmpf oge, %29, %30 : vector<32x128xf32>
    %cst_15 = arith.constant 0.00999999977 : f32
    %32 = vector.broadcast %cst_15 : f32 to vector<32x128xf32>
    %33 = arith.mulf %32, %29 : vector<32x128xf32>
    %34 = arith.select %31, %29, %33 : vector<32x128xi1>, vector<32x128xf32>
    %c0_16 = arith.constant 0 : index
    %c0_17 = arith.constant 0 : index
    %35 = vector.load %arg6[%c0_16, %c0_17] : memref<32x128xf32, #tpu.memory_space<vmem>>, vector<32x128xf32>
    tpu.vector_store %arg6[%c0_16, %c0_17], %34 {strides = array<i32>} : memref<32x128xf32, #tpu.memory_space<vmem>>, vector<32x128xf32>,
    return
  }
  func.func @transform_0(%arg0: i32) -> (i32, i32) {
    %c0_i32 = arith.constant 0 : i32
    %c0_i32_0 = arith.constant 0 : i32
    %c0_i32_1 = arith.constant 0 : i32
    return %c0_i32, %c0_i32_0 : i32, i32
  }
  func.func @transform_1(%arg0: i32) -> (i32, i32) {
    %c0_i32 = arith.constant 0 : i32
    %c0_i32_0 = arith.constant 0 : i32
    %c0_i32_1 = arith.constant 0 : i32
    return %c0_i32, %c0_i32_0 : i32, i32
  }
  func.func @transform_2(%arg0: i32) -> (i32, i32) {
    %c0_i32 = arith.constant 0 : i32
    %c0_i32_0 = arith.constant 0 : i32
    %c0_i32_1 = arith.constant 0 : i32
    return %c0_i32, %c0_i32_0 : i32, i32
  }
  func.func @transform_3(%arg0: i32) -> (i32, i32) {
    %c0_i32 = arith.constant 0 : i32
    %c0_i32_0 = arith.constant 0 : i32
    %c0_i32_1 = arith.constant 0 : i32
    return %c0_i32, %c0_i32_0 : i32, i32
  }
  func.func @transform_4(%arg0: i32) -> (i32, i32) {
    %c0_i32 = arith.constant 0 : i32
    %c0_i32_0 = arith.constant 0 : i32
    %c0_i32_1 = arith.constant 0 : i32
    return %c0_i32, %c0_i32_0 : i32, i32
  }
  func.func @transform_5(%arg0: i32) -> (i32, i32) {
    %c0_i32 = arith.constant 0 : i32
    %c0_i32_0 = arith.constant 0 : i32
    %c0_i32_1 = arith.constant 0 : i32
    return %c0_i32, %c0_i32_0 : i32, i32
  }
}

module attributes {stable_mosaic.version = 11 : i64} {
  func.func @_gemm_bn_lrelu_kernel(%arg0: i32, %arg1: memref<16x288xbf16, #tpu.memory_space<vmem>>, %arg2: memref<288x32xbf16, #tpu.memory_space<vmem>>, %arg3: memref<16x1xf32, #tpu.memory_space<vmem>>, %arg4: memref<16x1xf32, #tpu.memory_space<vmem>>, %arg5: memref<16x1xf32, #tpu.memory_space<vmem>>, %arg6: memref<16x32xf32, #tpu.memory_space<vmem>>) attributes {dimension_semantics = [#tpu.dimension_semantics<arbitrary>], iteration_bounds = array<i64: 1>, scalar_prefetch = 0 : i64, scratch_operands = 0 : i64, tpu.core_type = #tpu.core_type<tc>, window_params = [{pipeline_mode = #tpu.pipeline_mode<synchronous>, transform_indices = @transform_0, window_bounds = array<i64: 16, 288>}, {pipeline_mode = #tpu.pipeline_mode<synchronous>, transform_indices = @transform_1, window_bounds = array<i64: 288, 32>}, {pipeline_mode = #tpu.pipeline_mode<synchronous>, transform_indices = @transform_2, window_bounds = array<i64: 16, 1>}, {pipeline_mode = #tpu.pipeline_mode<synchronous>, transform_indices = @transform_3, window_bounds = array<i64: 16, 1>}, {pipeline_mode = #tpu.pipeline_mode<synchronous>, transform_indices = @transform_4, window_bounds = array<i64: 16, 1>}, {pipeline_mode = #tpu.pipeline_mode<synchronous>, transform_indices = @transform_5, window_bounds = array<i64: 16, 32>}]} {
    %c0 = arith.constant 0 : index
    %c0_0 = arith.constant 0 : index
    %0 = vector.load %arg1[%c0, %c0_0] : memref<16x288xbf16, #tpu.memory_space<vmem>>, vector<16x288xbf16>
    %c0_1 = arith.constant 0 : index
    %c0_2 = arith.constant 0 : index
    %1 = vector.load %arg2[%c0_1, %c0_2] : memref<288x32xbf16, #tpu.memory_space<vmem>>, vector<288x32xbf16>
    %cst = arith.constant dense<0.000000e+00> : vector<16x32xf32>
    %2 = tpu.matmul %0, %1, %cst {dimension_numbers = #tpu.dot_dimension_numbers<[1], [0], [0], [1], [0, 0, 1, 1], [], []>} : vector<16x288xbf16>, vector<288x32xbf16>, vector<16x32xf32> -> vector<16x32xf32>
    %c0_3 = arith.constant 0 : index
    %c0_4 = arith.constant 0 : index
    %3 = vector.load %arg3[%c0_3, %c0_4] : memref<16x1xf32, #tpu.memory_space<vmem>>, vector<16x1xf32>
    %4 = vector.broadcast %3 : vector<16x1xf32> to vector<16x32xf32>
    %5 = arith.addf %2, %4 : vector<16x32xf32>
    %cst_5 = arith.constant dense<0.000000e+00> : vector<16xf32>
    %6 = vector.multi_reduction <add>, %5, %cst_5 [1] : vector<16x32xf32> to vector<16xf32>
    %7 = vector.shape_cast %6 : vector<16xf32> to vector<16x1xf32>
    %8 = arith.mulf %5, %5 : vector<16x32xf32>
    %cst_6 = arith.constant dense<0.000000e+00> : vector<16xf32>
    %9 = vector.multi_reduction <add>, %8, %cst_6 [1] : vector<16x32xf32> to vector<16xf32>
    %10 = vector.shape_cast %9 : vector<16xf32> to vector<16x1xf32>
    %cst_7 = arith.constant 3.125000e-02 : f32
    %11 = vector.broadcast %cst_7 : f32 to vector<16x1xf32>
    %12 = arith.mulf %7, %11 : vector<16x1xf32>
    %cst_8 = arith.constant 3.125000e-02 : f32
    %13 = vector.broadcast %cst_8 : f32 to vector<16x1xf32>
    %14 = arith.mulf %10, %13 : vector<16x1xf32>
    %15 = arith.mulf %12, %12 : vector<16x1xf32>
    %16 = arith.subf %14, %15 : vector<16x1xf32>
    %17 = vector.broadcast %12 : vector<16x1xf32> to vector<16x32xf32>
    %18 = arith.subf %5, %17 : vector<16x32xf32>
    %cst_9 = arith.constant 9.99999974E-6 : f32
    %19 = vector.broadcast %cst_9 : f32 to vector<16x1xf32>
    %20 = arith.addf %16, %19 : vector<16x1xf32>
    %21 = math.rsqrt %20 : vector<16x1xf32>
    %22 = vector.broadcast %21 : vector<16x1xf32> to vector<16x32xf32>
    %23 = arith.mulf %18, %22 : vector<16x32xf32>
    %c0_10 = arith.constant 0 : index
    %c0_11 = arith.constant 0 : index
    %24 = vector.load %arg4[%c0_10, %c0_11] : memref<16x1xf32, #tpu.memory_space<vmem>>, vector<16x1xf32>
    %25 = vector.broadcast %24 : vector<16x1xf32> to vector<16x32xf32>
    %26 = arith.mulf %23, %25 : vector<16x32xf32>
    %c0_12 = arith.constant 0 : index
    %c0_13 = arith.constant 0 : index
    %27 = vector.load %arg5[%c0_12, %c0_13] : memref<16x1xf32, #tpu.memory_space<vmem>>, vector<16x1xf32>
    %28 = vector.broadcast %27 : vector<16x1xf32> to vector<16x32xf32>
    %29 = arith.addf %26, %28 : vector<16x32xf32>
    %cst_14 = arith.constant 0.000000e+00 : f32
    %30 = vector.broadcast %cst_14 : f32 to vector<16x32xf32>
    %31 = arith.cmpf oge, %29, %30 : vector<16x32xf32>
    %cst_15 = arith.constant 0.00999999977 : f32
    %32 = vector.broadcast %cst_15 : f32 to vector<16x32xf32>
    %33 = arith.mulf %32, %29 : vector<16x32xf32>
    %34 = arith.select %31, %29, %33 : vector<16x32xi1>, vector<16x32xf32>
    %c0_16 = arith.constant 0 : index
    %c0_17 = arith.constant 0 : index
    %35 = vector.load %arg6[%c0_16, %c0_17] : memref<16x32xf32, #tpu.memory_space<vmem>>, vector<16x32xf32>
    tpu.vector_store %arg6[%c0_16, %c0_17], %34 {strides = array<i32>} : memref<16x32xf32, #tpu.memory_space<vmem>>, vector<16x32xf32>,
    return
  }
  func.func @transform_0(%arg0: i32) -> (i32, i32) {
    %c0_i32 = arith.constant 0 : i32
    %c0_i32_0 = arith.constant 0 : i32
    %c0_i32_1 = arith.constant 0 : i32
    return %c0_i32, %c0_i32_0 : i32, i32
  }
  func.func @transform_1(%arg0: i32) -> (i32, i32) {
    %c0_i32 = arith.constant 0 : i32
    %c0_i32_0 = arith.constant 0 : i32
    %c0_i32_1 = arith.constant 0 : i32
    return %c0_i32, %c0_i32_0 : i32, i32
  }
  func.func @transform_2(%arg0: i32) -> (i32, i32) {
    %c0_i32 = arith.constant 0 : i32
    %c0_i32_0 = arith.constant 0 : i32
    %c0_i32_1 = arith.constant 0 : i32
    return %c0_i32, %c0_i32_0 : i32, i32
  }
  func.func @transform_3(%arg0: i32) -> (i32, i32) {
    %c0_i32 = arith.constant 0 : i32
    %c0_i32_0 = arith.constant 0 : i32
    %c0_i32_1 = arith.constant 0 : i32
    return %c0_i32, %c0_i32_0 : i32, i32
  }
  func.func @transform_4(%arg0: i32) -> (i32, i32) {
    %c0_i32 = arith.constant 0 : i32
    %c0_i32_0 = arith.constant 0 : i32
    %c0_i32_1 = arith.constant 0 : i32
    return %c0_i32, %c0_i32_0 : i32, i32
  }
  func.func @transform_5(%arg0: i32) -> (i32, i32) {
    %c0_i32 = arith.constant 0 : i32
    %c0_i32_0 = arith.constant 0 : i32
    %c0_i32_1 = arith.constant 0 : i32
    return %c0_i32, %c0_i32_0 : i32, i32
  }
}

module attributes {stable_mosaic.version = 11 : i64} {
  func.func @_gemm_bn_lrelu_kernel(%arg0: i32, %arg1: memref<16x144xbf16, #tpu.memory_space<vmem>>, %arg2: memref<144x8xbf16, #tpu.memory_space<vmem>>, %arg3: memref<16x1xf32, #tpu.memory_space<vmem>>, %arg4: memref<16x1xf32, #tpu.memory_space<vmem>>, %arg5: memref<16x1xf32, #tpu.memory_space<vmem>>, %arg6: memref<16x8xf32, #tpu.memory_space<vmem>>) attributes {dimension_semantics = [#tpu.dimension_semantics<arbitrary>], iteration_bounds = array<i64: 1>, scalar_prefetch = 0 : i64, scratch_operands = 0 : i64, tpu.core_type = #tpu.core_type<tc>, window_params = [{pipeline_mode = #tpu.pipeline_mode<synchronous>, transform_indices = @transform_0, window_bounds = array<i64: 16, 144>}, {pipeline_mode = #tpu.pipeline_mode<synchronous>, transform_indices = @transform_1, window_bounds = array<i64: 144, 8>}, {pipeline_mode = #tpu.pipeline_mode<synchronous>, transform_indices = @transform_2, window_bounds = array<i64: 16, 1>}, {pipeline_mode = #tpu.pipeline_mode<synchronous>, transform_indices = @transform_3, window_bounds = array<i64: 16, 1>}, {pipeline_mode = #tpu.pipeline_mode<synchronous>, transform_indices = @transform_4, window_bounds = array<i64: 16, 1>}, {pipeline_mode = #tpu.pipeline_mode<synchronous>, transform_indices = @transform_5, window_bounds = array<i64: 16, 8>}]} {
    %c0 = arith.constant 0 : index
    %c0_0 = arith.constant 0 : index
    %0 = vector.load %arg1[%c0, %c0_0] : memref<16x144xbf16, #tpu.memory_space<vmem>>, vector<16x144xbf16>
    %c0_1 = arith.constant 0 : index
    %c0_2 = arith.constant 0 : index
    %1 = vector.load %arg2[%c0_1, %c0_2] : memref<144x8xbf16, #tpu.memory_space<vmem>>, vector<144x8xbf16>
    %cst = arith.constant dense<0.000000e+00> : vector<16x8xf32>
    %2 = tpu.matmul %0, %1, %cst {dimension_numbers = #tpu.dot_dimension_numbers<[1], [0], [0], [1], [0, 0, 1, 1], [], []>} : vector<16x144xbf16>, vector<144x8xbf16>, vector<16x8xf32> -> vector<16x8xf32>
    %c0_3 = arith.constant 0 : index
    %c0_4 = arith.constant 0 : index
    %3 = vector.load %arg3[%c0_3, %c0_4] : memref<16x1xf32, #tpu.memory_space<vmem>>, vector<16x1xf32>
    %4 = vector.broadcast %3 : vector<16x1xf32> to vector<16x8xf32>
    %5 = arith.addf %2, %4 : vector<16x8xf32>
    %cst_5 = arith.constant dense<0.000000e+00> : vector<16xf32>
    %6 = vector.multi_reduction <add>, %5, %cst_5 [1] : vector<16x8xf32> to vector<16xf32>
    %7 = vector.shape_cast %6 : vector<16xf32> to vector<16x1xf32>
    %8 = arith.mulf %5, %5 : vector<16x8xf32>
    %cst_6 = arith.constant dense<0.000000e+00> : vector<16xf32>
    %9 = vector.multi_reduction <add>, %8, %cst_6 [1] : vector<16x8xf32> to vector<16xf32>
    %10 = vector.shape_cast %9 : vector<16xf32> to vector<16x1xf32>
    %cst_7 = arith.constant 1.250000e-01 : f32
    %11 = vector.broadcast %cst_7 : f32 to vector<16x1xf32>
    %12 = arith.mulf %7, %11 : vector<16x1xf32>
    %cst_8 = arith.constant 1.250000e-01 : f32
    %13 = vector.broadcast %cst_8 : f32 to vector<16x1xf32>
    %14 = arith.mulf %10, %13 : vector<16x1xf32>
    %15 = arith.mulf %12, %12 : vector<16x1xf32>
    %16 = arith.subf %14, %15 : vector<16x1xf32>
    %17 = vector.broadcast %12 : vector<16x1xf32> to vector<16x8xf32>
    %18 = arith.subf %5, %17 : vector<16x8xf32>
    %cst_9 = arith.constant 9.99999974E-6 : f32
    %19 = vector.broadcast %cst_9 : f32 to vector<16x1xf32>
    %20 = arith.addf %16, %19 : vector<16x1xf32>
    %21 = math.rsqrt %20 : vector<16x1xf32>
    %22 = vector.broadcast %21 : vector<16x1xf32> to vector<16x8xf32>
    %23 = arith.mulf %18, %22 : vector<16x8xf32>
    %c0_10 = arith.constant 0 : index
    %c0_11 = arith.constant 0 : index
    %24 = vector.load %arg4[%c0_10, %c0_11] : memref<16x1xf32, #tpu.memory_space<vmem>>, vector<16x1xf32>
    %25 = vector.broadcast %24 : vector<16x1xf32> to vector<16x8xf32>
    %26 = arith.mulf %23, %25 : vector<16x8xf32>
    %c0_12 = arith.constant 0 : index
    %c0_13 = arith.constant 0 : index
    %27 = vector.load %arg5[%c0_12, %c0_13] : memref<16x1xf32, #tpu.memory_space<vmem>>, vector<16x1xf32>
    %28 = vector.broadcast %27 : vector<16x1xf32> to vector<16x8xf32>
    %29 = arith.addf %26, %28 : vector<16x8xf32>
    %cst_14 = arith.constant 0.000000e+00 : f32
    %30 = vector.broadcast %cst_14 : f32 to vector<16x8xf32>
    %31 = arith.cmpf oge, %29, %30 : vector<16x8xf32>
    %cst_15 = arith.constant 0.00999999977 : f32
    %32 = vector.broadcast %cst_15 : f32 to vector<16x8xf32>
    %33 = arith.mulf %32, %29 : vector<16x8xf32>
    %34 = arith.select %31, %29, %33 : vector<16x8xi1>, vector<16x8xf32>
    %c0_16 = arith.constant 0 : index
    %c0_17 = arith.constant 0 : index
    %35 = vector.load %arg6[%c0_16, %c0_17] : memref<16x8xf32, #tpu.memory_space<vmem>>, vector<16x8xf32>
    tpu.vector_store %arg6[%c0_16, %c0_17], %34 {strides = array<i32>} : memref<16x8xf32, #tpu.memory_space<vmem>>, vector<16x8xf32>,
    return
  }
  func.func @transform_0(%arg0: i32) -> (i32, i32) {
    %c0_i32 = arith.constant 0 : i32
    %c0_i32_0 = arith.constant 0 : i32
    %c0_i32_1 = arith.constant 0 : i32
    return %c0_i32, %c0_i32_0 : i32, i32
  }
  func.func @transform_1(%arg0: i32) -> (i32, i32) {
    %c0_i32 = arith.constant 0 : i32
    %c0_i32_0 = arith.constant 0 : i32
    %c0_i32_1 = arith.constant 0 : i32
    return %c0_i32, %c0_i32_0 : i32, i32
  }
  func.func @transform_2(%arg0: i32) -> (i32, i32) {
    %c0_i32 = arith.constant 0 : i32
    %c0_i32_0 = arith.constant 0 : i32
    %c0_i32_1 = arith.constant 0 : i32
    return %c0_i32, %c0_i32_0 : i32, i32
  }
  func.func @transform_3(%arg0: i32) -> (i32, i32) {
    %c0_i32 = arith.constant 0 : i32
    %c0_i32_0 = arith.constant 0 : i32
    %c0_i32_1 = arith.constant 0 : i32
    return %c0_i32, %c0_i32_0 : i32, i32
  }
  func.func @transform_4(%arg0: i32) -> (i32, i32) {
    %c0_i32 = arith.constant 0 : i32
    %c0_i32_0 = arith.constant 0 : i32
    %c0_i32_1 = arith.constant 0 : i32
    return %c0_i32, %c0_i32_0 : i32, i32
  }
  func.func @transform_5(%arg0: i32) -> (i32, i32) {
    %c0_i32 = arith.constant 0 : i32
    %c0_i32_0 = arith.constant 0 : i32
    %c0_i32_1 = arith.constant 0 : i32
    return %c0_i32, %c0_i32_0 : i32, i32
  }
}

module attributes {stable_mosaic.version = 11 : i64} {
  func.func @_gemm_bn_lrelu_kernel(%arg0: i32, %arg1: memref<8x144xbf16, #tpu.memory_space<vmem>>, %arg2: memref<144x2xbf16, #tpu.memory_space<vmem>>, %arg3: memref<8x1xf32, #tpu.memory_space<vmem>>, %arg4: memref<8x1xf32, #tpu.memory_space<vmem>>, %arg5: memref<8x1xf32, #tpu.memory_space<vmem>>, %arg6: memref<8x2xf32, #tpu.memory_space<vmem>>) attributes {dimension_semantics = [#tpu.dimension_semantics<arbitrary>], iteration_bounds = array<i64: 1>, scalar_prefetch = 0 : i64, scratch_operands = 0 : i64, tpu.core_type = #tpu.core_type<tc>, window_params = [{pipeline_mode = #tpu.pipeline_mode<synchronous>, transform_indices = @transform_0, window_bounds = array<i64: 8, 144>}, {pipeline_mode = #tpu.pipeline_mode<synchronous>, transform_indices = @transform_1, window_bounds = array<i64: 144, 2>}, {pipeline_mode = #tpu.pipeline_mode<synchronous>, transform_indices = @transform_2, window_bounds = array<i64: 8, 1>}, {pipeline_mode = #tpu.pipeline_mode<synchronous>, transform_indices = @transform_3, window_bounds = array<i64: 8, 1>}, {pipeline_mode = #tpu.pipeline_mode<synchronous>, transform_indices = @transform_4, window_bounds = array<i64: 8, 1>}, {pipeline_mode = #tpu.pipeline_mode<synchronous>, transform_indices = @transform_5, window_bounds = array<i64: 8, 2>}]} {
    %c0 = arith.constant 0 : index
    %c0_0 = arith.constant 0 : index
    %0 = vector.load %arg1[%c0, %c0_0] : memref<8x144xbf16, #tpu.memory_space<vmem>>, vector<8x144xbf16>
    %c0_1 = arith.constant 0 : index
    %c0_2 = arith.constant 0 : index
    %1 = vector.load %arg2[%c0_1, %c0_2] : memref<144x2xbf16, #tpu.memory_space<vmem>>, vector<144x2xbf16>
    %cst = arith.constant dense<0.000000e+00> : vector<8x2xf32>
    %2 = tpu.matmul %0, %1, %cst {dimension_numbers = #tpu.dot_dimension_numbers<[1], [0], [0], [1], [0, 0, 1, 1], [], []>} : vector<8x144xbf16>, vector<144x2xbf16>, vector<8x2xf32> -> vector<8x2xf32>
    %c0_3 = arith.constant 0 : index
    %c0_4 = arith.constant 0 : index
    %3 = vector.load %arg3[%c0_3, %c0_4] : memref<8x1xf32, #tpu.memory_space<vmem>>, vector<8x1xf32>
    %4 = vector.broadcast %3 : vector<8x1xf32> to vector<8x2xf32>
    %5 = arith.addf %2, %4 : vector<8x2xf32>
    %cst_5 = arith.constant dense<0.000000e+00> : vector<8xf32>
    %6 = vector.multi_reduction <add>, %5, %cst_5 [1] : vector<8x2xf32> to vector<8xf32>
    %7 = vector.shape_cast %6 : vector<8xf32> to vector<8x1xf32>
    %8 = arith.mulf %5, %5 : vector<8x2xf32>
    %cst_6 = arith.constant dense<0.000000e+00> : vector<8xf32>
    %9 = vector.multi_reduction <add>, %8, %cst_6 [1] : vector<8x2xf32> to vector<8xf32>
    %10 = vector.shape_cast %9 : vector<8xf32> to vector<8x1xf32>
    %cst_7 = arith.constant 5.000000e-01 : f32
    %11 = vector.broadcast %cst_7 : f32 to vector<8x1xf32>
    %12 = arith.mulf %7, %11 : vector<8x1xf32>
    %cst_8 = arith.constant 5.000000e-01 : f32
    %13 = vector.broadcast %cst_8 : f32 to vector<8x1xf32>
    %14 = arith.mulf %10, %13 : vector<8x1xf32>
    %15 = arith.mulf %12, %12 : vector<8x1xf32>
    %16 = arith.subf %14, %15 : vector<8x1xf32>
    %17 = vector.broadcast %12 : vector<8x1xf32> to vector<8x2xf32>
    %18 = arith.subf %5, %17 : vector<8x2xf32>
    %cst_9 = arith.constant 9.99999974E-6 : f32
    %19 = vector.broadcast %cst_9 : f32 to vector<8x1xf32>
    %20 = arith.addf %16, %19 : vector<8x1xf32>
    %21 = math.rsqrt %20 : vector<8x1xf32>
    %22 = vector.broadcast %21 : vector<8x1xf32> to vector<8x2xf32>
    %23 = arith.mulf %18, %22 : vector<8x2xf32>
    %c0_10 = arith.constant 0 : index
    %c0_11 = arith.constant 0 : index
    %24 = vector.load %arg4[%c0_10, %c0_11] : memref<8x1xf32, #tpu.memory_space<vmem>>, vector<8x1xf32>
    %25 = vector.broadcast %24 : vector<8x1xf32> to vector<8x2xf32>
    %26 = arith.mulf %23, %25 : vector<8x2xf32>
    %c0_12 = arith.constant 0 : index
    %c0_13 = arith.constant 0 : index
    %27 = vector.load %arg5[%c0_12, %c0_13] : memref<8x1xf32, #tpu.memory_space<vmem>>, vector<8x1xf32>
    %28 = vector.broadcast %27 : vector<8x1xf32> to vector<8x2xf32>
    %29 = arith.addf %26, %28 : vector<8x2xf32>
    %cst_14 = arith.constant 0.000000e+00 : f32
    %30 = vector.broadcast %cst_14 : f32 to vector<8x2xf32>
    %31 = arith.cmpf oge, %29, %30 : vector<8x2xf32>
    %cst_15 = arith.constant 0.00999999977 : f32
    %32 = vector.broadcast %cst_15 : f32 to vector<8x2xf32>
    %33 = arith.mulf %32, %29 : vector<8x2xf32>
    %34 = arith.select %31, %29, %33 : vector<8x2xi1>, vector<8x2xf32>
    %c0_16 = arith.constant 0 : index
    %c0_17 = arith.constant 0 : index
    %35 = vector.load %arg6[%c0_16, %c0_17] : memref<8x2xf32, #tpu.memory_space<vmem>>, vector<8x2xf32>
    tpu.vector_store %arg6[%c0_16, %c0_17], %34 {strides = array<i32>} : memref<8x2xf32, #tpu.memory_space<vmem>>, vector<8x2xf32>,
    return
  }
  func.func @transform_0(%arg0: i32) -> (i32, i32) {
    %c0_i32 = arith.constant 0 : i32
    %c0_i32_0 = arith.constant 0 : i32
    %c0_i32_1 = arith.constant 0 : i32
    return %c0_i32, %c0_i32_0 : i32, i32
  }
  func.func @transform_1(%arg0: i32) -> (i32, i32) {
    %c0_i32 = arith.constant 0 : i32
    %c0_i32_0 = arith.constant 0 : i32
    %c0_i32_1 = arith.constant 0 : i32
    return %c0_i32, %c0_i32_0 : i32, i32
  }
  func.func @transform_2(%arg0: i32) -> (i32, i32) {
    %c0_i32 = arith.constant 0 : i32
    %c0_i32_0 = arith.constant 0 : i32
    %c0_i32_1 = arith.constant 0 : i32
    return %c0_i32, %c0_i32_0 : i32, i32
  }
  func.func @transform_3(%arg0: i32) -> (i32, i32) {
    %c0_i32 = arith.constant 0 : i32
    %c0_i32_0 = arith.constant 0 : i32
    %c0_i32_1 = arith.constant 0 : i32
    return %c0_i32, %c0_i32_0 : i32, i32
  }
  func.func @transform_4(%arg0: i32) -> (i32, i32) {
    %c0_i32 = arith.constant 0 : i32
    %c0_i32_0 = arith.constant 0 : i32
    %c0_i32_1 = arith.constant 0 : i32
    return %c0_i32, %c0_i32_0 : i32, i32
  }
  func.func @transform_5(%arg0: i32) -> (i32, i32) {
    %c0_i32 = arith.constant 0 : i32
    %c0_i32_0 = arith.constant 0 : i32
    %c0_i32_1 = arith.constant 0 : i32
    return %c0_i32, %c0_i32_0 : i32, i32
  }
}

module attributes {stable_mosaic.version = 11 : i64} {
  func.func @_gemm_bias_kernel(%arg0: i32, %arg1: memref<32x8xbf16, #tpu.memory_space<vmem>>, %arg2: memref<8x2xbf16, #tpu.memory_space<vmem>>, %arg3: memref<32x1xf32, #tpu.memory_space<vmem>>, %arg4: memref<32x2xf32, #tpu.memory_space<vmem>>) attributes {dimension_semantics = [#tpu.dimension_semantics<arbitrary>], iteration_bounds = array<i64: 1>, scalar_prefetch = 0 : i64, scratch_operands = 0 : i64, tpu.core_type = #tpu.core_type<tc>, window_params = [{pipeline_mode = #tpu.pipeline_mode<synchronous>, transform_indices = @transform_0, window_bounds = array<i64: 32, 8>}, {pipeline_mode = #tpu.pipeline_mode<synchronous>, transform_indices = @transform_1, window_bounds = array<i64: 8, 2>}, {pipeline_mode = #tpu.pipeline_mode<synchronous>, transform_indices = @transform_2, window_bounds = array<i64: 32, 1>}, {pipeline_mode = #tpu.pipeline_mode<synchronous>, transform_indices = @transform_3, window_bounds = array<i64: 32, 2>}]} {
    %c0 = arith.constant 0 : index
    %c0_0 = arith.constant 0 : index
    %0 = vector.load %arg1[%c0, %c0_0] : memref<32x8xbf16, #tpu.memory_space<vmem>>, vector<32x8xbf16>
    %c0_1 = arith.constant 0 : index
    %c0_2 = arith.constant 0 : index
    %1 = vector.load %arg2[%c0_1, %c0_2] : memref<8x2xbf16, #tpu.memory_space<vmem>>, vector<8x2xbf16>
    %cst = arith.constant dense<0.000000e+00> : vector<32x2xf32>
    %2 = tpu.matmul %0, %1, %cst {dimension_numbers = #tpu.dot_dimension_numbers<[1], [0], [0], [1], [0, 0, 1, 1], [], []>} : vector<32x8xbf16>, vector<8x2xbf16>, vector<32x2xf32> -> vector<32x2xf32>
    %c0_3 = arith.constant 0 : index
    %c0_4 = arith.constant 0 : index
    %3 = vector.load %arg3[%c0_3, %c0_4] : memref<32x1xf32, #tpu.memory_space<vmem>>, vector<32x1xf32>
    %4 = vector.broadcast %3 : vector<32x1xf32> to vector<32x2xf32>
    %5 = arith.addf %2, %4 : vector<32x2xf32>
    %c0_5 = arith.constant 0 : index
    %c0_6 = arith.constant 0 : index
    %6 = vector.load %arg4[%c0_5, %c0_6] : memref<32x2xf32, #tpu.memory_space<vmem>>, vector<32x2xf32>
    tpu.vector_store %arg4[%c0_5, %c0_6], %5 {strides = array<i32>} : memref<32x2xf32, #tpu.memory_space<vmem>>, vector<32x2xf32>,
    return
  }
  func.func @transform_0(%arg0: i32) -> (i32, i32) {
    %c0_i32 = arith.constant 0 : i32
    %c0_i32_0 = arith.constant 0 : i32
    %c0_i32_1 = arith.constant 0 : i32
    return %c0_i32, %c0_i32_0 : i32, i32
  }
  func.func @transform_1(%arg0: i32) -> (i32, i32) {
    %c0_i32 = arith.constant 0 : i32
    %c0_i32_0 = arith.constant 0 : i32
    %c0_i32_1 = arith.constant 0 : i32
    return %c0_i32, %c0_i32_0 : i32, i32
  }
  func.func @transform_2(%arg0: i32) -> (i32, i32) {
    %c0_i32 = arith.constant 0 : i32
    %c0_i32_0 = arith.constant 0 : i32
    %c0_i32_1 = arith.constant 0 : i32
    return %c0_i32, %c0_i32_0 : i32, i32
  }
  func.func @transform_3(%arg0: i32) -> (i32, i32) {
    %c0_i32 = arith.constant 0 : i32
    %c0_i32_0 = arith.constant 0 : i32
    %c0_i32_1 = arith.constant 0 : i32
    return %c0_i32, %c0_i32_0 : i32, i32
  }
}

module attributes {stable_mosaic.version = 11 : i64} {
  func.func @_gemm_bias_kernel(%arg0: i32, %arg1: memref<8x24xbf16, #tpu.memory_space<vmem>>, %arg2: memref<24x2xbf16, #tpu.memory_space<vmem>>, %arg3: memref<8x1xf32, #tpu.memory_space<vmem>>, %arg4: memref<8x2xf32, #tpu.memory_space<vmem>>) attributes {dimension_semantics = [#tpu.dimension_semantics<arbitrary>], iteration_bounds = array<i64: 1>, scalar_prefetch = 0 : i64, scratch_operands = 0 : i64, tpu.core_type = #tpu.core_type<tc>, window_params = [{pipeline_mode = #tpu.pipeline_mode<synchronous>, transform_indices = @transform_0, window_bounds = array<i64: 8, 24>}, {pipeline_mode = #tpu.pipeline_mode<synchronous>, transform_indices = @transform_1, window_bounds = array<i64: 24, 2>}, {pipeline_mode = #tpu.pipeline_mode<synchronous>, transform_indices = @transform_2, window_bounds = array<i64: 8, 1>}, {pipeline_mode = #tpu.pipeline_mode<synchronous>, transform_indices = @transform_3, window_bounds = array<i64: 8, 2>}]} {
    %c0 = arith.constant 0 : index
    %c0_0 = arith.constant 0 : index
    %0 = vector.load %arg1[%c0, %c0_0] : memref<8x24xbf16, #tpu.memory_space<vmem>>, vector<8x24xbf16>
    %c0_1 = arith.constant 0 : index
    %c0_2 = arith.constant 0 : index
    %1 = vector.load %arg2[%c0_1, %c0_2] : memref<24x2xbf16, #tpu.memory_space<vmem>>, vector<24x2xbf16>
    %cst = arith.constant dense<0.000000e+00> : vector<8x2xf32>
    %2 = tpu.matmul %0, %1, %cst {dimension_numbers = #tpu.dot_dimension_numbers<[1], [0], [0], [1], [0, 0, 1, 1], [], []>} : vector<8x24xbf16>, vector<24x2xbf16>, vector<8x2xf32> -> vector<8x2xf32>
    %c0_3 = arith.constant 0 : index
    %c0_4 = arith.constant 0 : index
    %3 = vector.load %arg3[%c0_3, %c0_4] : memref<8x1xf32, #tpu.memory_space<vmem>>, vector<8x1xf32>
    %4 = vector.broadcast %3 : vector<8x1xf32> to vector<8x2xf32>
    %5 = arith.addf %2, %4 : vector<8x2xf32>
    %c0_5 = arith.constant 0 : index
    %c0_6 = arith.constant 0 : index
    %6 = vector.load %arg4[%c0_5, %c0_6] : memref<8x2xf32, #tpu.memory_space<vmem>>, vector<8x2xf32>
    tpu.vector_store %arg4[%c0_5, %c0_6], %5 {strides = array<i32>} : memref<8x2xf32, #tpu.memory_space<vmem>>, vector<8x2xf32>,
    return
  }
  func.func @transform_0(%arg0: i32) -> (i32, i32) {
    %c0_i32 = arith.constant 0 : i32
    %c0_i32_0 = arith.constant 0 : i32
    %c0_i32_1 = arith.constant 0 : i32
    return %c0_i32, %c0_i32_0 : i32, i32
  }
  func.func @transform_1(%arg0: i32) -> (i32, i32) {
    %c0_i32 = arith.constant 0 : i32
    %c0_i32_0 = arith.constant 0 : i32
    %c0_i32_1 = arith.constant 0 : i32
    return %c0_i32, %c0_i32_0 : i32, i32
  }
  func.func @transform_2(%arg0: i32) -> (i32, i32) {
    %c0_i32 = arith.constant 0 : i32
    %c0_i32_0 = arith.constant 0 : i32
    %c0_i32_1 = arith.constant 0 : i32
    return %c0_i32, %c0_i32_0 : i32, i32
  }
  func.func @transform_3(%arg0: i32) -> (i32, i32) {
    %c0_i32 = arith.constant 0 : i32
    %c0_i32_0 = arith.constant 0 : i32
    %c0_i32_1 = arith.constant 0 : i32
    return %c0_i32, %c0_i32_0 : i32, i32
  }
}

module attributes {stable_mosaic.version = 11 : i64} {
  func.func @_gemm_bn_lrelu_kernel(%arg0: i32, %arg1: memref<64x32xbf16, #tpu.memory_space<vmem>>, %arg2: memref<32x2xbf16, #tpu.memory_space<vmem>>, %arg3: memref<64x1xf32, #tpu.memory_space<vmem>>, %arg4: memref<64x1xf32, #tpu.memory_space<vmem>>, %arg5: memref<64x1xf32, #tpu.memory_space<vmem>>, %arg6: memref<64x2xf32, #tpu.memory_space<vmem>>) attributes {dimension_semantics = [#tpu.dimension_semantics<arbitrary>], iteration_bounds = array<i64: 1>, scalar_prefetch = 0 : i64, scratch_operands = 0 : i64, tpu.core_type = #tpu.core_type<tc>, window_params = [{pipeline_mode = #tpu.pipeline_mode<synchronous>, transform_indices = @transform_0, window_bounds = array<i64: 64, 32>}, {pipeline_mode = #tpu.pipeline_mode<synchronous>, transform_indices = @transform_1, window_bounds = array<i64: 32, 2>}, {pipeline_mode = #tpu.pipeline_mode<synchronous>, transform_indices = @transform_2, window_bounds = array<i64: 64, 1>}, {pipeline_mode = #tpu.pipeline_mode<synchronous>, transform_indices = @transform_3, window_bounds = array<i64: 64, 1>}, {pipeline_mode = #tpu.pipeline_mode<synchronous>, transform_indices = @transform_4, window_bounds = array<i64: 64, 1>}, {pipeline_mode = #tpu.pipeline_mode<synchronous>, transform_indices = @transform_5, window_bounds = array<i64: 64, 2>}]} {
    %c0 = arith.constant 0 : index
    %c0_0 = arith.constant 0 : index
    %0 = vector.load %arg1[%c0, %c0_0] : memref<64x32xbf16, #tpu.memory_space<vmem>>, vector<64x32xbf16>
    %c0_1 = arith.constant 0 : index
    %c0_2 = arith.constant 0 : index
    %1 = vector.load %arg2[%c0_1, %c0_2] : memref<32x2xbf16, #tpu.memory_space<vmem>>, vector<32x2xbf16>
    %cst = arith.constant dense<0.000000e+00> : vector<64x2xf32>
    %2 = tpu.matmul %0, %1, %cst {dimension_numbers = #tpu.dot_dimension_numbers<[1], [0], [0], [1], [0, 0, 1, 1], [], []>} : vector<64x32xbf16>, vector<32x2xbf16>, vector<64x2xf32> -> vector<64x2xf32>
    %c0_3 = arith.constant 0 : index
    %c0_4 = arith.constant 0 : index
    %3 = vector.load %arg3[%c0_3, %c0_4] : memref<64x1xf32, #tpu.memory_space<vmem>>, vector<64x1xf32>
    %4 = vector.broadcast %3 : vector<64x1xf32> to vector<64x2xf32>
    %5 = arith.addf %2, %4 : vector<64x2xf32>
    %cst_5 = arith.constant dense<0.000000e+00> : vector<64xf32>
    %6 = vector.multi_reduction <add>, %5, %cst_5 [1] : vector<64x2xf32> to vector<64xf32>
    %7 = vector.shape_cast %6 : vector<64xf32> to vector<64x1xf32>
    %8 = arith.mulf %5, %5 : vector<64x2xf32>
    %cst_6 = arith.constant dense<0.000000e+00> : vector<64xf32>
    %9 = vector.multi_reduction <add>, %8, %cst_6 [1] : vector<64x2xf32> to vector<64xf32>
    %10 = vector.shape_cast %9 : vector<64xf32> to vector<64x1xf32>
    %11 = vector.extract_strided_slice %7 {offsets = [0, 0], sizes = [16, 1], strides = [1, 1]} : vector<64x1xf32> to vector<16x1xf32>
    %12 = vector.extract_strided_slice %10 {offsets = [0, 0], sizes = [16, 1], strides = [1, 1]} : vector<64x1xf32> to vector<16x1xf32>
    %13 = vector.extract_strided_slice %7 {offsets = [16, 0], sizes = [16, 1], strides = [1, 1]} : vector<64x1xf32> to vector<16x1xf32>
    %14 = arith.addf %11, %13 : vector<16x1xf32>
    %15 = vector.extract_strided_slice %10 {offsets = [16, 0], sizes = [16, 1], strides = [1, 1]} : vector<64x1xf32> to vector<16x1xf32>
    %16 = arith.addf %12, %15 : vector<16x1xf32>
    %17 = vector.extract_strided_slice %7 {offsets = [32, 0], sizes = [16, 1], strides = [1, 1]} : vector<64x1xf32> to vector<16x1xf32>
    %18 = arith.addf %14, %17 : vector<16x1xf32>
    %19 = vector.extract_strided_slice %10 {offsets = [32, 0], sizes = [16, 1], strides = [1, 1]} : vector<64x1xf32> to vector<16x1xf32>
    %20 = arith.addf %16, %19 : vector<16x1xf32>
    %21 = vector.extract_strided_slice %7 {offsets = [48, 0], sizes = [16, 1], strides = [1, 1]} : vector<64x1xf32> to vector<16x1xf32>
    %22 = arith.addf %18, %21 : vector<16x1xf32>
    %23 = vector.extract_strided_slice %10 {offsets = [48, 0], sizes = [16, 1], strides = [1, 1]} : vector<64x1xf32> to vector<16x1xf32>
    %24 = arith.addf %20, %23 : vector<16x1xf32>
    %cst_7 = arith.constant 1.250000e-01 : f32
    %25 = vector.broadcast %cst_7 : f32 to vector<16x1xf32>
    %26 = arith.mulf %22, %25 : vector<16x1xf32>
    %27 = tpu.concatenate %26, %26, %26, %26 in 0 : vector<16x1xf32>, vector<16x1xf32>, vector<16x1xf32>, vector<16x1xf32> -> vector<64x1xf32>
    %cst_8 = arith.constant 1.250000e-01 : f32
    %28 = vector.broadcast %cst_8 : f32 to vector<16x1xf32>
    %29 = arith.mulf %24, %28 : vector<16x1xf32>
    %30 = tpu.concatenate %29, %29, %29, %29 in 0 : vector<16x1xf32>, vector<16x1xf32>, vector<16x1xf32>, vector<16x1xf32> -> vector<64x1xf32>
    %31 = arith.mulf %27, %27 : vector<64x1xf32>
    %32 = arith.subf %30, %31 : vector<64x1xf32>
    %33 = vector.broadcast %27 : vector<64x1xf32> to vector<64x2xf32>
    %34 = arith.subf %5, %33 : vector<64x2xf32>
    %cst_9 = arith.constant 9.99999974E-6 : f32
    %35 = vector.broadcast %cst_9 : f32 to vector<64x1xf32>
    %36 = arith.addf %32, %35 : vector<64x1xf32>
    %37 = math.rsqrt %36 : vector<64x1xf32>
    %38 = vector.broadcast %37 : vector<64x1xf32> to vector<64x2xf32>
    %39 = arith.mulf %34, %38 : vector<64x2xf32>
    %c0_10 = arith.constant 0 : index
    %c0_11 = arith.constant 0 : index
    %40 = vector.load %arg4[%c0_10, %c0_11] : memref<64x1xf32, #tpu.memory_space<vmem>>, vector<64x1xf32>
    %41 = vector.broadcast %40 : vector<64x1xf32> to vector<64x2xf32>
    %42 = arith.mulf %39, %41 : vector<64x2xf32>
    %c0_12 = arith.constant 0 : index
    %c0_13 = arith.constant 0 : index
    %43 = vector.load %arg5[%c0_12, %c0_13] : memref<64x1xf32, #tpu.memory_space<vmem>>, vector<64x1xf32>
    %44 = vector.broadcast %43 : vector<64x1xf32> to vector<64x2xf32>
    %45 = arith.addf %42, %44 : vector<64x2xf32>
    %cst_14 = arith.constant 0.000000e+00 : f32
    %46 = vector.broadcast %cst_14 : f32 to vector<64x2xf32>
    %47 = arith.cmpf oge, %45, %46 : vector<64x2xf32>
    %cst_15 = arith.constant 0.00999999977 : f32
    %48 = vector.broadcast %cst_15 : f32 to vector<64x2xf32>
    %49 = arith.mulf %48, %45 : vector<64x2xf32>
    %50 = arith.select %47, %45, %49 : vector<64x2xi1>, vector<64x2xf32>
    %c0_16 = arith.constant 0 : index
    %c0_17 = arith.constant 0 : index
    %51 = vector.load %arg6[%c0_16, %c0_17] : memref<64x2xf32, #tpu.memory_space<vmem>>, vector<64x2xf32>
    tpu.vector_store %arg6[%c0_16, %c0_17], %50 {strides = array<i32>} : memref<64x2xf32, #tpu.memory_space<vmem>>, vector<64x2xf32>,
    return
  }
  func.func @transform_0(%arg0: i32) -> (i32, i32) {
    %c0_i32 = arith.constant 0 : i32
    %c0_i32_0 = arith.constant 0 : i32
    %c0_i32_1 = arith.constant 0 : i32
    return %c0_i32, %c0_i32_0 : i32, i32
  }
  func.func @transform_1(%arg0: i32) -> (i32, i32) {
    %c0_i32 = arith.constant 0 : i32
    %c0_i32_0 = arith.constant 0 : i32
    %c0_i32_1 = arith.constant 0 : i32
    return %c0_i32, %c0_i32_0 : i32, i32
  }
  func.func @transform_2(%arg0: i32) -> (i32, i32) {
    %c0_i32 = arith.constant 0 : i32
    %c0_i32_0 = arith.constant 0 : i32
    %c0_i32_1 = arith.constant 0 : i32
    return %c0_i32, %c0_i32_0 : i32, i32
  }
  func.func @transform_3(%arg0: i32) -> (i32, i32) {
    %c0_i32 = arith.constant 0 : i32
    %c0_i32_0 = arith.constant 0 : i32
    %c0_i32_1 = arith.constant 0 : i32
    return %c0_i32, %c0_i32_0 : i32, i32
  }
  func.func @transform_4(%arg0: i32) -> (i32, i32) {
    %c0_i32 = arith.constant 0 : i32
    %c0_i32_0 = arith.constant 0 : i32
    %c0_i32_1 = arith.constant 0 : i32
    return %c0_i32, %c0_i32_0 : i32, i32
  }
  func.func @transform_5(%arg0: i32) -> (i32, i32) {
    %c0_i32 = arith.constant 0 : i32
    %c0_i32_0 = arith.constant 0 : i32
    %c0_i32_1 = arith.constant 0 : i32
    return %c0_i32, %c0_i32_0 : i32, i32
  }
}

module attributes {stable_mosaic.version = 11 : i64} {
  func.func @_gemm_bn_lrelu_kernel(%arg0: i32, %arg1: memref<64x64xbf16, #tpu.memory_space<vmem>>, %arg2: memref<64x8xbf16, #tpu.memory_space<vmem>>, %arg3: memref<64x1xf32, #tpu.memory_space<vmem>>, %arg4: memref<64x1xf32, #tpu.memory_space<vmem>>, %arg5: memref<64x1xf32, #tpu.memory_space<vmem>>, %arg6: memref<64x8xf32, #tpu.memory_space<vmem>>) attributes {dimension_semantics = [#tpu.dimension_semantics<arbitrary>], iteration_bounds = array<i64: 1>, scalar_prefetch = 0 : i64, scratch_operands = 0 : i64, tpu.core_type = #tpu.core_type<tc>, window_params = [{pipeline_mode = #tpu.pipeline_mode<synchronous>, transform_indices = @transform_0, window_bounds = array<i64: 64, 64>}, {pipeline_mode = #tpu.pipeline_mode<synchronous>, transform_indices = @transform_1, window_bounds = array<i64: 64, 8>}, {pipeline_mode = #tpu.pipeline_mode<synchronous>, transform_indices = @transform_2, window_bounds = array<i64: 64, 1>}, {pipeline_mode = #tpu.pipeline_mode<synchronous>, transform_indices = @transform_3, window_bounds = array<i64: 64, 1>}, {pipeline_mode = #tpu.pipeline_mode<synchronous>, transform_indices = @transform_4, window_bounds = array<i64: 64, 1>}, {pipeline_mode = #tpu.pipeline_mode<synchronous>, transform_indices = @transform_5, window_bounds = array<i64: 64, 8>}]} {
    %c0 = arith.constant 0 : index
    %c0_0 = arith.constant 0 : index
    %0 = vector.load %arg1[%c0, %c0_0] : memref<64x64xbf16, #tpu.memory_space<vmem>>, vector<64x64xbf16>
    %c0_1 = arith.constant 0 : index
    %c0_2 = arith.constant 0 : index
    %1 = vector.load %arg2[%c0_1, %c0_2] : memref<64x8xbf16, #tpu.memory_space<vmem>>, vector<64x8xbf16>
    %cst = arith.constant dense<0.000000e+00> : vector<64x8xf32>
    %2 = tpu.matmul %0, %1, %cst {dimension_numbers = #tpu.dot_dimension_numbers<[1], [0], [0], [1], [0, 0, 1, 1], [], []>} : vector<64x64xbf16>, vector<64x8xbf16>, vector<64x8xf32> -> vector<64x8xf32>
    %c0_3 = arith.constant 0 : index
    %c0_4 = arith.constant 0 : index
    %3 = vector.load %arg3[%c0_3, %c0_4] : memref<64x1xf32, #tpu.memory_space<vmem>>, vector<64x1xf32>
    %4 = vector.broadcast %3 : vector<64x1xf32> to vector<64x8xf32>
    %5 = arith.addf %2, %4 : vector<64x8xf32>
    %cst_5 = arith.constant dense<0.000000e+00> : vector<64xf32>
    %6 = vector.multi_reduction <add>, %5, %cst_5 [1] : vector<64x8xf32> to vector<64xf32>
    %7 = vector.shape_cast %6 : vector<64xf32> to vector<64x1xf32>
    %8 = arith.mulf %5, %5 : vector<64x8xf32>
    %cst_6 = arith.constant dense<0.000000e+00> : vector<64xf32>
    %9 = vector.multi_reduction <add>, %8, %cst_6 [1] : vector<64x8xf32> to vector<64xf32>
    %10 = vector.shape_cast %9 : vector<64xf32> to vector<64x1xf32>
    %11 = vector.extract_strided_slice %7 {offsets = [0, 0], sizes = [16, 1], strides = [1, 1]} : vector<64x1xf32> to vector<16x1xf32>
    %12 = vector.extract_strided_slice %10 {offsets = [0, 0], sizes = [16, 1], strides = [1, 1]} : vector<64x1xf32> to vector<16x1xf32>
    %13 = vector.extract_strided_slice %7 {offsets = [16, 0], sizes = [16, 1], strides = [1, 1]} : vector<64x1xf32> to vector<16x1xf32>
    %14 = arith.addf %11, %13 : vector<16x1xf32>
    %15 = vector.extract_strided_slice %10 {offsets = [16, 0], sizes = [16, 1], strides = [1, 1]} : vector<64x1xf32> to vector<16x1xf32>
    %16 = arith.addf %12, %15 : vector<16x1xf32>
    %17 = vector.extract_strided_slice %7 {offsets = [32, 0], sizes = [16, 1], strides = [1, 1]} : vector<64x1xf32> to vector<16x1xf32>
    %18 = arith.addf %14, %17 : vector<16x1xf32>
    %19 = vector.extract_strided_slice %10 {offsets = [32, 0], sizes = [16, 1], strides = [1, 1]} : vector<64x1xf32> to vector<16x1xf32>
    %20 = arith.addf %16, %19 : vector<16x1xf32>
    %21 = vector.extract_strided_slice %7 {offsets = [48, 0], sizes = [16, 1], strides = [1, 1]} : vector<64x1xf32> to vector<16x1xf32>
    %22 = arith.addf %18, %21 : vector<16x1xf32>
    %23 = vector.extract_strided_slice %10 {offsets = [48, 0], sizes = [16, 1], strides = [1, 1]} : vector<64x1xf32> to vector<16x1xf32>
    %24 = arith.addf %20, %23 : vector<16x1xf32>
    %cst_7 = arith.constant 3.125000e-02 : f32
    %25 = vector.broadcast %cst_7 : f32 to vector<16x1xf32>
    %26 = arith.mulf %22, %25 : vector<16x1xf32>
    %27 = tpu.concatenate %26, %26, %26, %26 in 0 : vector<16x1xf32>, vector<16x1xf32>, vector<16x1xf32>, vector<16x1xf32> -> vector<64x1xf32>
    %cst_8 = arith.constant 3.125000e-02 : f32
    %28 = vector.broadcast %cst_8 : f32 to vector<16x1xf32>
    %29 = arith.mulf %24, %28 : vector<16x1xf32>
    %30 = tpu.concatenate %29, %29, %29, %29 in 0 : vector<16x1xf32>, vector<16x1xf32>, vector<16x1xf32>, vector<16x1xf32> -> vector<64x1xf32>
    %31 = arith.mulf %27, %27 : vector<64x1xf32>
    %32 = arith.subf %30, %31 : vector<64x1xf32>
    %33 = vector.broadcast %27 : vector<64x1xf32> to vector<64x8xf32>
    %34 = arith.subf %5, %33 : vector<64x8xf32>
    %cst_9 = arith.constant 9.99999974E-6 : f32
    %35 = vector.broadcast %cst_9 : f32 to vector<64x1xf32>
    %36 = arith.addf %32, %35 : vector<64x1xf32>
    %37 = math.rsqrt %36 : vector<64x1xf32>
    %38 = vector.broadcast %37 : vector<64x1xf32> to vector<64x8xf32>
    %39 = arith.mulf %34, %38 : vector<64x8xf32>
    %c0_10 = arith.constant 0 : index
    %c0_11 = arith.constant 0 : index
    %40 = vector.load %arg4[%c0_10, %c0_11] : memref<64x1xf32, #tpu.memory_space<vmem>>, vector<64x1xf32>
    %41 = vector.broadcast %40 : vector<64x1xf32> to vector<64x8xf32>
    %42 = arith.mulf %39, %41 : vector<64x8xf32>
    %c0_12 = arith.constant 0 : index
    %c0_13 = arith.constant 0 : index
    %43 = vector.load %arg5[%c0_12, %c0_13] : memref<64x1xf32, #tpu.memory_space<vmem>>, vector<64x1xf32>
    %44 = vector.broadcast %43 : vector<64x1xf32> to vector<64x8xf32>
    %45 = arith.addf %42, %44 : vector<64x8xf32>
    %cst_14 = arith.constant 0.000000e+00 : f32
    %46 = vector.broadcast %cst_14 : f32 to vector<64x8xf32>
    %47 = arith.cmpf oge, %45, %46 : vector<64x8xf32>
    %cst_15 = arith.constant 0.00999999977 : f32
    %48 = vector.broadcast %cst_15 : f32 to vector<64x8xf32>
    %49 = arith.mulf %48, %45 : vector<64x8xf32>
    %50 = arith.select %47, %45, %49 : vector<64x8xi1>, vector<64x8xf32>
    %c0_16 = arith.constant 0 : index
    %c0_17 = arith.constant 0 : index
    %51 = vector.load %arg6[%c0_16, %c0_17] : memref<64x8xf32, #tpu.memory_space<vmem>>, vector<64x8xf32>
    tpu.vector_store %arg6[%c0_16, %c0_17], %50 {strides = array<i32>} : memref<64x8xf32, #tpu.memory_space<vmem>>, vector<64x8xf32>,
    return
  }
  func.func @transform_0(%arg0: i32) -> (i32, i32) {
    %c0_i32 = arith.constant 0 : i32
    %c0_i32_0 = arith.constant 0 : i32
    %c0_i32_1 = arith.constant 0 : i32
    return %c0_i32, %c0_i32_0 : i32, i32
  }
  func.func @transform_1(%arg0: i32) -> (i32, i32) {
    %c0_i32 = arith.constant 0 : i32
    %c0_i32_0 = arith.constant 0 : i32
    %c0_i32_1 = arith.constant 0 : i32
    return %c0_i32, %c0_i32_0 : i32, i32
  }
  func.func @transform_2(%arg0: i32) -> (i32, i32) {
    %c0_i32 = arith.constant 0 : i32
    %c0_i32_0 = arith.constant 0 : i32
    %c0_i32_1 = arith.constant 0 : i32
    return %c0_i32, %c0_i32_0 : i32, i32
  }
  func.func @transform_3(%arg0: i32) -> (i32, i32) {
    %c0_i32 = arith.constant 0 : i32
    %c0_i32_0 = arith.constant 0 : i32
    %c0_i32_1 = arith.constant 0 : i32
    return %c0_i32, %c0_i32_0 : i32, i32
  }
  func.func @transform_4(%arg0: i32) -> (i32, i32) {
    %c0_i32 = arith.constant 0 : i32
    %c0_i32_0 = arith.constant 0 : i32
    %c0_i32_1 = arith.constant 0 : i32
    return %c0_i32, %c0_i32_0 : i32, i32
  }
  func.func @transform_5(%arg0: i32) -> (i32, i32) {
    %c0_i32 = arith.constant 0 : i32
    %c0_i32_0 = arith.constant 0 : i32
    %c0_i32_1 = arith.constant 0 : i32
    return %c0_i32, %c0_i32_0 : i32, i32
  }
}

module attributes {stable_mosaic.version = 11 : i64} {
  func.func @_gemm_bn_lrelu_kernel(%arg0: i32, %arg1: memref<128x64xbf16, #tpu.memory_space<vmem>>, %arg2: memref<64x32xbf16, #tpu.memory_space<vmem>>, %arg3: memref<128x1xf32, #tpu.memory_space<vmem>>, %arg4: memref<128x1xf32, #tpu.memory_space<vmem>>, %arg5: memref<128x1xf32, #tpu.memory_space<vmem>>, %arg6: memref<128x32xf32, #tpu.memory_space<vmem>>) attributes {dimension_semantics = [#tpu.dimension_semantics<arbitrary>], iteration_bounds = array<i64: 1>, scalar_prefetch = 0 : i64, scratch_operands = 0 : i64, tpu.core_type = #tpu.core_type<tc>, window_params = [{pipeline_mode = #tpu.pipeline_mode<synchronous>, transform_indices = @transform_0, window_bounds = array<i64: 128, 64>}, {pipeline_mode = #tpu.pipeline_mode<synchronous>, transform_indices = @transform_1, window_bounds = array<i64: 64, 32>}, {pipeline_mode = #tpu.pipeline_mode<synchronous>, transform_indices = @transform_2, window_bounds = array<i64: 128, 1>}, {pipeline_mode = #tpu.pipeline_mode<synchronous>, transform_indices = @transform_3, window_bounds = array<i64: 128, 1>}, {pipeline_mode = #tpu.pipeline_mode<synchronous>, transform_indices = @transform_4, window_bounds = array<i64: 128, 1>}, {pipeline_mode = #tpu.pipeline_mode<synchronous>, transform_indices = @transform_5, window_bounds = array<i64: 128, 32>}]} {
    %c0 = arith.constant 0 : index
    %c0_0 = arith.constant 0 : index
    %0 = vector.load %arg1[%c0, %c0_0] : memref<128x64xbf16, #tpu.memory_space<vmem>>, vector<128x64xbf16>
    %c0_1 = arith.constant 0 : index
    %c0_2 = arith.constant 0 : index
    %1 = vector.load %arg2[%c0_1, %c0_2] : memref<64x32xbf16, #tpu.memory_space<vmem>>, vector<64x32xbf16>
    %cst = arith.constant dense<0.000000e+00> : vector<128x32xf32>
    %2 = tpu.matmul %0, %1, %cst {dimension_numbers = #tpu.dot_dimension_numbers<[1], [0], [0], [1], [0, 0, 1, 1], [], []>} : vector<128x64xbf16>, vector<64x32xbf16>, vector<128x32xf32> -> vector<128x32xf32>
    %c0_3 = arith.constant 0 : index
    %c0_4 = arith.constant 0 : index
    %3 = vector.load %arg3[%c0_3, %c0_4] : memref<128x1xf32, #tpu.memory_space<vmem>>, vector<128x1xf32>
    %4 = vector.broadcast %3 : vector<128x1xf32> to vector<128x32xf32>
    %5 = arith.addf %2, %4 : vector<128x32xf32>
    %cst_5 = arith.constant dense<0.000000e+00> : vector<128xf32>
    %6 = vector.multi_reduction <add>, %5, %cst_5 [1] : vector<128x32xf32> to vector<128xf32>
    %7 = vector.shape_cast %6 : vector<128xf32> to vector<128x1xf32>
    %8 = arith.mulf %5, %5 : vector<128x32xf32>
    %cst_6 = arith.constant dense<0.000000e+00> : vector<128xf32>
    %9 = vector.multi_reduction <add>, %8, %cst_6 [1] : vector<128x32xf32> to vector<128xf32>
    %10 = vector.shape_cast %9 : vector<128xf32> to vector<128x1xf32>
    %11 = vector.extract_strided_slice %7 {offsets = [0, 0], sizes = [32, 1], strides = [1, 1]} : vector<128x1xf32> to vector<32x1xf32>
    %12 = vector.extract_strided_slice %10 {offsets = [0, 0], sizes = [32, 1], strides = [1, 1]} : vector<128x1xf32> to vector<32x1xf32>
    %13 = vector.extract_strided_slice %7 {offsets = [32, 0], sizes = [32, 1], strides = [1, 1]} : vector<128x1xf32> to vector<32x1xf32>
    %14 = arith.addf %11, %13 : vector<32x1xf32>
    %15 = vector.extract_strided_slice %10 {offsets = [32, 0], sizes = [32, 1], strides = [1, 1]} : vector<128x1xf32> to vector<32x1xf32>
    %16 = arith.addf %12, %15 : vector<32x1xf32>
    %17 = vector.extract_strided_slice %7 {offsets = [64, 0], sizes = [32, 1], strides = [1, 1]} : vector<128x1xf32> to vector<32x1xf32>
    %18 = arith.addf %14, %17 : vector<32x1xf32>
    %19 = vector.extract_strided_slice %10 {offsets = [64, 0], sizes = [32, 1], strides = [1, 1]} : vector<128x1xf32> to vector<32x1xf32>
    %20 = arith.addf %16, %19 : vector<32x1xf32>
    %21 = vector.extract_strided_slice %7 {offsets = [96, 0], sizes = [32, 1], strides = [1, 1]} : vector<128x1xf32> to vector<32x1xf32>
    %22 = arith.addf %18, %21 : vector<32x1xf32>
    %23 = vector.extract_strided_slice %10 {offsets = [96, 0], sizes = [32, 1], strides = [1, 1]} : vector<128x1xf32> to vector<32x1xf32>
    %24 = arith.addf %20, %23 : vector<32x1xf32>
    %cst_7 = arith.constant 7.812500e-03 : f32
    %25 = vector.broadcast %cst_7 : f32 to vector<32x1xf32>
    %26 = arith.mulf %22, %25 : vector<32x1xf32>
    %27 = tpu.concatenate %26, %26, %26, %26 in 0 : vector<32x1xf32>, vector<32x1xf32>, vector<32x1xf32>, vector<32x1xf32> -> vector<128x1xf32>
    %cst_8 = arith.constant 7.812500e-03 : f32
    %28 = vector.broadcast %cst_8 : f32 to vector<32x1xf32>
    %29 = arith.mulf %24, %28 : vector<32x1xf32>
    %30 = tpu.concatenate %29, %29, %29, %29 in 0 : vector<32x1xf32>, vector<32x1xf32>, vector<32x1xf32>, vector<32x1xf32> -> vector<128x1xf32>
    %31 = arith.mulf %27, %27 : vector<128x1xf32>
    %32 = arith.subf %30, %31 : vector<128x1xf32>
    %33 = vector.broadcast %27 : vector<128x1xf32> to vector<128x32xf32>
    %34 = arith.subf %5, %33 : vector<128x32xf32>
    %cst_9 = arith.constant 9.99999974E-6 : f32
    %35 = vector.broadcast %cst_9 : f32 to vector<128x1xf32>
    %36 = arith.addf %32, %35 : vector<128x1xf32>
    %37 = math.rsqrt %36 : vector<128x1xf32>
    %38 = vector.broadcast %37 : vector<128x1xf32> to vector<128x32xf32>
    %39 = arith.mulf %34, %38 : vector<128x32xf32>
    %c0_10 = arith.constant 0 : index
    %c0_11 = arith.constant 0 : index
    %40 = vector.load %arg4[%c0_10, %c0_11] : memref<128x1xf32, #tpu.memory_space<vmem>>, vector<128x1xf32>
    %41 = vector.broadcast %40 : vector<128x1xf32> to vector<128x32xf32>
    %42 = arith.mulf %39, %41 : vector<128x32xf32>
    %c0_12 = arith.constant 0 : index
    %c0_13 = arith.constant 0 : index
    %43 = vector.load %arg5[%c0_12, %c0_13] : memref<128x1xf32, #tpu.memory_space<vmem>>, vector<128x1xf32>
    %44 = vector.broadcast %43 : vector<128x1xf32> to vector<128x32xf32>
    %45 = arith.addf %42, %44 : vector<128x32xf32>
    %cst_14 = arith.constant 0.000000e+00 : f32
    %46 = vector.broadcast %cst_14 : f32 to vector<128x32xf32>
    %47 = arith.cmpf oge, %45, %46 : vector<128x32xf32>
    %cst_15 = arith.constant 0.00999999977 : f32
    %48 = vector.broadcast %cst_15 : f32 to vector<128x32xf32>
    %49 = arith.mulf %48, %45 : vector<128x32xf32>
    %50 = arith.select %47, %45, %49 : vector<128x32xi1>, vector<128x32xf32>
    %c0_16 = arith.constant 0 : index
    %c0_17 = arith.constant 0 : index
    %51 = vector.load %arg6[%c0_16, %c0_17] : memref<128x32xf32, #tpu.memory_space<vmem>>, vector<128x32xf32>
    tpu.vector_store %arg6[%c0_16, %c0_17], %50 {strides = array<i32>} : memref<128x32xf32, #tpu.memory_space<vmem>>, vector<128x32xf32>,
    return
  }
  func.func @transform_0(%arg0: i32) -> (i32, i32) {
    %c0_i32 = arith.constant 0 : i32
    %c0_i32_0 = arith.constant 0 : i32
    %c0_i32_1 = arith.constant 0 : i32
    return %c0_i32, %c0_i32_0 : i32, i32
  }
  func.func @transform_1(%arg0: i32) -> (i32, i32) {
    %c0_i32 = arith.constant 0 : i32
    %c0_i32_0 = arith.constant 0 : i32
    %c0_i32_1 = arith.constant 0 : i32
    return %c0_i32, %c0_i32_0 : i32, i32
  }
  func.func @transform_2(%arg0: i32) -> (i32, i32) {
    %c0_i32 = arith.constant 0 : i32
    %c0_i32_0 = arith.constant 0 : i32
    %c0_i32_1 = arith.constant 0 : i32
    return %c0_i32, %c0_i32_0 : i32, i32
  }
  func.func @transform_3(%arg0: i32) -> (i32, i32) {
    %c0_i32 = arith.constant 0 : i32
    %c0_i32_0 = arith.constant 0 : i32
    %c0_i32_1 = arith.constant 0 : i32
    return %c0_i32, %c0_i32_0 : i32, i32
  }
  func.func @transform_4(%arg0: i32) -> (i32, i32) {
    %c0_i32 = arith.constant 0 : i32
    %c0_i32_0 = arith.constant 0 : i32
    %c0_i32_1 = arith.constant 0 : i32
    return %c0_i32, %c0_i32_0 : i32, i32
  }
  func.func @transform_5(%arg0: i32) -> (i32, i32) {
    %c0_i32 = arith.constant 0 : i32
    %c0_i32_0 = arith.constant 0 : i32
    %c0_i32_1 = arith.constant 0 : i32
    return %c0_i32, %c0_i32_0 : i32, i32
  }
}

module attributes {stable_mosaic.version = 11 : i64} {
  func.func @_gemm_bn_lrelu_kernel(%arg0: i32, %arg1: memref<128x128xbf16, #tpu.memory_space<vmem>>, %arg2: memref<128x128xbf16, #tpu.memory_space<vmem>>, %arg3: memref<128x1xf32, #tpu.memory_space<vmem>>, %arg4: memref<128x1xf32, #tpu.memory_space<vmem>>, %arg5: memref<128x1xf32, #tpu.memory_space<vmem>>, %arg6: memref<128x128xf32, #tpu.memory_space<vmem>>) attributes {dimension_semantics = [#tpu.dimension_semantics<arbitrary>], iteration_bounds = array<i64: 1>, scalar_prefetch = 0 : i64, scratch_operands = 0 : i64, tpu.core_type = #tpu.core_type<tc>, window_params = [{pipeline_mode = #tpu.pipeline_mode<synchronous>, transform_indices = @transform_0, window_bounds = array<i64: 128, 128>}, {pipeline_mode = #tpu.pipeline_mode<synchronous>, transform_indices = @transform_1, window_bounds = array<i64: 128, 128>}, {pipeline_mode = #tpu.pipeline_mode<synchronous>, transform_indices = @transform_2, window_bounds = array<i64: 128, 1>}, {pipeline_mode = #tpu.pipeline_mode<synchronous>, transform_indices = @transform_3, window_bounds = array<i64: 128, 1>}, {pipeline_mode = #tpu.pipeline_mode<synchronous>, transform_indices = @transform_4, window_bounds = array<i64: 128, 1>}, {pipeline_mode = #tpu.pipeline_mode<synchronous>, transform_indices = @transform_5, window_bounds = array<i64: 128, 128>}]} {
    %c0 = arith.constant 0 : index
    %c0_0 = arith.constant 0 : index
    %0 = vector.load %arg1[%c0, %c0_0] : memref<128x128xbf16, #tpu.memory_space<vmem>>, vector<128x128xbf16>
    %c0_1 = arith.constant 0 : index
    %c0_2 = arith.constant 0 : index
    %1 = vector.load %arg2[%c0_1, %c0_2] : memref<128x128xbf16, #tpu.memory_space<vmem>>, vector<128x128xbf16>
    %cst = arith.constant dense<0.000000e+00> : vector<128x128xf32>
    %2 = tpu.matmul %0, %1, %cst {dimension_numbers = #tpu.dot_dimension_numbers<[1], [0], [0], [1], [0, 0, 1, 1], [], []>} : vector<128x128xbf16>, vector<128x128xbf16>, vector<128x128xf32> -> vector<128x128xf32>
    %c0_3 = arith.constant 0 : index
    %c0_4 = arith.constant 0 : index
    %3 = vector.load %arg3[%c0_3, %c0_4] : memref<128x1xf32, #tpu.memory_space<vmem>>, vector<128x1xf32>
    %4 = vector.broadcast %3 : vector<128x1xf32> to vector<128x128xf32>
    %5 = arith.addf %2, %4 : vector<128x128xf32>
    %cst_5 = arith.constant dense<0.000000e+00> : vector<128xf32>
    %6 = vector.multi_reduction <add>, %5, %cst_5 [1] : vector<128x128xf32> to vector<128xf32>
    %7 = vector.shape_cast %6 : vector<128xf32> to vector<128x1xf32>
    %8 = arith.mulf %5, %5 : vector<128x128xf32>
    %cst_6 = arith.constant dense<0.000000e+00> : vector<128xf32>
    %9 = vector.multi_reduction <add>, %8, %cst_6 [1] : vector<128x128xf32> to vector<128xf32>
    %10 = vector.shape_cast %9 : vector<128xf32> to vector<128x1xf32>
    %11 = vector.extract_strided_slice %7 {offsets = [0, 0], sizes = [32, 1], strides = [1, 1]} : vector<128x1xf32> to vector<32x1xf32>
    %12 = vector.extract_strided_slice %10 {offsets = [0, 0], sizes = [32, 1], strides = [1, 1]} : vector<128x1xf32> to vector<32x1xf32>
    %13 = vector.extract_strided_slice %7 {offsets = [32, 0], sizes = [32, 1], strides = [1, 1]} : vector<128x1xf32> to vector<32x1xf32>
    %14 = arith.addf %11, %13 : vector<32x1xf32>
    %15 = vector.extract_strided_slice %10 {offsets = [32, 0], sizes = [32, 1], strides = [1, 1]} : vector<128x1xf32> to vector<32x1xf32>
    %16 = arith.addf %12, %15 : vector<32x1xf32>
    %17 = vector.extract_strided_slice %7 {offsets = [64, 0], sizes = [32, 1], strides = [1, 1]} : vector<128x1xf32> to vector<32x1xf32>
    %18 = arith.addf %14, %17 : vector<32x1xf32>
    %19 = vector.extract_strided_slice %10 {offsets = [64, 0], sizes = [32, 1], strides = [1, 1]} : vector<128x1xf32> to vector<32x1xf32>
    %20 = arith.addf %16, %19 : vector<32x1xf32>
    %21 = vector.extract_strided_slice %7 {offsets = [96, 0], sizes = [32, 1], strides = [1, 1]} : vector<128x1xf32> to vector<32x1xf32>
    %22 = arith.addf %18, %21 : vector<32x1xf32>
    %23 = vector.extract_strided_slice %10 {offsets = [96, 0], sizes = [32, 1], strides = [1, 1]} : vector<128x1xf32> to vector<32x1xf32>
    %24 = arith.addf %20, %23 : vector<32x1xf32>
    %cst_7 = arith.constant 0.001953125 : f32
    %25 = vector.broadcast %cst_7 : f32 to vector<32x1xf32>
    %26 = arith.mulf %22, %25 : vector<32x1xf32>
    %27 = tpu.concatenate %26, %26, %26, %26 in 0 : vector<32x1xf32>, vector<32x1xf32>, vector<32x1xf32>, vector<32x1xf32> -> vector<128x1xf32>
    %cst_8 = arith.constant 0.001953125 : f32
    %28 = vector.broadcast %cst_8 : f32 to vector<32x1xf32>
    %29 = arith.mulf %24, %28 : vector<32x1xf32>
    %30 = tpu.concatenate %29, %29, %29, %29 in 0 : vector<32x1xf32>, vector<32x1xf32>, vector<32x1xf32>, vector<32x1xf32> -> vector<128x1xf32>
    %31 = arith.mulf %27, %27 : vector<128x1xf32>
    %32 = arith.subf %30, %31 : vector<128x1xf32>
    %33 = vector.broadcast %27 : vector<128x1xf32> to vector<128x128xf32>
    %34 = arith.subf %5, %33 : vector<128x128xf32>
    %cst_9 = arith.constant 9.99999974E-6 : f32
    %35 = vector.broadcast %cst_9 : f32 to vector<128x1xf32>
    %36 = arith.addf %32, %35 : vector<128x1xf32>
    %37 = math.rsqrt %36 : vector<128x1xf32>
    %38 = vector.broadcast %37 : vector<128x1xf32> to vector<128x128xf32>
    %39 = arith.mulf %34, %38 : vector<128x128xf32>
    %c0_10 = arith.constant 0 : index
    %c0_11 = arith.constant 0 : index
    %40 = vector.load %arg4[%c0_10, %c0_11] : memref<128x1xf32, #tpu.memory_space<vmem>>, vector<128x1xf32>
    %41 = vector.broadcast %40 : vector<128x1xf32> to vector<128x128xf32>
    %42 = arith.mulf %39, %41 : vector<128x128xf32>
    %c0_12 = arith.constant 0 : index
    %c0_13 = arith.constant 0 : index
    %43 = vector.load %arg5[%c0_12, %c0_13] : memref<128x1xf32, #tpu.memory_space<vmem>>, vector<128x1xf32>
    %44 = vector.broadcast %43 : vector<128x1xf32> to vector<128x128xf32>
    %45 = arith.addf %42, %44 : vector<128x128xf32>
    %cst_14 = arith.constant 0.000000e+00 : f32
    %46 = vector.broadcast %cst_14 : f32 to vector<128x128xf32>
    %47 = arith.cmpf oge, %45, %46 : vector<128x128xf32>
    %cst_15 = arith.constant 0.00999999977 : f32
    %48 = vector.broadcast %cst_15 : f32 to vector<128x128xf32>
    %49 = arith.mulf %48, %45 : vector<128x128xf32>
    %50 = arith.select %47, %45, %49 : vector<128x128xi1>, vector<128x128xf32>
    %c0_16 = arith.constant 0 : index
    %c0_17 = arith.constant 0 : index
    %51 = vector.load %arg6[%c0_16, %c0_17] : memref<128x128xf32, #tpu.memory_space<vmem>>, vector<128x128xf32>
    tpu.vector_store %arg6[%c0_16, %c0_17], %50 {strides = array<i32>} : memref<128x128xf32, #tpu.memory_space<vmem>>, vector<128x128xf32>,
    return
  }
  func.func @transform_0(%arg0: i32) -> (i32, i32) {
    %c0_i32 = arith.constant 0 : i32
    %c0_i32_0 = arith.constant 0 : i32
    %c0_i32_1 = arith.constant 0 : i32
    return %c0_i32, %c0_i32_0 : i32, i32
  }
  func.func @transform_1(%arg0: i32) -> (i32, i32) {
    %c0_i32 = arith.constant 0 : i32
    %c0_i32_0 = arith.constant 0 : i32
    %c0_i32_1 = arith.constant 0 : i32
    return %c0_i32, %c0_i32_0 : i32, i32
  }
  func.func @transform_2(%arg0: i32) -> (i32, i32) {
    %c0_i32 = arith.constant 0 : i32
    %c0_i32_0 = arith.constant 0 : i32
    %c0_i32_1 = arith.constant 0 : i32
    return %c0_i32, %c0_i32_0 : i32, i32
  }
  func.func @transform_3(%arg0: i32) -> (i32, i32) {
    %c0_i32 = arith.constant 0 : i32
    %c0_i32_0 = arith.constant 0 : i32
    %c0_i32_1 = arith.constant 0 : i32
    return %c0_i32, %c0_i32_0 : i32, i32
  }
  func.func @transform_4(%arg0: i32) -> (i32, i32) {
    %c0_i32 = arith.constant 0 : i32
    %c0_i32_0 = arith.constant 0 : i32
    %c0_i32_1 = arith.constant 0 : i32
    return %c0_i32, %c0_i32_0 : i32, i32
  }
  func.func @transform_5(%arg0: i32) -> (i32, i32) {
    %c0_i32 = arith.constant 0 : i32
    %c0_i32_0 = arith.constant 0 : i32
    %c0_i32_1 = arith.constant 0 : i32
    return %c0_i32, %c0_i32_0 : i32, i32
  }
}

module attributes {stable_mosaic.version = 11 : i64} {
  func.func @_gemm_bias_kernel(%arg0: i32, %arg1: memref<3x288xbf16, #tpu.memory_space<vmem>>, %arg2: memref<288x512xbf16, #tpu.memory_space<vmem>>, %arg3: memref<3x1xf32, #tpu.memory_space<vmem>>, %arg4: memref<3x512xf32, #tpu.memory_space<vmem>>) attributes {dimension_semantics = [#tpu.dimension_semantics<arbitrary>], iteration_bounds = array<i64: 1>, scalar_prefetch = 0 : i64, scratch_operands = 0 : i64, tpu.core_type = #tpu.core_type<tc>, window_params = [{pipeline_mode = #tpu.pipeline_mode<synchronous>, transform_indices = @transform_0, window_bounds = array<i64: 3, 288>}, {pipeline_mode = #tpu.pipeline_mode<synchronous>, transform_indices = @transform_1, window_bounds = array<i64: 288, 512>}, {pipeline_mode = #tpu.pipeline_mode<synchronous>, transform_indices = @transform_2, window_bounds = array<i64: 3, 1>}, {pipeline_mode = #tpu.pipeline_mode<synchronous>, transform_indices = @transform_3, window_bounds = array<i64: 3, 512>}]} {
    %c0 = arith.constant 0 : index
    %c0_0 = arith.constant 0 : index
    %0 = vector.load %arg1[%c0, %c0_0] : memref<3x288xbf16, #tpu.memory_space<vmem>>, vector<3x288xbf16>
    %c0_1 = arith.constant 0 : index
    %c0_2 = arith.constant 0 : index
    %1 = vector.load %arg2[%c0_1, %c0_2] : memref<288x512xbf16, #tpu.memory_space<vmem>>, vector<288x512xbf16>
    %cst = arith.constant dense<0.000000e+00> : vector<3x512xf32>
    %2 = tpu.matmul %0, %1, %cst {dimension_numbers = #tpu.dot_dimension_numbers<[1], [0], [0], [1], [0, 0, 1, 1], [], []>} : vector<3x288xbf16>, vector<288x512xbf16>, vector<3x512xf32> -> vector<3x512xf32>
    %c0_3 = arith.constant 0 : index
    %c0_4 = arith.constant 0 : index
    %3 = vector.load %arg3[%c0_3, %c0_4] : memref<3x1xf32, #tpu.memory_space<vmem>>, vector<3x1xf32>
    %4 = vector.broadcast %3 : vector<3x1xf32> to vector<3x512xf32>
    %5 = arith.addf %2, %4 : vector<3x512xf32>
    %6 = math.tanh %5 : vector<3x512xf32>
    %c0_5 = arith.constant 0 : index
    %c0_6 = arith.constant 0 : index
    %7 = vector.load %arg4[%c0_5, %c0_6] : memref<3x512xf32, #tpu.memory_space<vmem>>, vector<3x512xf32>
    tpu.vector_store %arg4[%c0_5, %c0_6], %6 {strides = array<i32>} : memref<3x512xf32, #tpu.memory_space<vmem>>, vector<3x512xf32>,
    return
  }
  func.func @transform_0(%arg0: i32) -> (i32, i32) {
    %c0_i32 = arith.constant 0 : i32
    %c0_i32_0 = arith.constant 0 : i32
    %c0_i32_1 = arith.constant 0 : i32
    return %c0_i32, %c0_i32_0 : i32, i32
  }
  func.func @transform_1(%arg0: i32) -> (i32, i32) {
    %c0_i32 = arith.constant 0 : i32
    %c0_i32_0 = arith.constant 0 : i32
    %c0_i32_1 = arith.constant 0 : i32
    return %c0_i32, %c0_i32_0 : i32, i32
  }
  func.func @transform_2(%arg0: i32) -> (i32, i32) {
    %c0_i32 = arith.constant 0 : i32
    %c0_i32_0 = arith.constant 0 : i32
    %c0_i32_1 = arith.constant 0 : i32
    return %c0_i32, %c0_i32_0 : i32, i32
  }
  func.func @transform_3(%arg0: i32) -> (i32, i32) {
    %c0_i32 = arith.constant 0 : i32
    %c0_i32_0 = arith.constant 0 : i32
    %c0_i32_1 = arith.constant 0 : i32
    return %c0_i32, %c0_i32_0 : i32, i32
  }
}

</mosaic_0001>

<llo_original>
// kernel: cvae_forward.11
$region0: #{cvae_forward.11}
  #allocation0 [shape = 'u32[]', space=smem, size = 0x4, offset = 0x4, fixed_abs, tag = 'smem constant byte address 0x4 - core index']
  #allocation1 [shape = 'u32[72,128]{1,0:T(1,128)}', space=vmem, size = 0x9000, scoped, tag = 'internal scratch']
  %s0 = inlined_call_operand.vmem [shape: bf16[32,99], index: 0, kind: input, shape index: {}]
  %s1 = inlined_call_operand.vmem [shape: bf16[99,128], index: 1, kind: input, shape index: {}]
  %s2 = inlined_call_operand.vmem [shape: f32[32,1], index: 2, kind: input, shape index: {}]
  %s3 = inlined_call_operand.vmem [shape: f32[32,1], index: 3, kind: input, shape index: {}]
  %s4 = inlined_call_operand.vmem [shape: f32[32,1], index: 4, kind: input, shape index: {}]
  %s5 = inlined_call_operand.vmem [shape: f32[32,128], index: 5, kind: output, shape index: {}]
  %s6 = sld [smem:[#allocation0]]
  $region30: #{cvae_forward.11} parent=0
    _
  %s8 = ssub.s32 1, %s6
  %s9 = scalar_select 0, %s8, %s6
  // Predicated region
  $region2: #{cvae_forward.11} parent=0 // pred_check
    _
  $region3: #{cvae_forward.11} parent=0 // pred_check_branch
    %11 = sbr.rel (0) target = $region5
  $region4: #{cvae_forward.11} parent=0 // pred_region
    _
  $region5: #{cvae_forward.11} parent=0 // pred_fallthru
    _
  // Predicated region
  $region6: #{cvae_forward.11} parent=0 // pred_check
    _
  $region7: #{cvae_forward.11} parent=0 // pred_check_branch
    %13 = sbr.rel (0) target = $region9
  $region8: #{cvae_forward.11} parent=0 // pred_region
    _
  $region9: #{cvae_forward.11} parent=0 // pred_fallthru
    _
  // Predicated region
  $region10: #{cvae_forward.11} parent=0 // pred_check
    _
  $region11: #{cvae_forward.11} parent=0 // pred_check_branch
    %15 = sbr.rel (0) target = $region13
  $region12: #{cvae_forward.11} parent=0 // pred_region
    _
  $region13: #{cvae_forward.11} parent=0 // pred_fallthru
    _
  // Predicated region
  $region14: #{cvae_forward.11} parent=0 // pred_check
    _
  $region15: #{cvae_forward.11} parent=0 // pred_check_branch
    %17 = sbr.rel (0) target = $region17
  $region16: #{cvae_forward.11} parent=0 // pred_region
    _
  $region17: #{cvae_forward.11} parent=0 // pred_fallthru
    _
  // Predicated region
  $region18: #{cvae_forward.11} parent=0 // pred_check
    _
  $region19: #{cvae_forward.11} parent=0 // pred_check_branch
    %19 = sbr.rel (0) target = $region21
  $region20: #{cvae_forward.11} parent=0 // pred_region
    _
  $region21: #{cvae_forward.11} parent=0 // pred_fallthru
    _
  %v21 = vld [vmem:[%s0] sm:$0xf]
  %v22 = vld [vmem:[%s0 + $0x4] sm:$0xf]
  %v23 = vld [vmem:[%s0 + $0x8] sm:$0xf]
  %v24 = vld [vmem:[%s0 + $0xc] sm:$0xf]
  %v25 = vld [vmem:[%s1] sm:$0xf]
  %v26 = vld [vmem:[%s1 + $0x4] sm:$0xf]
  %v27 = vld [vmem:[%s1 + $0x8] sm:$0xf]
  %v28 = vld [vmem:[%s1 + $0xc] sm:$0xf]
  %v29 = vld [vmem:[%s1 + $0x10] sm:$0xf]
  %v30 = vld [vmem:[%s1 + $0x14] sm:$0xf]
  %v31 = vld [vmem:[%s1 + $0x18] sm:$0xf]
  %v32 = vld [vmem:[%s1 + $0x1c] sm:$0xf]
  %v33 = vld [vmem:[%s1 + $0x20] sm:$0xf]
  %v34 = vld [vmem:[%s1 + $0x24] sm:$0xf]
  %v35 = vld [vmem:[%s1 + $0x28] sm:$0xf]
  %v36 = vld [vmem:[%s1 + $0x2c] sm:$0xf]
  %v37 = vld [vmem:[%s1 + $0x30] sm:$0x3]
  %v38 = vld [vmem:[%s2] sm:$0xff]
  %v39 = vld [vmem:[%s2 + $0x8] sm:$0xff]
  %v40 = vld [vmem:[%s2 + $0x10] sm:$0xff]
  %v41 = vld [vmem:[%s2 + $0x18] sm:$0xff]
  %43 = vset.pattern.permute.xlu0 0
  %44 = vperm.xlu0 %43, %v38
  %v45 = vpop.permute.xlu0 %44
  %48 = vset.pattern.permute.xlu0 0
  %49 = vperm.xlu0 %48, %v39
  %v50 = vpop.permute.xlu0 %49
  %53 = vset.pattern.permute.xlu0 0
  %54 = vperm.xlu0 %53, %v40
  %v55 = vpop.permute.xlu0 %54
  %58 = vset.pattern.permute.xlu0 0
  %59 = vperm.xlu0 %58, %v41
  %v60 = vpop.permute.xlu0 %59
  %v66 = vunpack.c.l.b16 %v21
  %v67 = vunpack.c.l.b16 %v22
  %v68 = vunpack.c.l.b16 %v23
  %v69 = vunpack.c.l.b16 %v24
  %v70 = vpack.c.b16 %v67, %v66
  %v71 = vpack.c.b16 %v69, %v68
  %v85 = vunpack.c.l.b16 %v25
  %v86 = vunpack.c.l.b16 %v26
  %v87 = vunpack.c.l.b16 %v27
  %v88 = vunpack.c.l.b16 %v28
  %v89 = vunpack.c.l.b16 %v29
  %v90 = vunpack.c.l.b16 %v30
  %v91 = vunpack.c.l.b16 %v31
  %v92 = vunpack.c.l.b16 %v32
  %v93 = vunpack.c.l.b16 %v33
  %v94 = vunpack.c.l.b16 %v34
  %v95 = vunpack.c.l.b16 %v35
  %v96 = vunpack.c.l.b16 %v36
  %v97 = vunpack.c.l.b16 %v37
  %v98 = vpack.c.b16 %v86, %v85
  %v99 = vpack.c.b16 %v88, %v87
  %v100 = vpack.c.b16 %v90, %v89
  %v101 = vpack.c.b16 %v92, %v91
  %v102 = vpack.c.b16 %v94, %v93
  %v103 = vpack.c.b16 %v96, %v95
  %v104 = vpack.c.b16 %v97, %v97
  %vm111 = vcmask 809984
  %v113 = vsel %vm111, %v70, 0
  %v116 = vsel %vm111, %v71, 0
  %vm118 = vcmask 1040384
  %vm119 = vcmask 1041408
  %v120 = vsel %vm118, 4294967295, 65535
  %v121 = vsel %vm119, %v120, 0
  %v123 = vand.u32 %v104, %v121
  %125 = vmatpush.bf16.msra.mxu0 0
  %126 = vmatpush.bf16.msra.mxu0 %v123
  %127 = vmatpush.bf16.msra.mxu0 %v103
  %128 = vmatpush.bf16.msra.mxu0 %v102
  %129 = vmatpush.bf16.msra.mxu0 %v101
  %130 = vmatpush.bf16.msra.mxu0 %v100
  %131 = vmatpush.bf16.msra.mxu0 %v99
  %132 = vmatpush.bf16.msra.mxu0 %v98
  %133 = vmatmul.bf16.gmra.mxu0 %v113
  %v134 = vpop.f32.mrf.mxu0
  %v135 = vadd.f32 %v45, %v134
  %v136 = vpop.f32.mrf.mxu0
  %v137 = vadd.f32 %v50, %v136
  %138 = vmatmul.bf16.gmra.mxu0 %v116
  %v139 = vpop.f32.mrf.mxu0
  %v140 = vadd.f32 %v55, %v139
  %v141 = vpop.f32.mrf.mxu0
  %v142 = vadd.f32 %v60, %v141
  %143 = vdwg.mxu0
  %144 = vadd.xlane.f32.xlu0 %v135
  %v145 = vpop.xlane.xlu0 %144
  %146 = vadd.xlane.f32.xlu0 %v137
  %v147 = vpop.xlane.xlu0 %146
  %148 = vadd.xlane.f32.xlu0 %v140
  %v149 = vpop.xlane.xlu0 %148
  %150 = vadd.xlane.f32.xlu0 %v142
  %v151 = vpop.xlane.xlu0 %150
  %v152 = vmul.f32 %v135, %v135
  %v153 = vmul.f32 %v137, %v137
  %v154 = vmul.f32 %v140, %v140
  %v155 = vmul.f32 %v142, %v142
  %156 = vadd.xlane.f32.xlu0 %v152
  %v157 = vpop.xlane.xlu0 %156
  %158 = vadd.xlane.f32.xlu0 %v153
  %v159 = vpop.xlane.xlu0 %158
  %160 = vadd.xlane.f32.xlu0 %v154
  %v161 = vpop.xlane.xlu0 %160
  %162 = vadd.xlane.f32.xlu0 %v155
  %v163 = vpop.xlane.xlu0 %162
  %v164 = vmul.f32 %v145, 0.0078125
  %v165 = vmul.f32 %v147, 0.0078125
  %v166 = vmul.f32 %v149, 0.0078125
  %v167 = vmul.f32 %v151, 0.0078125
  %v168 = vmul.f32 %v157, 0.0078125
  %v169 = vmul.f32 %v159, 0.0078125
  %v170 = vmul.f32 %v161, 0.0078125
  %v171 = vmul.f32 %v163, 0.0078125
  %v172 = vmul.f32 %v164, %v164
  %v173 = vmul.f32 %v165, %v165
  %v174 = vmul.f32 %v166, %v166
  %v175 = vmul.f32 %v167, %v167
  %v176 = vsub.f32 %v168, %v172
  %v177 = vsub.f32 %v169, %v173
  %v178 = vsub.f32 %v170, %v174
  %v179 = vsub.f32 %v171, %v175
  %v180 = vsub.f32 %v135, %v164
  %v181 = vsub.f32 %v137, %v165
  %v182 = vsub.f32 %v140, %v166
  %v183 = vsub.f32 %v142, %v167
  %v184 = vadd.f32 %v176, 1e-05
  %v185 = vadd.f32 %v177, 1e-05
  %v186 = vadd.f32 %v178, 1e-05
  %v187 = vadd.f32 %v179, 1e-05
  %v188 = vrsqrt.pop %v184
  %v189 = vmul.f32 %v188, %v184
  %v190 = vmul.f32 %v189, %v188
  %v191 = vmul.f32 0.5, %v190
  %v192 = vsub.f32 1.5, %v191
  %v193 = vmul.f32 %v188, %v192
  %vm194 = vweird.f32 %v184
  %vm195 = vweird.f32 %v188
  %vm196 = vmor %vm194, %vm195
  %v197 = vsel %vm196, %v188, %v193
  %v198 = vrsqrt.pop %v185
  %v199 = vmul.f32 %v198, %v185
  %v200 = vmul.f32 %v199, %v198
  %v201 = vmul.f32 0.5, %v200
  %v202 = vsub.f32 1.5, %v201
  %v203 = vmul.f32 %v198, %v202
  %vm204 = vweird.f32 %v185
  %vm205 = vweird.f32 %v198
  %vm206 = vmor %vm204, %vm205
  %v207 = vsel %vm206, %v198, %v203
  %v208 = vrsqrt.pop %v186
  %v209 = vmul.f32 %v208, %v186
  %v210 = vmul.f32 %v209, %v208
  %v211 = vmul.f32 0.5, %v210
  %v212 = vsub.f32 1.5, %v211
  %v213 = vmul.f32 %v208, %v212
  %vm214 = vweird.f32 %v186
  %vm215 = vweird.f32 %v208
  %vm216 = vmor %vm214, %vm215
  %v217 = vsel %vm216, %v208, %v213
  %v218 = vrsqrt.pop %v187
  %v219 = vmul.f32 %v218, %v187
  %v220 = vmul.f32 %v219, %v218
  %v221 = vmul.f32 0.5, %v220
  %v222 = vsub.f32 1.5, %v221
  %v223 = vmul.f32 %v218, %v222
  %vm224 = vweird.f32 %v187
  %vm225 = vweird.f32 %v218
  %vm226 = vmor %vm224, %vm225
  %v227 = vsel %vm226, %v218, %v223
  %v228 = vmul.f32 %v180, %v197
  %v229 = vmul.f32 %v181, %v207
  %v230 = vmul.f32 %v182, %v217
  %v231 = vmul.f32 %v183, %v227
  %v232 = vld [vmem:[%s3] sm:$0xff]
  %v233 = vld [vmem:[%s3 + $0x8] sm:$0xff]
  %v234 = vld [vmem:[%s3 + $0x10] sm:$0xff]
  %v235 = vld [vmem:[%s3 + $0x18] sm:$0xff]
  %237 = vset.pattern.permute.xlu0 0
  %238 = vperm.xlu0 %237, %v232
  %v239 = vpop.permute.xlu0 %238
  %242 = vset.pattern.permute.xlu0 0
  %243 = vperm.xlu0 %242, %v233
  %v244 = vpop.permute.xlu0 %243
  %247 = vset.pattern.permute.xlu0 0
  %248 = vperm.xlu0 %247, %v234
  %v249 = vpop.permute.xlu0 %248
  %252 = vset.pattern.permute.xlu0 0
  %253 = vperm.xlu0 %252, %v235
  %v254 = vpop.permute.xlu0 %253
  %v256 = vmul.f32 %v228, %v239
  %v257 = vmul.f32 %v229, %v244
  %v258 = vmul.f32 %v230, %v249
  %v259 = vmul.f32 %v231, %v254
  %v260 = vld [vmem:[%s4] sm:$0xff]
  %v261 = vld [vmem:[%s4 + $0x8] sm:$0xff]
  %v262 = vld [vmem:[%s4 + $0x10] sm:$0xff]
  %v263 = vld [vmem:[%s4 + $0x18] sm:$0xff]
  %265 = vset.pattern.permute.xlu0 0
  %266 = vperm.xlu0 %265, %v260
  %v267 = vpop.permute.xlu0 %266
  %270 = vset.pattern.permute.xlu0 0
  %271 = vperm.xlu0 %270, %v261
  %v272 = vpop.permute.xlu0 %271
  %275 = vset.pattern.permute.xlu0 0
  %276 = vperm.xlu0 %275, %v262
  %v277 = vpop.permute.xlu0 %276
  %280 = vset.pattern.permute.xlu0 0
  %281 = vperm.xlu0 %280, %v263
  %v282 = vpop.permute.xlu0 %281
  %v284 = vadd.f32 %v256, %v267
  %v285 = vadd.f32 %v257, %v272
  %v286 = vadd.f32 %v258, %v277
  %v287 = vadd.f32 %v259, %v282
  %vm288 = vcmp.ge.f32.partialorder %v284, 0.0
  %vm289 = vcmp.ge.f32.partialorder %v285, 0.0
  %vm290 = vcmp.ge.f32.partialorder %v286, 0.0
  %vm291 = vcmp.ge.f32.partialorder %v287, 0.0
  %v292 = vmul.f32 %v284, 0.01
  %v293 = vmul.f32 %v285, 0.01
  %v294 = vmul.f32 %v286, 0.01
  %v295 = vmul.f32 %v287, 0.01
  %v296 = vsel %vm288, %v284, %v292
  %v297 = vsel %vm289, %v285, %v293
  %v298 = vsel %vm290, %v286, %v294
  %v299 = vsel %vm291, %v287, %v295
  %300 = vst [vmem:[%s5] sm:$0xff] %v296
  %301 = vst [vmem:[%s5 + $0x8] sm:$0xff] %v297
  %302 = vst [vmem:[%s5 + $0x10] sm:$0xff] %v298
  %303 = vst [vmem:[%s5 + $0x18] sm:$0xff] %v299
  // Predicated region
  $region22: #{cvae_forward.11} parent=0 // pred_check
    _
  $region23: #{cvae_forward.11} parent=0 // pred_check_branch
    %305 = sbr.rel (0) target = $region25
  $region24: #{cvae_forward.11} parent=0 // pred_region
    _
  $region25: #{cvae_forward.11} parent=0 // pred_fallthru
    _
  // Predicated region
  $region26: #{cvae_forward.11} parent=0 // pred_check
    _
  $region27: #{cvae_forward.11} parent=0 // pred_check_branch
    %307 = sbr.rel (0) target = $region29
  $region28: #{cvae_forward.11} parent=0 // pred_region
    _
  $region29: #{cvae_forward.11} parent=0 // pred_fallthru
    _

// kernel: cvae_forward.12
$region0: #{cvae_forward.12}
  #allocation0 [shape = 'u32[]', space=smem, size = 0x4, offset = 0x4, fixed_abs, tag = 'smem constant byte address 0x4 - core index']
  #allocation1 [shape = 'u32[72,128]{1,0:T(1,128)}', space=vmem, size = 0x9000, scoped, tag = 'internal scratch']
  %s0 = inlined_call_operand.vmem [shape: bf16[16,288], index: 0, kind: input, shape index: {}]
  %s1 = inlined_call_operand.vmem [shape: bf16[288,32], index: 1, kind: input, shape index: {}]
  %s2 = inlined_call_operand.vmem [shape: f32[16,1], index: 2, kind: input, shape index: {}]
  %s3 = inlined_call_operand.vmem [shape: f32[16,1], index: 3, kind: input, shape index: {}]
  %s4 = inlined_call_operand.vmem [shape: f32[16,1], index: 4, kind: input, shape index: {}]
  %s5 = inlined_call_operand.vmem [shape: f32[16,32], index: 5, kind: output, shape index: {}]
  %s6 = sld [smem:[#allocation0]]
  $region30: #{cvae_forward.12} parent=0
    _
  %s8 = ssub.s32 1, %s6
  %s9 = scalar_select 0, %s8, %s6
  // Predicated region
  $region2: #{cvae_forward.12} parent=0 // pred_check
    _
  $region3: #{cvae_forward.12} parent=0 // pred_check_branch
    %11 = sbr.rel (0) target = $region5
  $region4: #{cvae_forward.12} parent=0 // pred_region
    _
  $region5: #{cvae_forward.12} parent=0 // pred_fallthru
    _
  // Predicated region
  $region6: #{cvae_forward.12} parent=0 // pred_check
    _
  $region7: #{cvae_forward.12} parent=0 // pred_check_branch
    %13 = sbr.rel (0) target = $region9
  $region8: #{cvae_forward.12} parent=0 // pred_region
    _
  $region9: #{cvae_forward.12} parent=0 // pred_fallthru
    _
  // Predicated region
  $region10: #{cvae_forward.12} parent=0 // pred_check
    _
  $region11: #{cvae_forward.12} parent=0 // pred_check_branch
    %15 = sbr.rel (0) target = $region13
  $region12: #{cvae_forward.12} parent=0 // pred_region
    _
  $region13: #{cvae_forward.12} parent=0 // pred_fallthru
    _
  // Predicated region
  $region14: #{cvae_forward.12} parent=0 // pred_check
    _
  $region15: #{cvae_forward.12} parent=0 // pred_check_branch
    %17 = sbr.rel (0) target = $region17
  $region16: #{cvae_forward.12} parent=0 // pred_region
    _
  $region17: #{cvae_forward.12} parent=0 // pred_fallthru
    _
  // Predicated region
  $region18: #{cvae_forward.12} parent=0 // pred_check
    _
  $region19: #{cvae_forward.12} parent=0 // pred_check_branch
    %19 = sbr.rel (0) target = $region21
  $region20: #{cvae_forward.12} parent=0 // pred_region
    _
  $region21: #{cvae_forward.12} parent=0 // pred_fallthru
    _
  %v21 = vld [vmem:[%s0] sm:$0xff]
  %v22 = vld [vmem:[%s0 + $0x8] sm:$0xf]
  %v23 = vld [vmem:[%s0 + $0xc] sm:$0xff]
  %v24 = vld [vmem:[%s0 + $0x14] sm:$0xf]
  %v25 = vld [vmem:[%s1] sm:$0xf]
  %v26 = vld [vmem:[%s1 + $0x4] sm:$0xf]
  %v27 = vld [vmem:[%s1 + $0x8] sm:$0xf]
  %v28 = vld [vmem:[%s1 + $0xc] sm:$0xf]
  %v29 = vld [vmem:[%s1 + $0x10] sm:$0xf]
  %v30 = vld [vmem:[%s1 + $0x14] sm:$0xf]
  %v31 = vld [vmem:[%s1 + $0x18] sm:$0xf]
  %v32 = vld [vmem:[%s1 + $0x1c] sm:$0xf]
  %v33 = vld [vmem:[%s1 + $0x20] sm:$0xf]
  %v34 = vld [vmem:[%s1 + $0x24] sm:$0xf]
  %v35 = vld [vmem:[%s1 + $0x28] sm:$0xf]
  %v36 = vld [vmem:[%s1 + $0x2c] sm:$0xf]
  %v37 = vld [vmem:[%s1 + $0x30] sm:$0xf]
  %v38 = vld [vmem:[%s1 + $0x34] sm:$0xf]
  %v39 = vld [vmem:[%s1 + $0x38] sm:$0xf]
  %v40 = vld [vmem:[%s1 + $0x3c] sm:$0xf]
  %v41 = vld [vmem:[%s1 + $0x40] sm:$0xf]
  %v42 = vld [vmem:[%s1 + $0x44] sm:$0xf]
  %v43 = vld [vmem:[%s1 + $0x48] sm:$0xf]
  %v44 = vld [vmem:[%s1 + $0x4c] sm:$0xf]
  %v45 = vld [vmem:[%s1 + $0x50] sm:$0xf]
  %v46 = vld [vmem:[%s1 + $0x54] sm:$0xf]
  %v47 = vld [vmem:[%s1 + $0x58] sm:$0xf]
  %v48 = vld [vmem:[%s1 + $0x5c] sm:$0xf]
  %v49 = vld [vmem:[%s1 + $0x60] sm:$0xf]
  %v50 = vld [vmem:[%s1 + $0x64] sm:$0xf]
  %v51 = vld [vmem:[%s1 + $0x68] sm:$0xf]
  %v52 = vld [vmem:[%s1 + $0x6c] sm:$0xf]
  %v53 = vld [vmem:[%s1 + $0x70] sm:$0xf]
  %v54 = vld [vmem:[%s1 + $0x74] sm:$0xf]
  %v55 = vld [vmem:[%s1 + $0x78] sm:$0xf]
  %v56 = vld [vmem:[%s1 + $0x7c] sm:$0xf]
  %v57 = vld [vmem:[%s1 + $0x80] sm:$0xf]
  %v58 = vld [vmem:[%s1 + $0x84] sm:$0xf]
  %v59 = vld [vmem:[%s1 + $0x88] sm:$0xf]
  %v60 = vld [vmem:[%s1 + $0x8c] sm:$0xf]
  %v61 = vld [vmem:[%s2] sm:$0xff]
  %v62 = vld [vmem:[%s2 + $0x8] sm:$0xff]
  %64 = vset.pattern.permute.xlu0 0
  %65 = vperm.xlu0 %64, %v61
  %v66 = vpop.permute.xlu0 %65
  %69 = vset.pattern.permute.xlu0 0
  %70 = vperm.xlu0 %69, %v62
  %v71 = vpop.permute.xlu0 %70
  %v77 = vunpack.c.l.b16 %v21
  %v78 = vunpack.c.h.b16 %v21
  %v79 = vunpack.c.l.b16 %v22
  %v80 = vunpack.c.l.b16 %v23
  %v81 = vunpack.c.h.b16 %v23
  %v82 = vunpack.c.l.b16 %v24
  %v83 = vpack.c.b16 %v80, %v77
  %v84 = vpack.c.b16 %v81, %v78
  %v85 = vpack.c.b16 %v82, %v79
  %v124 = vunpack.c.l.b16 %v25
  %v125 = vunpack.c.l.b16 %v26
  %v126 = vunpack.c.l.b16 %v27
  %v127 = vunpack.c.l.b16 %v28
  %v128 = vunpack.c.l.b16 %v29
  %v129 = vunpack.c.l.b16 %v30
  %v130 = vunpack.c.l.b16 %v31
  %v131 = vunpack.c.l.b16 %v32
  %v132 = vunpack.c.l.b16 %v33
  %v133 = vunpack.c.l.b16 %v34
  %v134 = vunpack.c.l.b16 %v35
  %v135 = vunpack.c.l.b16 %v36
  %v136 = vunpack.c.l.b16 %v37
  %v137 = vunpack.c.l.b16 %v38
  %v138 = vunpack.c.l.b16 %v39
  %v139 = vunpack.c.l.b16 %v40
  %v140 = vunpack.c.l.b16 %v41
  %v141 = vunpack.c.l.b16 %v42
  %v142 = vunpack.c.l.b16 %v43
  %v143 = vunpack.c.l.b16 %v44
  %v144 = vunpack.c.l.b16 %v45
  %v145 = vunpack.c.l.b16 %v46
  %v146 = vunpack.c.l.b16 %v47
  %v147 = vunpack.c.l.b16 %v48
  %v148 = vunpack.c.l.b16 %v49
  %v149 = vunpack.c.l.b16 %v50
  %v150 = vunpack.c.l.b16 %v51
  %v151 = vunpack.c.l.b16 %v52
  %v152 = vunpack.c.l.b16 %v53
  %v153 = vunpack.c.l.b16 %v54
  %v154 = vunpack.c.l.b16 %v55
  %v155 = vunpack.c.l.b16 %v56
  %v156 = vunpack.c.l.b16 %v57
  %v157 = vunpack.c.l.b16 %v58
  %v158 = vunpack.c.l.b16 %v59
  %v159 = vunpack.c.l.b16 %v60
  %v160 = vpack.c.b16 %v125, %v124
  %v161 = vpack.c.b16 %v127, %v126
  %v162 = vpack.c.b16 %v129, %v128
  %v163 = vpack.c.b16 %v131, %v130
  %v164 = vpack.c.b16 %v133, %v132
  %v165 = vpack.c.b16 %v135, %v134
  %v166 = vpack.c.b16 %v137, %v136
  %v167 = vpack.c.b16 %v139, %v138
  %v168 = vpack.c.b16 %v141, %v140
  %v169 = vpack.c.b16 %v143, %v142
  %v170 = vpack.c.b16 %v145, %v144
  %v171 = vpack.c.b16 %v147, %v146
  %v172 = vpack.c.b16 %v149, %v148
  %v173 = vpack.c.b16 %v151, %v150
  %v174 = vpack.c.b16 %v153, %v152
  %v175 = vpack.c.b16 %v155, %v154
  %v176 = vpack.c.b16 %v157, %v156
  %v177 = vpack.c.b16 %v159, %v158
  %vm196 = vcmask 261120
  %v198 = vsel %vm196, %v85, 0
  %200 = vmatpush.bf16.msra.mxu0 %v167
  %201 = vmatpush.bf16.msra.mxu0 %v166
  %202 = vmatpush.bf16.msra.mxu0 %v165
  %203 = vmatpush.bf16.msra.mxu0 %v164
  %204 = vmatpush.bf16.msra.mxu0 %v163
  %205 = vmatpush.bf16.msra.mxu0 %v162
  %206 = vmatpush.bf16.msra.mxu0 %v161
  %207 = vmatpush.bf16.msra.mxu0 %v160
  %208 = vmatmul.bf16.gmra.mxu0 %v83
  %v209 = vpop.f32.mrf.mxu0
  %v210 = vadd.f32 %v66, %v209
  %v211 = vpop.f32.mrf.mxu0
  %v212 = vadd.f32 %v71, %v211
  %213 = vdwg.mxu0
  %214 = vmatpush.bf16.msra.mxu0 %v175
  %215 = vmatpush.bf16.msra.mxu0 %v174
  %216 = vmatpush.bf16.msra.mxu0 %v173
  %217 = vmatpush.bf16.msra.mxu0 %v172
  %218 = vmatpush.bf16.msra.mxu0 %v171
  %219 = vmatpush.bf16.msra.mxu0 %v170
  %220 = vmatpush.bf16.msra.mxu0 %v169
  %221 = vmatpush.bf16.msra.mxu0 %v168
  %222 = vmatmul.bf16.gmra.mxu0 %v84
  %v223 = vpop.f32.mrf.mxu0
  %v224 = vadd.f32 %v210, %v223
  %v225 = vpop.f32.mrf.mxu0
  %v226 = vadd.f32 %v212, %v225
  %227 = vdwg.mxu0
  %228 = vmatpush.bf16.msra.mxu0 0
  %229 = vmatpush.bf16.msra.mxu0 0
  %230 = vmatpush.bf16.msra.mxu0 0
  %231 = vmatpush.bf16.msra.mxu0 0
  %232 = vmatpush.bf16.msra.mxu0 0
  %233 = vmatpush.bf16.msra.mxu0 0
  %234 = vmatpush.bf16.msra.mxu0 %v177
  %235 = vmatpush.bf16.msra.mxu0 %v176
  %236 = vmatmul.bf16.gmra.mxu0 %v198
  %v237 = vpop.f32.mrf.mxu0
  %v238 = vadd.f32 %v224, %v237
  %v239 = vpop.f32.mrf.mxu0
  %v240 = vadd.f32 %v226, %v239
  %241 = vdwg.mxu0
  %v242 = vsel %vm196, %v238, 0.0
  %243 = vadd.xlane.f32.xlu0 %v242
  %v244 = vpop.xlane.xlu0 %243
  %v245 = vsel %vm196, %v240, 0.0
  %246 = vadd.xlane.f32.xlu0 %v245
  %v247 = vpop.xlane.xlu0 %246
  %v248 = vmul.f32 %v238, %v238
  %v249 = vmul.f32 %v240, %v240
  %v250 = vsel %vm196, %v248, 0.0
  %251 = vadd.xlane.f32.xlu0 %v250
  %v252 = vpop.xlane.xlu0 %251
  %v253 = vsel %vm196, %v249, 0.0
  %254 = vadd.xlane.f32.xlu0 %v253
  %v255 = vpop.xlane.xlu0 %254
  %v256 = vmul.f32 %v244, 0.03125
  %v257 = vmul.f32 %v247, 0.03125
  %v258 = vmul.f32 %v252, 0.03125
  %v259 = vmul.f32 %v255, 0.03125
  %v260 = vmul.f32 %v256, %v256
  %v261 = vmul.f32 %v257, %v257
  %v262 = vsub.f32 %v258, %v260
  %v263 = vsub.f32 %v259, %v261
  %v264 = vsub.f32 %v238, %v256
  %v265 = vsub.f32 %v240, %v257
  %v266 = vadd.f32 %v262, 1e-05
  %v267 = vadd.f32 %v263, 1e-05
  %v268 = vrsqrt.pop %v266
  %v269 = vmul.f32 %v268, %v266
  %v270 = vmul.f32 %v269, %v268
  %v271 = vmul.f32 0.5, %v270
  %v272 = vsub.f32 1.5, %v271
  %v273 = vmul.f32 %v268, %v272
  %vm274 = vweird.f32 %v266
  %vm275 = vweird.f32 %v268
  %vm276 = vmor %vm274, %vm275
  %v277 = vsel %vm276, %v268, %v273
  %v278 = vrsqrt.pop %v267
  %v279 = vmul.f32 %v278, %v267
  %v280 = vmul.f32 %v279, %v278
  %v281 = vmul.f32 0.5, %v280
  %v282 = vsub.f32 1.5, %v281
  %v283 = vmul.f32 %v278, %v282
  %vm284 = vweird.f32 %v267
  %vm285 = vweird.f32 %v278
  %vm286 = vmor %vm284, %vm285
  %v287 = vsel %vm286, %v278, %v283
  %v288 = vmul.f32 %v264, %v277
  %v289 = vmul.f32 %v265, %v287
  %v290 = vld [vmem:[%s3] sm:$0xff]
  %v291 = vld [vmem:[%s3 + $0x8] sm:$0xff]
  %293 = vset.pattern.permute.xlu0 0
  %294 = vperm.xlu0 %293, %v290
  %v295 = vpop.permute.xlu0 %294
  %298 = vset.pattern.permute.xlu0 0
  %299 = vperm.xlu0 %298, %v291
  %v300 = vpop.permute.xlu0 %299
  %v302 = vmul.f32 %v288, %v295
  %v303 = vmul.f32 %v289, %v300
  %v304 = vld [vmem:[%s4] sm:$0xff]
  %v305 = vld [vmem:[%s4 + $0x8] sm:$0xff]
  %307 = vset.pattern.permute.xlu0 0
  %308 = vperm.xlu0 %307, %v304
  %v309 = vpop.permute.xlu0 %308
  %312 = vset.pattern.permute.xlu0 0
  %313 = vperm.xlu0 %312, %v305
  %v314 = vpop.permute.xlu0 %313
  %v316 = vadd.f32 %v302, %v309
  %v317 = vadd.f32 %v303, %v314
  %vm318 = vcmp.ge.f32.partialorder %v316, 0.0
  %vm319 = vcmp.ge.f32.partialorder %v317, 0.0
  %v320 = vmul.f32 %v316, 0.01
  %v321 = vmul.f32 %v317, 0.01
  %v322 = vsel %vm318, %v316, %v320
  %v323 = vsel %vm319, %v317, %v321
  %324 = vst.msk [vmem:[%s5] sm:$0xff] %vm196, %v322
  %325 = vst.msk [vmem:[%s5 + $0x8] sm:$0xff] %vm196, %v323
  // Predicated region
  $region22: #{cvae_forward.12} parent=0 // pred_check
    _
  $region23: #{cvae_forward.12} parent=0 // pred_check_branch
    %327 = sbr.rel (0) target = $region25
  $region24: #{cvae_forward.12} parent=0 // pred_region
    _
  $region25: #{cvae_forward.12} parent=0 // pred_fallthru
    _
  // Predicated region
  $region26: #{cvae_forward.12} parent=0 // pred_check
    _
  $region27: #{cvae_forward.12} parent=0 // pred_check_branch
    %329 = sbr.rel (0) target = $region29
  $region28: #{cvae_forward.12} parent=0 // pred_region
    _
  $region29: #{cvae_forward.12} parent=0 // pred_fallthru
    _

// kernel: cvae_forward.13
$region0: #{cvae_forward.13}
  #allocation0 [shape = 'u32[]', space=smem, size = 0x4, offset = 0x4, fixed_abs, tag = 'smem constant byte address 0x4 - core index']
  #allocation1 [shape = 'u32[72,128]{1,0:T(1,128)}', space=vmem, size = 0x9000, scoped, tag = 'internal scratch']
  %s0 = inlined_call_operand.vmem [shape: bf16[16,144], index: 0, kind: input, shape index: {}]
  %s1 = inlined_call_operand.vmem [shape: bf16[144,8], index: 1, kind: input, shape index: {}]
  %s2 = inlined_call_operand.vmem [shape: f32[16,1], index: 2, kind: input, shape index: {}]
  %s3 = inlined_call_operand.vmem [shape: f32[16,1], index: 3, kind: input, shape index: {}]
  %s4 = inlined_call_operand.vmem [shape: f32[16,1], index: 4, kind: input, shape index: {}]
  %s5 = inlined_call_operand.vmem [shape: f32[16,8], index: 5, kind: output, shape index: {}]
  %s6 = sld [smem:[#allocation0]]
  $region30: #{cvae_forward.13} parent=0
    _
  %s8 = ssub.s32 1, %s6
  %s9 = scalar_select 0, %s8, %s6
  // Predicated region
  $region2: #{cvae_forward.13} parent=0 // pred_check
    _
  $region3: #{cvae_forward.13} parent=0 // pred_check_branch
    %11 = sbr.rel (0) target = $region5
  $region4: #{cvae_forward.13} parent=0 // pred_region
    _
  $region5: #{cvae_forward.13} parent=0 // pred_fallthru
    _
  // Predicated region
  $region6: #{cvae_forward.13} parent=0 // pred_check
    _
  $region7: #{cvae_forward.13} parent=0 // pred_check_branch
    %13 = sbr.rel (0) target = $region9
  $region8: #{cvae_forward.13} parent=0 // pred_region
    _
  $region9: #{cvae_forward.13} parent=0 // pred_fallthru
    _
  // Predicated region
  $region10: #{cvae_forward.13} parent=0 // pred_check
    _
  $region11: #{cvae_forward.13} parent=0 // pred_check_branch
    %15 = sbr.rel (0) target = $region13
  $region12: #{cvae_forward.13} parent=0 // pred_region
    _
  $region13: #{cvae_forward.13} parent=0 // pred_fallthru
    _
  // Predicated region
  $region14: #{cvae_forward.13} parent=0 // pred_check
    _
  $region15: #{cvae_forward.13} parent=0 // pred_check_branch
    %17 = sbr.rel (0) target = $region17
  $region16: #{cvae_forward.13} parent=0 // pred_region
    _
  $region17: #{cvae_forward.13} parent=0 // pred_fallthru
    _
  // Predicated region
  $region18: #{cvae_forward.13} parent=0 // pred_check
    _
  $region19: #{cvae_forward.13} parent=0 // pred_check_branch
    %19 = sbr.rel (0) target = $region21
  $region20: #{cvae_forward.13} parent=0 // pred_region
    _
  $region21: #{cvae_forward.13} parent=0 // pred_fallthru
    _
  %v21 = vld [vmem:[%s0] sm:$0xff]
  %v22 = vld [vmem:[%s0 + $0x8] sm:$0xff]
  %v23 = vld [vmem:[%s1] sm:$0xf]
  %v24 = vld [vmem:[%s1 + $0x4] sm:$0xf]
  %v25 = vld [vmem:[%s1 + $0x8] sm:$0xf]
  %v26 = vld [vmem:[%s1 + $0xc] sm:$0xf]
  %v27 = vld [vmem:[%s1 + $0x10] sm:$0xf]
  %v28 = vld [vmem:[%s1 + $0x14] sm:$0xf]
  %v29 = vld [vmem:[%s1 + $0x18] sm:$0xf]
  %v30 = vld [vmem:[%s1 + $0x1c] sm:$0xf]
  %v31 = vld [vmem:[%s1 + $0x20] sm:$0xf]
  %v32 = vld [vmem:[%s1 + $0x24] sm:$0xf]
  %v33 = vld [vmem:[%s1 + $0x28] sm:$0xf]
  %v34 = vld [vmem:[%s1 + $0x2c] sm:$0xf]
  %v35 = vld [vmem:[%s1 + $0x30] sm:$0xf]
  %v36 = vld [vmem:[%s1 + $0x34] sm:$0xf]
  %v37 = vld [vmem:[%s1 + $0x38] sm:$0xf]
  %v38 = vld [vmem:[%s1 + $0x3c] sm:$0xf]
  %v39 = vld [vmem:[%s1 + $0x40] sm:$0xf]
  %v40 = vld [vmem:[%s1 + $0x44] sm:$0xf]
  %v41 = vld [vmem:[%s2] sm:$0xff]
  %v42 = vld [vmem:[%s2 + $0x8] sm:$0xff]
  %44 = vset.pattern.permute.xlu0 0
  %45 = vperm.xlu0 %44, %v41
  %v46 = vpop.permute.xlu0 %45
  %49 = vset.pattern.permute.xlu0 0
  %50 = vperm.xlu0 %49, %v42
  %v51 = vpop.permute.xlu0 %50
  %v55 = vunpack.c.l.b16 %v21
  %v56 = vunpack.c.h.b16 %v21
  %v57 = vunpack.c.l.b16 %v22
  %v58 = vunpack.c.h.b16 %v22
  %v59 = vpack.c.b16 %v57, %v55
  %v60 = vpack.c.b16 %v58, %v56
  %v80 = vunpack.c.l.b16 %v23
  %v81 = vunpack.c.l.b16 %v24
  %v82 = vunpack.c.l.b16 %v25
  %v83 = vunpack.c.l.b16 %v26
  %v84 = vunpack.c.l.b16 %v27
  %v85 = vunpack.c.l.b16 %v28
  %v86 = vunpack.c.l.b16 %v29
  %v87 = vunpack.c.l.b16 %v30
  %v88 = vunpack.c.l.b16 %v31
  %v89 = vunpack.c.l.b16 %v32
  %v90 = vunpack.c.l.b16 %v33
  %v91 = vunpack.c.l.b16 %v34
  %v92 = vunpack.c.l.b16 %v35
  %v93 = vunpack.c.l.b16 %v36
  %v94 = vunpack.c.l.b16 %v37
  %v95 = vunpack.c.l.b16 %v38
  %v96 = vunpack.c.l.b16 %v39
  %v97 = vunpack.c.l.b16 %v40
  %v98 = vpack.c.b16 %v81, %v80
  %v99 = vpack.c.b16 %v83, %v82
  %v100 = vpack.c.b16 %v85, %v84
  %v101 = vpack.c.b16 %v87, %v86
  %v102 = vpack.c.b16 %v89, %v88
  %v103 = vpack.c.b16 %v91, %v90
  %v104 = vpack.c.b16 %v93, %v92
  %v105 = vpack.c.b16 %v95, %v94
  %v106 = vpack.c.b16 %v97, %v96
  %vm116 = vcmask 130048
  %v118 = vsel %vm116, %v60, 0
  %120 = vmatpush.bf16.msra.mxu0 %v105
  %121 = vmatpush.bf16.msra.mxu0 %v104
  %122 = vmatpush.bf16.msra.mxu0 %v103
  %123 = vmatpush.bf16.msra.mxu0 %v102
  %124 = vmatpush.bf16.msra.mxu0 %v101
  %125 = vmatpush.bf16.msra.mxu0 %v100
  %126 = vmatpush.bf16.msra.mxu0 %v99
  %127 = vmatpush.bf16.msra.mxu0 %v98
  %128 = vmatmul.bf16.gmra.mxu0 %v59
  %v129 = vpop.f32.mrf.mxu0
  %v130 = vadd.f32 %v46, %v129
  %v131 = vpop.f32.mrf.mxu0
  %v132 = vadd.f32 %v51, %v131
  %133 = vdwg.mxu0
  %134 = vmatpush.bf16.msra.mxu0 0
  %135 = vmatpush.bf16.msra.mxu0 0
  %136 = vmatpush.bf16.msra.mxu0 0
  %137 = vmatpush.bf16.msra.mxu0 0
  %138 = vmatpush.bf16.msra.mxu0 0
  %139 = vmatpush.bf16.msra.mxu0 0
  %140 = vmatpush.bf16.msra.mxu0 0
  %141 = vmatpush.bf16.msra.mxu0 %v106
  %142 = vmatmul.bf16.gmra.mxu0 %v118
  %v143 = vpop.f32.mrf.mxu0
  %v144 = vadd.f32 %v130, %v143
  %v145 = vpop.f32.mrf.mxu0
  %v146 = vadd.f32 %v132, %v145
  %147 = vdwg.mxu0
  %vm148 = vcmask 64512
  %v149 = vsel %vm148, %v144, 0.0
  %150 = vadd.xlane.f32.xlu0 %v149
  %v151 = vpop.xlane.xlu0 %150
  %v152 = vsel %vm148, %v146, 0.0
  %153 = vadd.xlane.f32.xlu0 %v152
  %v154 = vpop.xlane.xlu0 %153
  %v155 = vmul.f32 %v144, %v144
  %v156 = vmul.f32 %v146, %v146
  %v157 = vsel %vm148, %v155, 0.0
  %158 = vadd.xlane.f32.xlu0 %v157
  %v159 = vpop.xlane.xlu0 %158
  %v160 = vsel %vm148, %v156, 0.0
  %161 = vadd.xlane.f32.xlu0 %v160
  %v162 = vpop.xlane.xlu0 %161
  %v163 = vmul.f32 %v151, 0.125
  %v164 = vmul.f32 %v154, 0.125
  %v165 = vmul.f32 %v159, 0.125
  %v166 = vmul.f32 %v162, 0.125
  %v167 = vmul.f32 %v163, %v163
  %v168 = vmul.f32 %v164, %v164
  %v169 = vsub.f32 %v165, %v167
  %v170 = vsub.f32 %v166, %v168
  %v171 = vsub.f32 %v144, %v163
  %v172 = vsub.f32 %v146, %v164
  %v173 = vadd.f32 %v169, 1e-05
  %v174 = vadd.f32 %v170, 1e-05
  %v175 = vrsqrt.pop %v173
  %v176 = vmul.f32 %v175, %v173
  %v177 = vmul.f32 %v176, %v175
  %v178 = vmul.f32 0.5, %v177
  %v179 = vsub.f32 1.5, %v178
  %v180 = vmul.f32 %v175, %v179
  %vm181 = vweird.f32 %v173
  %vm182 = vweird.f32 %v175
  %vm183 = vmor %vm181, %vm182
  %v184 = vsel %vm183, %v175, %v180
  %v185 = vrsqrt.pop %v174
  %v186 = vmul.f32 %v185, %v174
  %v187 = vmul.f32 %v186, %v185
  %v188 = vmul.f32 0.5, %v187
  %v189 = vsub.f32 1.5, %v188
  %v190 = vmul.f32 %v185, %v189
  %vm191 = vweird.f32 %v174
  %vm192 = vweird.f32 %v185
  %vm193 = vmor %vm191, %vm192
  %v194 = vsel %vm193, %v185, %v190
  %v195 = vmul.f32 %v171, %v184
  %v196 = vmul.f32 %v172, %v194
  %v197 = vld [vmem:[%s3] sm:$0xff]
  %v198 = vld [vmem:[%s3 + $0x8] sm:$0xff]
  %200 = vset.pattern.permute.xlu0 0
  %201 = vperm.xlu0 %200, %v197
  %v202 = vpop.permute.xlu0 %201
  %205 = vset.pattern.permute.xlu0 0
  %206 = vperm.xlu0 %205, %v198
  %v207 = vpop.permute.xlu0 %206
  %v209 = vmul.f32 %v195, %v202
  %v210 = vmul.f32 %v196, %v207
  %v211 = vld [vmem:[%s4] sm:$0xff]
  %v212 = vld [vmem:[%s4 + $0x8] sm:$0xff]
  %214 = vset.pattern.permute.xlu0 0
  %215 = vperm.xlu0 %214, %v211
  %v216 = vpop.permute.xlu0 %215
  %219 = vset.pattern.permute.xlu0 0
  %220 = vperm.xlu0 %219, %v212
  %v221 = vpop.permute.xlu0 %220
  %v223 = vadd.f32 %v209, %v216
  %v224 = vadd.f32 %v210, %v221
  %vm225 = vcmp.ge.f32.partialorder %v223, 0.0
  %vm226 = vcmp.ge.f32.partialorder %v224, 0.0
  %v227 = vmul.f32 %v223, 0.01
  %v228 = vmul.f32 %v224, 0.01
  %v229 = vsel %vm225, %v223, %v227
  %v230 = vsel %vm226, %v224, %v228
  %231 = vst.msk [vmem:[%s5] sm:$0xff] %vm148, %v229
  %232 = vst.msk [vmem:[%s5 + $0x8] sm:$0xff] %vm148, %v230
  // Predicated region
  $region22: #{cvae_forward.13} parent=0 // pred_check
    _
  $region23: #{cvae_forward.13} parent=0 // pred_check_branch
    %234 = sbr.rel (0) target = $region25
  $region24: #{cvae_forward.13} parent=0 // pred_region
    _
  $region25: #{cvae_forward.13} parent=0 // pred_fallthru
    _
  // Predicated region
  $region26: #{cvae_forward.13} parent=0 // pred_check
    _
  $region27: #{cvae_forward.13} parent=0 // pred_check_branch
    %236 = sbr.rel (0) target = $region29
  $region28: #{cvae_forward.13} parent=0 // pred_region
    _
  $region29: #{cvae_forward.13} parent=0 // pred_fallthru
    _

// kernel: cvae_forward.14
$region0: #{cvae_forward.14}
  #allocation0 [shape = 'u32[]', space=smem, size = 0x4, offset = 0x4, fixed_abs, tag = 'smem constant byte address 0x4 - core index']
  #allocation1 [shape = 'u32[72,128]{1,0:T(1,128)}', space=vmem, size = 0x9000, scoped, tag = 'internal scratch']
  %s0 = inlined_call_operand.vmem [shape: bf16[8,144], index: 0, kind: input, shape index: {}]
  %s1 = inlined_call_operand.vmem [shape: bf16[144,2], index: 1, kind: input, shape index: {}]
  %s2 = inlined_call_operand.vmem [shape: f32[8,1], index: 2, kind: input, shape index: {}]
  %s3 = inlined_call_operand.vmem [shape: f32[8,1], index: 3, kind: input, shape index: {}]
  %s4 = inlined_call_operand.vmem [shape: f32[8,1], index: 4, kind: input, shape index: {}]
  %s5 = inlined_call_operand.vmem [shape: f32[8,2], index: 5, kind: output, shape index: {}]
  %s6 = sld [smem:[#allocation0]]
  $region30: #{cvae_forward.14} parent=0
    _
  %s8 = ssub.s32 1, %s6
  %s9 = scalar_select 0, %s8, %s6
  // Predicated region
  $region2: #{cvae_forward.14} parent=0 // pred_check
    _
  $region3: #{cvae_forward.14} parent=0 // pred_check_branch
    %11 = sbr.rel (0) target = $region5
  $region4: #{cvae_forward.14} parent=0 // pred_region
    _
  $region5: #{cvae_forward.14} parent=0 // pred_fallthru
    _
  // Predicated region
  $region6: #{cvae_forward.14} parent=0 // pred_check
    _
  $region7: #{cvae_forward.14} parent=0 // pred_check_branch
    %13 = sbr.rel (0) target = $region9
  $region8: #{cvae_forward.14} parent=0 // pred_region
    _
  $region9: #{cvae_forward.14} parent=0 // pred_fallthru
    _
  // Predicated region
  $region10: #{cvae_forward.14} parent=0 // pred_check
    _
  $region11: #{cvae_forward.14} parent=0 // pred_check_branch
    %15 = sbr.rel (0) target = $region13
  $region12: #{cvae_forward.14} parent=0 // pred_region
    _
  $region13: #{cvae_forward.14} parent=0 // pred_fallthru
    _
  // Predicated region
  $region14: #{cvae_forward.14} parent=0 // pred_check
    _
  $region15: #{cvae_forward.14} parent=0 // pred_check_branch
    %17 = sbr.rel (0) target = $region17
  $region16: #{cvae_forward.14} parent=0 // pred_region
    _
  $region17: #{cvae_forward.14} parent=0 // pred_fallthru
    _
  // Predicated region
  $region18: #{cvae_forward.14} parent=0 // pred_check
    _
  $region19: #{cvae_forward.14} parent=0 // pred_check_branch
    %19 = sbr.rel (0) target = $region21
  $region20: #{cvae_forward.14} parent=0 // pred_region
    _
  $region21: #{cvae_forward.14} parent=0 // pred_fallthru
    _
  %v21 = vld [vmem:[%s0] sm:$0xff]
  %v22 = vld [vmem:[%s1] sm:$0xf]
  %v23 = vld [vmem:[%s1 + $0x4] sm:$0xf]
  %v24 = vld [vmem:[%s1 + $0x8] sm:$0xf]
  %v25 = vld [vmem:[%s1 + $0xc] sm:$0xf]
  %v26 = vld [vmem:[%s1 + $0x10] sm:$0xf]
  %v27 = vld [vmem:[%s1 + $0x14] sm:$0xf]
  %v28 = vld [vmem:[%s1 + $0x18] sm:$0xf]
  %v29 = vld [vmem:[%s1 + $0x1c] sm:$0xf]
  %v30 = vld [vmem:[%s1 + $0x20] sm:$0xf]
  %v31 = vld [vmem:[%s1 + $0x24] sm:$0xf]
  %v32 = vld [vmem:[%s1 + $0x28] sm:$0xf]
  %v33 = vld [vmem:[%s1 + $0x2c] sm:$0xf]
  %v34 = vld [vmem:[%s1 + $0x30] sm:$0xf]
  %v35 = vld [vmem:[%s1 + $0x34] sm:$0xf]
  %v36 = vld [vmem:[%s1 + $0x38] sm:$0xf]
  %v37 = vld [vmem:[%s1 + $0x3c] sm:$0xf]
  %v38 = vld [vmem:[%s1 + $0x40] sm:$0xf]
  %v39 = vld [vmem:[%s1 + $0x44] sm:$0xf]
  %v40 = vld [vmem:[%s2] sm:$0xff]
  %42 = vset.pattern.permute.xlu0 0
  %43 = vperm.xlu0 %42, %v40
  %v44 = vpop.permute.xlu0 %43
  %v47 = vunpack.c.l.b16 %v21
  %v48 = vunpack.c.h.b16 %v21
  %v49 = vpack.c.b16 %v47, %v47
  %v50 = vpack.c.b16 %v48, %v48
  %v70 = vunpack.c.l.b16 %v22
  %v71 = vunpack.c.l.b16 %v23
  %v72 = vunpack.c.l.b16 %v24
  %v73 = vunpack.c.l.b16 %v25
  %v74 = vunpack.c.l.b16 %v26
  %v75 = vunpack.c.l.b16 %v27
  %v76 = vunpack.c.l.b16 %v28
  %v77 = vunpack.c.l.b16 %v29
  %v78 = vunpack.c.l.b16 %v30
  %v79 = vunpack.c.l.b16 %v31
  %v80 = vunpack.c.l.b16 %v32
  %v81 = vunpack.c.l.b16 %v33
  %v82 = vunpack.c.l.b16 %v34
  %v83 = vunpack.c.l.b16 %v35
  %v84 = vunpack.c.l.b16 %v36
  %v85 = vunpack.c.l.b16 %v37
  %v86 = vunpack.c.l.b16 %v38
  %v87 = vunpack.c.l.b16 %v39
  %v88 = vpack.c.b16 %v71, %v70
  %v89 = vpack.c.b16 %v73, %v72
  %v90 = vpack.c.b16 %v75, %v74
  %v91 = vpack.c.b16 %v77, %v76
  %v92 = vpack.c.b16 %v79, %v78
  %v93 = vpack.c.b16 %v81, %v80
  %v94 = vpack.c.b16 %v83, %v82
  %v95 = vpack.c.b16 %v85, %v84
  %v96 = vpack.c.b16 %v87, %v86
  %vm106 = vcmask 130048
  %v108 = vsel %vm106, %v50, 0
  %110 = vmatpush.bf16.msra.mxu0 %v95
  %111 = vmatpush.bf16.msra.mxu0 %v94
  %112 = vmatpush.bf16.msra.mxu0 %v93
  %113 = vmatpush.bf16.msra.mxu0 %v92
  %114 = vmatpush.bf16.msra.mxu0 %v91
  %115 = vmatpush.bf16.msra.mxu0 %v90
  %116 = vmatpush.bf16.msra.mxu0 %v89
  %117 = vmatpush.bf16.msra.mxu0 %v88
  %118 = vmatmul.bf16.gmra.mxu0 %v49
  %v119 = vpop.f32.mrf.mxu0
  %v120 = vadd.f32 %v44, %v119
  %v121 = vpop.f32.mrf.mxu0
  %122 = vdwg.mxu0
  %123 = vmatpush.bf16.msra.mxu0 0
  %124 = vmatpush.bf16.msra.mxu0 0
  %125 = vmatpush.bf16.msra.mxu0 0
  %126 = vmatpush.bf16.msra.mxu0 0
  %127 = vmatpush.bf16.msra.mxu0 0
  %128 = vmatpush.bf16.msra.mxu0 0
  %129 = vmatpush.bf16.msra.mxu0 0
  %130 = vmatpush.bf16.msra.mxu0 %v96
  %131 = vmatmul.bf16.gmra.mxu0 %v108
  %v132 = vpop.f32.mrf.mxu0
  %v133 = vadd.f32 %v120, %v132
  %v134 = vpop.f32.mrf.mxu0
  %135 = vdwg.mxu0
  %vm136 = vcmask 15360
  %v137 = vsel %vm136, %v133, 0.0
  %138 = vadd.xlane.f32.xlu0 %v137
  %v139 = vpop.xlane.xlu0 %138
  %v140 = vmul.f32 %v133, %v133
  %v141 = vsel %vm136, %v140, 0.0
  %142 = vadd.xlane.f32.xlu0 %v141
  %v143 = vpop.xlane.xlu0 %142
  %v144 = vmul.f32 %v139, 0.5
  %v145 = vmul.f32 %v143, 0.5
  %v146 = vmul.f32 %v144, %v144
  %v147 = vsub.f32 %v145, %v146
  %v148 = vsub.f32 %v133, %v144
  %v149 = vadd.f32 %v147, 1e-05
  %v150 = vrsqrt.pop %v149
  %v151 = vmul.f32 %v150, %v149
  %v152 = vmul.f32 %v151, %v150
  %v153 = vmul.f32 0.5, %v152
  %v154 = vsub.f32 1.5, %v153
  %v155 = vmul.f32 %v150, %v154
  %vm156 = vweird.f32 %v149
  %vm157 = vweird.f32 %v150
  %vm158 = vmor %vm156, %vm157
  %v159 = vsel %vm158, %v150, %v155
  %v160 = vmul.f32 %v148, %v159
  %v161 = vld [vmem:[%s3] sm:$0xff]
  %163 = vset.pattern.permute.xlu0 0
  %164 = vperm.xlu0 %163, %v161
  %v165 = vpop.permute.xlu0 %164
  %v167 = vmul.f32 %v160, %v165
  %v168 = vld [vmem:[%s4] sm:$0xff]
  %170 = vset.pattern.permute.xlu0 0
  %171 = vperm.xlu0 %170, %v168
  %v172 = vpop.permute.xlu0 %171
  %v174 = vadd.f32 %v167, %v172
  %vm175 = vcmp.ge.f32.partialorder %v174, 0.0
  %v176 = vmul.f32 %v174, 0.01
  %v177 = vsel %vm175, %v174, %v176
  %178 = vst.msk [vmem:[%s5] sm:$0xff] %vm136, %v177
  // Predicated region
  $region22: #{cvae_forward.14} parent=0 // pred_check
    _
  $region23: #{cvae_forward.14} parent=0 // pred_check_branch
    %180 = sbr.rel (0) target = $region25
  $region24: #{cvae_forward.14} parent=0 // pred_region
    _
  $region25: #{cvae_forward.14} parent=0 // pred_fallthru
    _
  // Predicated region
  $region26: #{cvae_forward.14} parent=0 // pred_check
    _
  $region27: #{cvae_forward.14} parent=0 // pred_check_branch
    %182 = sbr.rel (0) target = $region29
  $region28: #{cvae_forward.14} parent=0 // pred_region
    _
  $region29: #{cvae_forward.14} parent=0 // pred_fallthru
    _

// kernel: cvae_forward.15
$region0: #{cvae_forward.15}
  #allocation0 [shape = 'u32[]', space=smem, size = 0x4, offset = 0x4, fixed_abs, tag = 'smem constant byte address 0x4 - core index']
  #allocation1 [shape = 'u32[72,128]{1,0:T(1,128)}', space=vmem, size = 0x9000, scoped, tag = 'internal scratch']
  %s0 = inlined_call_operand.vmem [shape: bf16[32,8], index: 0, kind: input, shape index: {}]
  %s1 = inlined_call_operand.vmem [shape: bf16[8,2], index: 1, kind: input, shape index: {}]
  %s2 = inlined_call_operand.vmem [shape: f32[32,1], index: 2, kind: input, shape index: {}]
  %s3 = inlined_call_operand.vmem [shape: f32[32,2], index: 3, kind: output, shape index: {}]
  %s4 = sld [smem:[#allocation0]]
  $region22: #{cvae_forward.15} parent=0
    _
  %s6 = ssub.s32 1, %s4
  %s7 = scalar_select 0, %s6, %s4
  // Predicated region
  $region2: #{cvae_forward.15} parent=0 // pred_check
    _
  $region3: #{cvae_forward.15} parent=0 // pred_check_branch
    %9 = sbr.rel (0) target = $region5
  $region4: #{cvae_forward.15} parent=0 // pred_region
    _
  $region5: #{cvae_forward.15} parent=0 // pred_fallthru
    _
  // Predicated region
  $region6: #{cvae_forward.15} parent=0 // pred_check
    _
  $region7: #{cvae_forward.15} parent=0 // pred_check_branch
    %11 = sbr.rel (0) target = $region9
  $region8: #{cvae_forward.15} parent=0 // pred_region
    _
  $region9: #{cvae_forward.15} parent=0 // pred_fallthru
    _
  // Predicated region
  $region10: #{cvae_forward.15} parent=0 // pred_check
    _
  $region11: #{cvae_forward.15} parent=0 // pred_check_branch
    %13 = sbr.rel (0) target = $region13
  $region12: #{cvae_forward.15} parent=0 // pred_region
    _
  $region13: #{cvae_forward.15} parent=0 // pred_fallthru
    _
  %v15 = vld [vmem:[%s0] sm:$0xf]
  %v16 = vld [vmem:[%s0 + $0x4] sm:$0xf]
  %v17 = vld [vmem:[%s0 + $0x8] sm:$0xf]
  %v18 = vld [vmem:[%s0 + $0xc] sm:$0xf]
  %v19 = vld [vmem:[%s1] sm:$0xf]
  %v20 = vld [vmem:[%s2] sm:$0xff]
  %v21 = vld [vmem:[%s2 + $0x8] sm:$0xff]
  %v22 = vld [vmem:[%s2 + $0x10] sm:$0xff]
  %v23 = vld [vmem:[%s2 + $0x18] sm:$0xff]
  %25 = vset.pattern.permute.xlu0 0
  %26 = vperm.xlu0 %25, %v20
  %v27 = vpop.permute.xlu0 %26
  %30 = vset.pattern.permute.xlu0 0
  %31 = vperm.xlu0 %30, %v21
  %v32 = vpop.permute.xlu0 %31
  %35 = vset.pattern.permute.xlu0 0
  %36 = vperm.xlu0 %35, %v22
  %v37 = vpop.permute.xlu0 %36
  %40 = vset.pattern.permute.xlu0 0
  %41 = vperm.xlu0 %40, %v23
  %v42 = vpop.permute.xlu0 %41
  %v48 = vunpack.c.l.b16 %v15
  %v49 = vunpack.c.l.b16 %v16
  %v50 = vunpack.c.l.b16 %v17
  %v51 = vunpack.c.l.b16 %v18
  %v52 = vpack.c.b16 %v49, %v48
  %v53 = vpack.c.b16 %v51, %v50
  %vm54 = vcmask 64512
  %v56 = vsel %vm54, %v52, 0
  %v59 = vsel %vm54, %v53, 0
  %vm61 = vcmask 1043456
  %v63 = vsel %vm61, %v19, 0
  %65 = vmatpush.bf16.msra.mxu0 0
  %66 = vmatpush.bf16.msra.mxu0 0
  %67 = vmatpush.bf16.msra.mxu0 0
  %68 = vmatpush.bf16.msra.mxu0 0
  %69 = vmatpush.bf16.msra.mxu0 0
  %70 = vmatpush.bf16.msra.mxu0 0
  %71 = vmatpush.bf16.msra.mxu0 0
  %72 = vmatpush.bf16.msra.mxu0 %v63
  %73 = vmatmul.bf16.gmra.mxu0 %v56
  %v74 = vpop.f32.mrf.mxu0
  %v75 = vadd.f32 %v27, %v74
  %v76 = vpop.f32.mrf.mxu0
  %v77 = vadd.f32 %v32, %v76
  %78 = vmatmul.bf16.gmra.mxu0 %v59
  %v79 = vpop.f32.mrf.mxu0
  %v80 = vadd.f32 %v37, %v79
  %v81 = vpop.f32.mrf.mxu0
  %v82 = vadd.f32 %v42, %v81
  %83 = vdwg.mxu0
  %vm84 = vcmask 15360
  %85 = vst.msk [vmem:[%s3] sm:$0xff] %vm84, %v75
  %86 = vst.msk [vmem:[%s3 + $0x8] sm:$0xff] %vm84, %v77
  %87 = vst.msk [vmem:[%s3 + $0x10] sm:$0xff] %vm84, %v80
  %88 = vst.msk [vmem:[%s3 + $0x18] sm:$0xff] %vm84, %v82
  // Predicated region
  $region14: #{cvae_forward.15} parent=0 // pred_check
    _
  $region15: #{cvae_forward.15} parent=0 // pred_check_branch
    %90 = sbr.rel (0) target = $region17
  $region16: #{cvae_forward.15} parent=0 // pred_region
    _
  $region17: #{cvae_forward.15} parent=0 // pred_fallthru
    _
  // Predicated region
  $region18: #{cvae_forward.15} parent=0 // pred_check
    _
  $region19: #{cvae_forward.15} parent=0 // pred_check_branch
    %92 = sbr.rel (0) target = $region21
  $region20: #{cvae_forward.15} parent=0 // pred_region
    _
  $region21: #{cvae_forward.15} parent=0 // pred_fallthru
    _

// kernel: cvae_forward.16
$region0: #{cvae_forward.16}
  #allocation0 [shape = 'u32[]', space=smem, size = 0x4, offset = 0x4, fixed_abs, tag = 'smem constant byte address 0x4 - core index']
  #allocation1 [shape = 'u32[72,128]{1,0:T(1,128)}', space=vmem, size = 0x9000, scoped, tag = 'internal scratch']
  %s0 = inlined_call_operand.vmem [shape: bf16[8,24], index: 0, kind: input, shape index: {}]
  %s1 = inlined_call_operand.vmem [shape: bf16[24,2], index: 1, kind: input, shape index: {}]
  %s2 = inlined_call_operand.vmem [shape: f32[8,1], index: 2, kind: input, shape index: {}]
  %s3 = inlined_call_operand.vmem [shape: f32[8,2], index: 3, kind: output, shape index: {}]
  %s4 = sld [smem:[#allocation0]]
  $region22: #{cvae_forward.16} parent=0
    _
  %s6 = ssub.s32 1, %s4
  %s7 = scalar_select 0, %s6, %s4
  // Predicated region
  $region2: #{cvae_forward.16} parent=0 // pred_check
    _
  $region3: #{cvae_forward.16} parent=0 // pred_check_branch
    %9 = sbr.rel (0) target = $region5
  $region4: #{cvae_forward.16} parent=0 // pred_region
    _
  $region5: #{cvae_forward.16} parent=0 // pred_fallthru
    _
  // Predicated region
  $region6: #{cvae_forward.16} parent=0 // pred_check
    _
  $region7: #{cvae_forward.16} parent=0 // pred_check_branch
    %11 = sbr.rel (0) target = $region9
  $region8: #{cvae_forward.16} parent=0 // pred_region
    _
  $region9: #{cvae_forward.16} parent=0 // pred_fallthru
    _
  // Predicated region
  $region10: #{cvae_forward.16} parent=0 // pred_check
    _
  $region11: #{cvae_forward.16} parent=0 // pred_check_branch
    %13 = sbr.rel (0) target = $region13
  $region12: #{cvae_forward.16} parent=0 // pred_region
    _
  $region13: #{cvae_forward.16} parent=0 // pred_fallthru
    _
  %v15 = vld [vmem:[%s0] sm:$0xf]
  %v16 = vld [vmem:[%s1] sm:$0xf]
  %v17 = vld [vmem:[%s1 + $0x4] sm:$0xf]
  %v18 = vld [vmem:[%s1 + $0x8] sm:$0xf]
  %v19 = vld [vmem:[%s2] sm:$0xff]
  %21 = vset.pattern.permute.xlu0 0
  %22 = vperm.xlu0 %21, %v19
  %v23 = vpop.permute.xlu0 %22
  %v28 = vunpack.c.l.b16 %v16
  %v29 = vunpack.c.l.b16 %v17
  %v30 = vunpack.c.l.b16 %v18
  %v31 = vpack.c.b16 %v29, %v28
  %v32 = vpack.c.b16 %v30, %v30
  %vm34 = vcmask 195584
  %v36 = vsel %vm34, %v15, 0
  %vm38 = vcmask 1043456
  %v40 = vsel %vm38, %v32, 0
  %42 = vmatpush.bf16.msra.mxu0 0
  %43 = vmatpush.bf16.msra.mxu0 0
  %44 = vmatpush.bf16.msra.mxu0 0
  %45 = vmatpush.bf16.msra.mxu0 0
  %46 = vmatpush.bf16.msra.mxu0 0
  %47 = vmatpush.bf16.msra.mxu0 0
  %48 = vmatpush.bf16.msra.mxu0 %v40
  %49 = vmatpush.bf16.msra.mxu0 %v31
  %50 = vmatmul.bf16.gmra.mxu0 %v36
  %v51 = vpop.f32.mrf.mxu0
  %v52 = vadd.f32 %v23, %v51
  %v53 = vpop.f32.mrf.mxu0
  %54 = vdwg.mxu0
  %vm55 = vcmask 15360
  %56 = vst.msk [vmem:[%s3] sm:$0xff] %vm55, %v52
  // Predicated region
  $region14: #{cvae_forward.16} parent=0 // pred_check
    _
  $region15: #{cvae_forward.16} parent=0 // pred_check_branch
    %58 = sbr.rel (0) target = $region17
  $region16: #{cvae_forward.16} parent=0 // pred_region
    _
  $region17: #{cvae_forward.16} parent=0 // pred_fallthru
    _
  // Predicated region
  $region18: #{cvae_forward.16} parent=0 // pred_check
    _
  $region19: #{cvae_forward.16} parent=0 // pred_check_branch
    %60 = sbr.rel (0) target = $region21
  $region20: #{cvae_forward.16} parent=0 // pred_region
    _
  $region21: #{cvae_forward.16} parent=0 // pred_fallthru
    _

// kernel: cvae_forward.17
$region0: #{cvae_forward.17}
  #allocation0 [shape = 'u32[]', space=smem, size = 0x4, offset = 0x4, fixed_abs, tag = 'smem constant byte address 0x4 - core index']
  #allocation1 [shape = 'u32[72,128]{1,0:T(1,128)}', space=vmem, size = 0x9000, scoped, tag = 'internal scratch']
  %s0 = inlined_call_operand.vmem [shape: bf16[64,32], index: 0, kind: input, shape index: {}]
  %s1 = inlined_call_operand.vmem [shape: bf16[32,2], index: 1, kind: input, shape index: {}]
  %s2 = inlined_call_operand.vmem [shape: f32[64,1], index: 2, kind: input, shape index: {}]
  %s3 = inlined_call_operand.vmem [shape: f32[64,1], index: 3, kind: input, shape index: {}]
  %s4 = inlined_call_operand.vmem [shape: f32[64,1], index: 4, kind: input, shape index: {}]
  %s5 = inlined_call_operand.vmem [shape: f32[64,2], index: 5, kind: output, shape index: {}]
  %s6 = sld [smem:[#allocation0]]
  $region30: #{cvae_forward.17} parent=0
    _
  %s8 = ssub.s32 1, %s6
  %s9 = scalar_select 0, %s8, %s6
  // Predicated region
  $region2: #{cvae_forward.17} parent=0 // pred_check
    _
  $region3: #{cvae_forward.17} parent=0 // pred_check_branch
    %11 = sbr.rel (0) target = $region5
  $region4: #{cvae_forward.17} parent=0 // pred_region
    _
  $region5: #{cvae_forward.17} parent=0 // pred_fallthru
    _
  // Predicated region
  $region6: #{cvae_forward.17} parent=0 // pred_check
    _
  $region7: #{cvae_forward.17} parent=0 // pred_check_branch
    %13 = sbr.rel (0) target = $region9
  $region8: #{cvae_forward.17} parent=0 // pred_region
    _
  $region9: #{cvae_forward.17} parent=0 // pred_fallthru
    _
  // Predicated region
  $region10: #{cvae_forward.17} parent=0 // pred_check
    _
  $region11: #{cvae_forward.17} parent=0 // pred_check_branch
    %15 = sbr.rel (0) target = $region13
  $region12: #{cvae_forward.17} parent=0 // pred_region
    _
  $region13: #{cvae_forward.17} parent=0 // pred_fallthru
    _
  // Predicated region
  $region14: #{cvae_forward.17} parent=0 // pred_check
    _
  $region15: #{cvae_forward.17} parent=0 // pred_check_branch
    %17 = sbr.rel (0) target = $region17
  $region16: #{cvae_forward.17} parent=0 // pred_region
    _
  $region17: #{cvae_forward.17} parent=0 // pred_fallthru
    _
  // Predicated region
  $region18: #{cvae_forward.17} parent=0 // pred_check
    _
  $region19: #{cvae_forward.17} parent=0 // pred_check_branch
    %19 = sbr.rel (0) target = $region21
  $region20: #{cvae_forward.17} parent=0 // pred_region
    _
  $region21: #{cvae_forward.17} parent=0 // pred_fallthru
    _
  %v21 = vld [vmem:[%s0] sm:$0xf]
  %v22 = vld [vmem:[%s0 + $0x4] sm:$0xf]
  %v23 = vld [vmem:[%s0 + $0x8] sm:$0xf]
  %v24 = vld [vmem:[%s0 + $0xc] sm:$0xf]
  %v25 = vld [vmem:[%s0 + $0x10] sm:$0xf]
  %v26 = vld [vmem:[%s0 + $0x14] sm:$0xf]
  %v27 = vld [vmem:[%s0 + $0x18] sm:$0xf]
  %v28 = vld [vmem:[%s0 + $0x1c] sm:$0xf]
  %v29 = vld [vmem:[%s1] sm:$0xf]
  %v30 = vld [vmem:[%s1 + $0x4] sm:$0xf]
  %v31 = vld [vmem:[%s1 + $0x8] sm:$0xf]
  %v32 = vld [vmem:[%s1 + $0xc] sm:$0xf]
  %v33 = vld [vmem:[%s2] sm:$0xff]
  %v34 = vld [vmem:[%s2 + $0x8] sm:$0xff]
  %v35 = vld [vmem:[%s2 + $0x10] sm:$0xff]
  %v36 = vld [vmem:[%s2 + $0x18] sm:$0xff]
  %v37 = vld [vmem:[%s2 + $0x20] sm:$0xff]
  %v38 = vld [vmem:[%s2 + $0x28] sm:$0xff]
  %v39 = vld [vmem:[%s2 + $0x30] sm:$0xff]
  %v40 = vld [vmem:[%s2 + $0x38] sm:$0xff]
  %42 = vset.pattern.permute.xlu0 0
  %43 = vperm.xlu0 %42, %v33
  %v44 = vpop.permute.xlu0 %43
  %47 = vset.pattern.permute.xlu0 0
  %48 = vperm.xlu0 %47, %v34
  %v49 = vpop.permute.xlu0 %48
  %52 = vset.pattern.permute.xlu0 0
  %53 = vperm.xlu0 %52, %v35
  %v54 = vpop.permute.xlu0 %53
  %57 = vset.pattern.permute.xlu0 0
  %58 = vperm.xlu0 %57, %v36
  %v59 = vpop.permute.xlu0 %58
  %62 = vset.pattern.permute.xlu0 0
  %63 = vperm.xlu0 %62, %v37
  %v64 = vpop.permute.xlu0 %63
  %67 = vset.pattern.permute.xlu0 0
  %68 = vperm.xlu0 %67, %v38
  %v69 = vpop.permute.xlu0 %68
  %72 = vset.pattern.permute.xlu0 0
  %73 = vperm.xlu0 %72, %v39
  %v74 = vpop.permute.xlu0 %73
  %77 = vset.pattern.permute.xlu0 0
  %78 = vperm.xlu0 %77, %v40
  %v79 = vpop.permute.xlu0 %78
  %v89 = vunpack.c.l.b16 %v21
  %v90 = vunpack.c.l.b16 %v22
  %v91 = vunpack.c.l.b16 %v23
  %v92 = vunpack.c.l.b16 %v24
  %v93 = vunpack.c.l.b16 %v25
  %v94 = vunpack.c.l.b16 %v26
  %v95 = vunpack.c.l.b16 %v27
  %v96 = vunpack.c.l.b16 %v28
  %v97 = vpack.c.b16 %v90, %v89
  %v98 = vpack.c.b16 %v92, %v91
  %v99 = vpack.c.b16 %v94, %v93
  %v100 = vpack.c.b16 %v96, %v95
  %v105 = vunpack.c.l.b16 %v29
  %v106 = vunpack.c.l.b16 %v30
  %v107 = vunpack.c.l.b16 %v31
  %v108 = vunpack.c.l.b16 %v32
  %v109 = vpack.c.b16 %v106, %v105
  %v110 = vpack.c.b16 %v108, %v107
  %vm113 = vcmask 261120
  %v115 = vsel %vm113, %v97, 0
  %v118 = vsel %vm113, %v98, 0
  %v121 = vsel %vm113, %v99, 0
  %v124 = vsel %vm113, %v100, 0
  %126 = vmatpush.bf16.msra.mxu0 0
  %127 = vmatpush.bf16.msra.mxu0 0
  %128 = vmatpush.bf16.msra.mxu0 0
  %129 = vmatpush.bf16.msra.mxu0 0
  %130 = vmatpush.bf16.msra.mxu0 0
  %131 = vmatpush.bf16.msra.mxu0 0
  %132 = vmatpush.bf16.msra.mxu0 %v110
  %133 = vmatpush.bf16.msra.mxu0 %v109
  %134 = vmatmul.bf16.gmra.mxu0 %v115
  %v135 = vpop.f32.mrf.mxu0
  %v136 = vadd.f32 %v44, %v135
  %v137 = vpop.f32.mrf.mxu0
  %v138 = vadd.f32 %v49, %v137
  %139 = vmatmul.bf16.gmra.mxu0 %v118
  %v140 = vpop.f32.mrf.mxu0
  %v141 = vadd.f32 %v54, %v140
  %v142 = vpop.f32.mrf.mxu0
  %v143 = vadd.f32 %v59, %v142
  %144 = vmatmul.bf16.gmra.mxu0 %v121
  %v145 = vpop.f32.mrf.mxu0
  %v146 = vadd.f32 %v64, %v145
  %v147 = vpop.f32.mrf.mxu0
  %v148 = vadd.f32 %v69, %v147
  %149 = vmatmul.bf16.gmra.mxu0 %v124
  %v150 = vpop.f32.mrf.mxu0
  %v151 = vadd.f32 %v74, %v150
  %v152 = vpop.f32.mrf.mxu0
  %v153 = vadd.f32 %v79, %v152
  %154 = vdwg.mxu0
  %vm155 = vcmask 15360
  %v156 = vsel %vm155, %v136, 0.0
  %157 = vadd.xlane.f32.xlu0 %v156
  %v158 = vpop.xlane.xlu0 %157
  %v159 = vsel %vm155, %v138, 0.0
  %160 = vadd.xlane.f32.xlu0 %v159
  %v161 = vpop.xlane.xlu0 %160
  %v162 = vsel %vm155, %v141, 0.0
  %163 = vadd.xlane.f32.xlu0 %v162
  %v164 = vpop.xlane.xlu0 %163
  %v165 = vsel %vm155, %v143, 0.0
  %166 = vadd.xlane.f32.xlu0 %v165
  %v167 = vpop.xlane.xlu0 %166
  %v168 = vsel %vm155, %v146, 0.0
  %169 = vadd.xlane.f32.xlu0 %v168
  %v170 = vpop.xlane.xlu0 %169
  %v171 = vsel %vm155, %v148, 0.0
  %172 = vadd.xlane.f32.xlu0 %v171
  %v173 = vpop.xlane.xlu0 %172
  %v174 = vsel %vm155, %v151, 0.0
  %175 = vadd.xlane.f32.xlu0 %v174
  %v176 = vpop.xlane.xlu0 %175
  %v177 = vsel %vm155, %v153, 0.0
  %178 = vadd.xlane.f32.xlu0 %v177
  %v179 = vpop.xlane.xlu0 %178
  %v180 = vmul.f32 %v136, %v136
  %v181 = vmul.f32 %v138, %v138
  %v182 = vmul.f32 %v141, %v141
  %v183 = vmul.f32 %v143, %v143
  %v184 = vmul.f32 %v146, %v146
  %v185 = vmul.f32 %v148, %v148
  %v186 = vmul.f32 %v151, %v151
  %v187 = vmul.f32 %v153, %v153
  %v188 = vsel %vm155, %v180, 0.0
  %189 = vadd.xlane.f32.xlu0 %v188
  %v190 = vpop.xlane.xlu0 %189
  %v191 = vsel %vm155, %v181, 0.0
  %192 = vadd.xlane.f32.xlu0 %v191
  %v193 = vpop.xlane.xlu0 %192
  %v194 = vsel %vm155, %v182, 0.0
  %195 = vadd.xlane.f32.xlu0 %v194
  %v196 = vpop.xlane.xlu0 %195
  %v197 = vsel %vm155, %v183, 0.0
  %198 = vadd.xlane.f32.xlu0 %v197
  %v199 = vpop.xlane.xlu0 %198
  %v200 = vsel %vm155, %v184, 0.0
  %201 = vadd.xlane.f32.xlu0 %v200
  %v202 = vpop.xlane.xlu0 %201
  %v203 = vsel %vm155, %v185, 0.0
  %204 = vadd.xlane.f32.xlu0 %v203
  %v205 = vpop.xlane.xlu0 %204
  %v206 = vsel %vm155, %v186, 0.0
  %207 = vadd.xlane.f32.xlu0 %v206
  %v208 = vpop.xlane.xlu0 %207
  %v209 = vsel %vm155, %v187, 0.0
  %210 = vadd.xlane.f32.xlu0 %v209
  %v211 = vpop.xlane.xlu0 %210
  %v212 = vadd.f32 %v158, %v164
  %v213 = vadd.f32 %v161, %v167
  %v214 = vadd.f32 %v190, %v196
  %v215 = vadd.f32 %v193, %v199
  %v216 = vadd.f32 %v212, %v170
  %v217 = vadd.f32 %v213, %v173
  %v218 = vadd.f32 %v214, %v202
  %v219 = vadd.f32 %v215, %v205
  %v220 = vadd.f32 %v216, %v176
  %v221 = vadd.f32 %v217, %v179
  %v222 = vadd.f32 %v218, %v208
  %v223 = vadd.f32 %v219, %v211
  %v224 = vmul.f32 %v220, 0.125
  %v225 = vmul.f32 %v221, 0.125
  %v226 = vmul.f32 %v222, 0.125
  %v227 = vmul.f32 %v223, 0.125
  %v228 = vmul.f32 %v224, %v224
  %v229 = vmul.f32 %v225, %v225
  %v230 = vsub.f32 %v226, %v228
  %v231 = vsub.f32 %v227, %v229
  %233 = vset.pattern.permute.xlu0 0
  %234 = vperm.xlu0 %233, %v224
  %v235 = vpop.permute.xlu0 %234
  %238 = vset.pattern.permute.xlu0 0
  %239 = vperm.xlu0 %238, %v225
  %v240 = vpop.permute.xlu0 %239
  %v242 = vsub.f32 %v136, %v235
  %v243 = vsub.f32 %v138, %v240
  %v244 = vsub.f32 %v141, %v235
  %v245 = vsub.f32 %v143, %v240
  %v246 = vsub.f32 %v146, %v235
  %v247 = vsub.f32 %v148, %v240
  %v248 = vsub.f32 %v151, %v235
  %v249 = vsub.f32 %v153, %v240
  %v250 = vadd.f32 %v230, 1e-05
  %v251 = vadd.f32 %v231, 1e-05
  %v252 = vrsqrt.pop %v250
  %v253 = vmul.f32 %v252, %v250
  %v254 = vmul.f32 %v253, %v252
  %v255 = vmul.f32 0.5, %v254
  %v256 = vsub.f32 1.5, %v255
  %v257 = vmul.f32 %v252, %v256
  %vm258 = vweird.f32 %v250
  %vm259 = vweird.f32 %v252
  %vm260 = vmor %vm258, %vm259
  %v261 = vsel %vm260, %v252, %v257
  %v262 = vrsqrt.pop %v251
  %v263 = vmul.f32 %v262, %v251
  %v264 = vmul.f32 %v263, %v262
  %v265 = vmul.f32 0.5, %v264
  %v266 = vsub.f32 1.5, %v265
  %v267 = vmul.f32 %v262, %v266
  %vm268 = vweird.f32 %v251
  %vm269 = vweird.f32 %v262
  %vm270 = vmor %vm268, %vm269
  %v271 = vsel %vm270, %v262, %v267
  %273 = vset.pattern.permute.xlu0 0
  %274 = vperm.xlu0 %273, %v261
  %v275 = vpop.permute.xlu0 %274
  %278 = vset.pattern.permute.xlu0 0
  %279 = vperm.xlu0 %278, %v271
  %v280 = vpop.permute.xlu0 %279
  %v282 = vmul.f32 %v242, %v275
  %v283 = vmul.f32 %v243, %v280
  %v284 = vmul.f32 %v244, %v275
  %v285 = vmul.f32 %v245, %v280
  %v286 = vmul.f32 %v246, %v275
  %v287 = vmul.f32 %v247, %v280
  %v288 = vmul.f32 %v248, %v275
  %v289 = vmul.f32 %v249, %v280
  %v290 = vld [vmem:[%s3] sm:$0xff]
  %v291 = vld [vmem:[%s3 + $0x8] sm:$0xff]
  %v292 = vld [vmem:[%s3 + $0x10] sm:$0xff]
  %v293 = vld [vmem:[%s3 + $0x18] sm:$0xff]
  %v294 = vld [vmem:[%s3 + $0x20] sm:$0xff]
  %v295 = vld [vmem:[%s3 + $0x28] sm:$0xff]
  %v296 = vld [vmem:[%s3 + $0x30] sm:$0xff]
  %v297 = vld [vmem:[%s3 + $0x38] sm:$0xff]
  %299 = vset.pattern.permute.xlu0 0
  %300 = vperm.xlu0 %299, %v290
  %v301 = vpop.permute.xlu0 %300
  %304 = vset.pattern.permute.xlu0 0
  %305 = vperm.xlu0 %304, %v291
  %v306 = vpop.permute.xlu0 %305
  %309 = vset.pattern.permute.xlu0 0
  %310 = vperm.xlu0 %309, %v292
  %v311 = vpop.permute.xlu0 %310
  %314 = vset.pattern.permute.xlu0 0
  %315 = vperm.xlu0 %314, %v293
  %v316 = vpop.permute.xlu0 %315
  %319 = vset.pattern.permute.xlu0 0
  %320 = vperm.xlu0 %319, %v294
  %v321 = vpop.permute.xlu0 %320
  %324 = vset.pattern.permute.xlu0 0
  %325 = vperm.xlu0 %324, %v295
  %v326 = vpop.permute.xlu0 %325
  %329 = vset.pattern.permute.xlu0 0
  %330 = vperm.xlu0 %329, %v296
  %v331 = vpop.permute.xlu0 %330
  %334 = vset.pattern.permute.xlu0 0
  %335 = vperm.xlu0 %334, %v297
  %v336 = vpop.permute.xlu0 %335
  %v338 = vmul.f32 %v282, %v301
  %v339 = vmul.f32 %v283, %v306
  %v340 = vmul.f32 %v284, %v311
  %v341 = vmul.f32 %v285, %v316
  %v342 = vmul.f32 %v286, %v321
  %v343 = vmul.f32 %v287, %v326
  %v344 = vmul.f32 %v288, %v331
  %v345 = vmul.f32 %v289, %v336
  %v346 = vld [vmem:[%s4] sm:$0xff]
  %v347 = vld [vmem:[%s4 + $0x8] sm:$0xff]
  %v348 = vld [vmem:[%s4 + $0x10] sm:$0xff]
  %v349 = vld [vmem:[%s4 + $0x18] sm:$0xff]
  %v350 = vld [vmem:[%s4 + $0x20] sm:$0xff]
  %v351 = vld [vmem:[%s4 + $0x28] sm:$0xff]
  %v352 = vld [vmem:[%s4 + $0x30] sm:$0xff]
  %v353 = vld [vmem:[%s4 + $0x38] sm:$0xff]
  %355 = vset.pattern.permute.xlu0 0
  %356 = vperm.xlu0 %355, %v346
  %v357 = vpop.permute.xlu0 %356
  %360 = vset.pattern.permute.xlu0 0
  %361 = vperm.xlu0 %360, %v347
  %v362 = vpop.permute.xlu0 %361
  %365 = vset.pattern.permute.xlu0 0
  %366 = vperm.xlu0 %365, %v348
  %v367 = vpop.permute.xlu0 %366
  %370 = vset.pattern.permute.xlu0 0
  %371 = vperm.xlu0 %370, %v349
  %v372 = vpop.permute.xlu0 %371
  %375 = vset.pattern.permute.xlu0 0
  %376 = vperm.xlu0 %375, %v350
  %v377 = vpop.permute.xlu0 %376
  %380 = vset.pattern.permute.xlu0 0
  %381 = vperm.xlu0 %380, %v351
  %v382 = vpop.permute.xlu0 %381
  %385 = vset.pattern.permute.xlu0 0
  %386 = vperm.xlu0 %385, %v352
  %v387 = vpop.permute.xlu0 %386
  %390 = vset.pattern.permute.xlu0 0
  %391 = vperm.xlu0 %390, %v353
  %v392 = vpop.permute.xlu0 %391
  %v394 = vadd.f32 %v338, %v357
  %v395 = vadd.f32 %v339, %v362
  %v396 = vadd.f32 %v340, %v367
  %v397 = vadd.f32 %v341, %v372
  %v398 = vadd.f32 %v342, %v377
  %v399 = vadd.f32 %v343, %v382
  %v400 = vadd.f32 %v344, %v387
  %v401 = vadd.f32 %v345, %v392
  %vm402 = vcmp.ge.f32.partialorder %v394, 0.0
  %vm403 = vcmp.ge.f32.partialorder %v395, 0.0
  %vm404 = vcmp.ge.f32.partialorder %v396, 0.0
  %vm405 = vcmp.ge.f32.partialorder %v397, 0.0
  %vm406 = vcmp.ge.f32.partialorder %v398, 0.0
  %vm407 = vcmp.ge.f32.partialorder %v399, 0.0
  %vm408 = vcmp.ge.f32.partialorder %v400, 0.0
  %vm409 = vcmp.ge.f32.partialorder %v401, 0.0
  %v410 = vmul.f32 %v394, 0.01
  %v411 = vmul.f32 %v395, 0.01
  %v412 = vmul.f32 %v396, 0.01
  %v413 = vmul.f32 %v397, 0.01
  %v414 = vmul.f32 %v398, 0.01
  %v415 = vmul.f32 %v399, 0.01
  %v416 = vmul.f32 %v400, 0.01
  %v417 = vmul.f32 %v401, 0.01
  %v418 = vsel %vm402, %v394, %v410
  %v419 = vsel %vm403, %v395, %v411
  %v420 = vsel %vm404, %v396, %v412
  %v421 = vsel %vm405, %v397, %v413
  %v422 = vsel %vm406, %v398, %v414
  %v423 = vsel %vm407, %v399, %v415
  %v424 = vsel %vm408, %v400, %v416
  %v425 = vsel %vm409, %v401, %v417
  %426 = vst.msk [vmem:[%s5] sm:$0xff] %vm155, %v418
  %427 = vst.msk [vmem:[%s5 + $0x8] sm:$0xff] %vm155, %v419
  %428 = vst.msk [vmem:[%s5 + $0x10] sm:$0xff] %vm155, %v420
  %429 = vst.msk [vmem:[%s5 + $0x18] sm:$0xff] %vm155, %v421
  %430 = vst.msk [vmem:[%s5 + $0x20] sm:$0xff] %vm155, %v422
  %431 = vst.msk [vmem:[%s5 + $0x28] sm:$0xff] %vm155, %v423
  %432 = vst.msk [vmem:[%s5 + $0x30] sm:$0xff] %vm155, %v424
  %433 = vst.msk [vmem:[%s5 + $0x38] sm:$0xff] %vm155, %v425
  // Predicated region
  $region22: #{cvae_forward.17} parent=0 // pred_check
    _
  $region23: #{cvae_forward.17} parent=0 // pred_check_branch
    %435 = sbr.rel (0) target = $region25
  $region24: #{cvae_forward.17} parent=0 // pred_region
    _
  $region25: #{cvae_forward.17} parent=0 // pred_fallthru
    _
  // Predicated region
  $region26: #{cvae_forward.17} parent=0 // pred_check
    _
  $region27: #{cvae_forward.17} parent=0 // pred_check_branch
    %437 = sbr.rel (0) target = $region29
  $region28: #{cvae_forward.17} parent=0 // pred_region
    _
  $region29: #{cvae_forward.17} parent=0 // pred_fallthru
    _

// kernel: cvae_forward.18
$region0: #{cvae_forward.18}
  #allocation0 [shape = 'u32[]', space=smem, size = 0x4, offset = 0x4, fixed_abs, tag = 'smem constant byte address 0x4 - core index']
  #allocation1 [shape = 'u32[72,128]{1,0:T(1,128)}', space=vmem, size = 0x9000, scoped, tag = 'internal scratch']
  %s0 = inlined_call_operand.vmem [shape: bf16[64,64], index: 0, kind: input, shape index: {}]
  %s1 = inlined_call_operand.vmem [shape: bf16[64,8], index: 1, kind: input, shape index: {}]
  %s2 = inlined_call_operand.vmem [shape: f32[64,1], index: 2, kind: input, shape index: {}]
  %s3 = inlined_call_operand.vmem [shape: f32[64,1], index: 3, kind: input, shape index: {}]
  %s4 = inlined_call_operand.vmem [shape: f32[64,1], index: 4, kind: input, shape index: {}]
  %s5 = inlined_call_operand.vmem [shape: f32[64,8], index: 5, kind: output, shape index: {}]
  %s6 = sld [smem:[#allocation0]]
  $region30: #{cvae_forward.18} parent=0
    _
  %s8 = ssub.s32 1, %s6
  %s9 = scalar_select 0, %s8, %s6
  // Predicated region
  $region2: #{cvae_forward.18} parent=0 // pred_check
    _
  $region3: #{cvae_forward.18} parent=0 // pred_check_branch
    %11 = sbr.rel (0) target = $region5
  $region4: #{cvae_forward.18} parent=0 // pred_region
    _
  $region5: #{cvae_forward.18} parent=0 // pred_fallthru
    _
  // Predicated region
  $region6: #{cvae_forward.18} parent=0 // pred_check
    _
  $region7: #{cvae_forward.18} parent=0 // pred_check_branch
    %13 = sbr.rel (0) target = $region9
  $region8: #{cvae_forward.18} parent=0 // pred_region
    _
  $region9: #{cvae_forward.18} parent=0 // pred_fallthru
    _
  // Predicated region
  $region10: #{cvae_forward.18} parent=0 // pred_check
    _
  $region11: #{cvae_forward.18} parent=0 // pred_check_branch
    %15 = sbr.rel (0) target = $region13
  $region12: #{cvae_forward.18} parent=0 // pred_region
    _
  $region13: #{cvae_forward.18} parent=0 // pred_fallthru
    _
  // Predicated region
  $region14: #{cvae_forward.18} parent=0 // pred_check
    _
  $region15: #{cvae_forward.18} parent=0 // pred_check_branch
    %17 = sbr.rel (0) target = $region17
  $region16: #{cvae_forward.18} parent=0 // pred_region
    _
  $region17: #{cvae_forward.18} parent=0 // pred_fallthru
    _
  // Predicated region
  $region18: #{cvae_forward.18} parent=0 // pred_check
    _
  $region19: #{cvae_forward.18} parent=0 // pred_check_branch
    %19 = sbr.rel (0) target = $region21
  $region20: #{cvae_forward.18} parent=0 // pred_region
    _
  $region21: #{cvae_forward.18} parent=0 // pred_fallthru
    _
  %v21 = vld [vmem:[%s0] sm:$0xf]
  %v22 = vld [vmem:[%s0 + $0x4] sm:$0xf]
  %v23 = vld [vmem:[%s0 + $0x8] sm:$0xf]
  %v24 = vld [vmem:[%s0 + $0xc] sm:$0xf]
  %v25 = vld [vmem:[%s0 + $0x10] sm:$0xf]
  %v26 = vld [vmem:[%s0 + $0x14] sm:$0xf]
  %v27 = vld [vmem:[%s0 + $0x18] sm:$0xf]
  %v28 = vld [vmem:[%s0 + $0x1c] sm:$0xf]
  %v29 = vld [vmem:[%s1] sm:$0xf]
  %v30 = vld [vmem:[%s1 + $0x4] sm:$0xf]
  %v31 = vld [vmem:[%s1 + $0x8] sm:$0xf]
  %v32 = vld [vmem:[%s1 + $0xc] sm:$0xf]
  %v33 = vld [vmem:[%s1 + $0x10] sm:$0xf]
  %v34 = vld [vmem:[%s1 + $0x14] sm:$0xf]
  %v35 = vld [vmem:[%s1 + $0x18] sm:$0xf]
  %v36 = vld [vmem:[%s1 + $0x1c] sm:$0xf]
  %v37 = vld [vmem:[%s2] sm:$0xff]
  %v38 = vld [vmem:[%s2 + $0x8] sm:$0xff]
  %v39 = vld [vmem:[%s2 + $0x10] sm:$0xff]
  %v40 = vld [vmem:[%s2 + $0x18] sm:$0xff]
  %v41 = vld [vmem:[%s2 + $0x20] sm:$0xff]
  %v42 = vld [vmem:[%s2 + $0x28] sm:$0xff]
  %v43 = vld [vmem:[%s2 + $0x30] sm:$0xff]
  %v44 = vld [vmem:[%s2 + $0x38] sm:$0xff]
  %46 = vset.pattern.permute.xlu0 0
  %47 = vperm.xlu0 %46, %v37
  %v48 = vpop.permute.xlu0 %47
  %51 = vset.pattern.permute.xlu0 0
  %52 = vperm.xlu0 %51, %v38
  %v53 = vpop.permute.xlu0 %52
  %56 = vset.pattern.permute.xlu0 0
  %57 = vperm.xlu0 %56, %v39
  %v58 = vpop.permute.xlu0 %57
  %61 = vset.pattern.permute.xlu0 0
  %62 = vperm.xlu0 %61, %v40
  %v63 = vpop.permute.xlu0 %62
  %66 = vset.pattern.permute.xlu0 0
  %67 = vperm.xlu0 %66, %v41
  %v68 = vpop.permute.xlu0 %67
  %71 = vset.pattern.permute.xlu0 0
  %72 = vperm.xlu0 %71, %v42
  %v73 = vpop.permute.xlu0 %72
  %76 = vset.pattern.permute.xlu0 0
  %77 = vperm.xlu0 %76, %v43
  %v78 = vpop.permute.xlu0 %77
  %81 = vset.pattern.permute.xlu0 0
  %82 = vperm.xlu0 %81, %v44
  %v83 = vpop.permute.xlu0 %82
  %v93 = vunpack.c.l.b16 %v21
  %v94 = vunpack.c.l.b16 %v22
  %v95 = vunpack.c.l.b16 %v23
  %v96 = vunpack.c.l.b16 %v24
  %v97 = vunpack.c.l.b16 %v25
  %v98 = vunpack.c.l.b16 %v26
  %v99 = vunpack.c.l.b16 %v27
  %v100 = vunpack.c.l.b16 %v28
  %v101 = vpack.c.b16 %v94, %v93
  %v102 = vpack.c.b16 %v96, %v95
  %v103 = vpack.c.b16 %v98, %v97
  %v104 = vpack.c.b16 %v100, %v99
  %v113 = vunpack.c.l.b16 %v29
  %v114 = vunpack.c.l.b16 %v30
  %v115 = vunpack.c.l.b16 %v31
  %v116 = vunpack.c.l.b16 %v32
  %v117 = vunpack.c.l.b16 %v33
  %v118 = vunpack.c.l.b16 %v34
  %v119 = vunpack.c.l.b16 %v35
  %v120 = vunpack.c.l.b16 %v36
  %v121 = vpack.c.b16 %v114, %v113
  %v122 = vpack.c.b16 %v116, %v115
  %v123 = vpack.c.b16 %v118, %v117
  %v124 = vpack.c.b16 %v120, %v119
  %vm129 = vcmask 523264
  %v131 = vsel %vm129, %v101, 0
  %v134 = vsel %vm129, %v102, 0
  %v137 = vsel %vm129, %v103, 0
  %v140 = vsel %vm129, %v104, 0
  %142 = vmatpush.bf16.msra.mxu0 0
  %143 = vmatpush.bf16.msra.mxu0 0
  %144 = vmatpush.bf16.msra.mxu0 0
  %145 = vmatpush.bf16.msra.mxu0 0
  %146 = vmatpush.bf16.msra.mxu0 %v124
  %147 = vmatpush.bf16.msra.mxu0 %v123
  %148 = vmatpush.bf16.msra.mxu0 %v122
  %149 = vmatpush.bf16.msra.mxu0 %v121
  %150 = vmatmul.bf16.gmra.mxu0 %v131
  %v151 = vpop.f32.mrf.mxu0
  %v152 = vadd.f32 %v48, %v151
  %v153 = vpop.f32.mrf.mxu0
  %v154 = vadd.f32 %v53, %v153
  %155 = vmatmul.bf16.gmra.mxu0 %v134
  %v156 = vpop.f32.mrf.mxu0
  %v157 = vadd.f32 %v58, %v156
  %v158 = vpop.f32.mrf.mxu0
  %v159 = vadd.f32 %v63, %v158
  %160 = vmatmul.bf16.gmra.mxu0 %v137
  %v161 = vpop.f32.mrf.mxu0
  %v162 = vadd.f32 %v68, %v161
  %v163 = vpop.f32.mrf.mxu0
  %v164 = vadd.f32 %v73, %v163
  %165 = vmatmul.bf16.gmra.mxu0 %v140
  %v166 = vpop.f32.mrf.mxu0
  %v167 = vadd.f32 %v78, %v166
  %v168 = vpop.f32.mrf.mxu0
  %v169 = vadd.f32 %v83, %v168
  %170 = vdwg.mxu0
  %vm171 = vcmask 64512
  %v172 = vsel %vm171, %v152, 0.0
  %173 = vadd.xlane.f32.xlu0 %v172
  %v174 = vpop.xlane.xlu0 %173
  %v175 = vsel %vm171, %v154, 0.0
  %176 = vadd.xlane.f32.xlu0 %v175
  %v177 = vpop.xlane.xlu0 %176
  %v178 = vsel %vm171, %v157, 0.0
  %179 = vadd.xlane.f32.xlu0 %v178
  %v180 = vpop.xlane.xlu0 %179
  %v181 = vsel %vm171, %v159, 0.0
  %182 = vadd.xlane.f32.xlu0 %v181
  %v183 = vpop.xlane.xlu0 %182
  %v184 = vsel %vm171, %v162, 0.0
  %185 = vadd.xlane.f32.xlu0 %v184
  %v186 = vpop.xlane.xlu0 %185
  %v187 = vsel %vm171, %v164, 0.0
  %188 = vadd.xlane.f32.xlu0 %v187
  %v189 = vpop.xlane.xlu0 %188
  %v190 = vsel %vm171, %v167, 0.0
  %191 = vadd.xlane.f32.xlu0 %v190
  %v192 = vpop.xlane.xlu0 %191
  %v193 = vsel %vm171, %v169, 0.0
  %194 = vadd.xlane.f32.xlu0 %v193
  %v195 = vpop.xlane.xlu0 %194
  %v196 = vmul.f32 %v152, %v152
  %v197 = vmul.f32 %v154, %v154
  %v198 = vmul.f32 %v157, %v157
  %v199 = vmul.f32 %v159, %v159
  %v200 = vmul.f32 %v162, %v162
  %v201 = vmul.f32 %v164, %v164
  %v202 = vmul.f32 %v167, %v167
  %v203 = vmul.f32 %v169, %v169
  %v204 = vsel %vm171, %v196, 0.0
  %205 = vadd.xlane.f32.xlu0 %v204
  %v206 = vpop.xlane.xlu0 %205
  %v207 = vsel %vm171, %v197, 0.0
  %208 = vadd.xlane.f32.xlu0 %v207
  %v209 = vpop.xlane.xlu0 %208
  %v210 = vsel %vm171, %v198, 0.0
  %211 = vadd.xlane.f32.xlu0 %v210
  %v212 = vpop.xlane.xlu0 %211
  %v213 = vsel %vm171, %v199, 0.0
  %214 = vadd.xlane.f32.xlu0 %v213
  %v215 = vpop.xlane.xlu0 %214
  %v216 = vsel %vm171, %v200, 0.0
  %217 = vadd.xlane.f32.xlu0 %v216
  %v218 = vpop.xlane.xlu0 %217
  %v219 = vsel %vm171, %v201, 0.0
  %220 = vadd.xlane.f32.xlu0 %v219
  %v221 = vpop.xlane.xlu0 %220
  %v222 = vsel %vm171, %v202, 0.0
  %223 = vadd.xlane.f32.xlu0 %v222
  %v224 = vpop.xlane.xlu0 %223
  %v225 = vsel %vm171, %v203, 0.0
  %226 = vadd.xlane.f32.xlu0 %v225
  %v227 = vpop.xlane.xlu0 %226
  %v228 = vadd.f32 %v174, %v180
  %v229 = vadd.f32 %v177, %v183
  %v230 = vadd.f32 %v206, %v212
  %v231 = vadd.f32 %v209, %v215
  %v232 = vadd.f32 %v228, %v186
  %v233 = vadd.f32 %v229, %v189
  %v234 = vadd.f32 %v230, %v218
  %v235 = vadd.f32 %v231, %v221
  %v236 = vadd.f32 %v232, %v192
  %v237 = vadd.f32 %v233, %v195
  %v238 = vadd.f32 %v234, %v224
  %v239 = vadd.f32 %v235, %v227
  %v240 = vmul.f32 %v236, 0.03125
  %v241 = vmul.f32 %v237, 0.03125
  %v242 = vmul.f32 %v238, 0.03125
  %v243 = vmul.f32 %v239, 0.03125
  %v244 = vmul.f32 %v240, %v240
  %v245 = vmul.f32 %v241, %v241
  %v246 = vsub.f32 %v242, %v244
  %v247 = vsub.f32 %v243, %v245
  %249 = vset.pattern.permute.xlu0 0
  %250 = vperm.xlu0 %249, %v240
  %v251 = vpop.permute.xlu0 %250
  %254 = vset.pattern.permute.xlu0 0
  %255 = vperm.xlu0 %254, %v241
  %v256 = vpop.permute.xlu0 %255
  %v258 = vsub.f32 %v152, %v251
  %v259 = vsub.f32 %v154, %v256
  %v260 = vsub.f32 %v157, %v251
  %v261 = vsub.f32 %v159, %v256
  %v262 = vsub.f32 %v162, %v251
  %v263 = vsub.f32 %v164, %v256
  %v264 = vsub.f32 %v167, %v251
  %v265 = vsub.f32 %v169, %v256
  %v266 = vadd.f32 %v246, 1e-05
  %v267 = vadd.f32 %v247, 1e-05
  %v268 = vrsqrt.pop %v266
  %v269 = vmul.f32 %v268, %v266
  %v270 = vmul.f32 %v269, %v268
  %v271 = vmul.f32 0.5, %v270
  %v272 = vsub.f32 1.5, %v271
  %v273 = vmul.f32 %v268, %v272
  %vm274 = vweird.f32 %v266
  %vm275 = vweird.f32 %v268
  %vm276 = vmor %vm274, %vm275
  %v277 = vsel %vm276, %v268, %v273
  %v278 = vrsqrt.pop %v267
  %v279 = vmul.f32 %v278, %v267
  %v280 = vmul.f32 %v279, %v278
  %v281 = vmul.f32 0.5, %v280
  %v282 = vsub.f32 1.5, %v281
  %v283 = vmul.f32 %v278, %v282
  %vm284 = vweird.f32 %v267
  %vm285 = vweird.f32 %v278
  %vm286 = vmor %vm284, %vm285
  %v287 = vsel %vm286, %v278, %v283
  %289 = vset.pattern.permute.xlu0 0
  %290 = vperm.xlu0 %289, %v277
  %v291 = vpop.permute.xlu0 %290
  %294 = vset.pattern.permute.xlu0 0
  %295 = vperm.xlu0 %294, %v287
  %v296 = vpop.permute.xlu0 %295
  %v298 = vmul.f32 %v258, %v291
  %v299 = vmul.f32 %v259, %v296
  %v300 = vmul.f32 %v260, %v291
  %v301 = vmul.f32 %v261, %v296
  %v302 = vmul.f32 %v262, %v291
  %v303 = vmul.f32 %v263, %v296
  %v304 = vmul.f32 %v264, %v291
  %v305 = vmul.f32 %v265, %v296
  %v306 = vld [vmem:[%s3] sm:$0xff]
  %v307 = vld [vmem:[%s3 + $0x8] sm:$0xff]
  %v308 = vld [vmem:[%s3 + $0x10] sm:$0xff]
  %v309 = vld [vmem:[%s3 + $0x18] sm:$0xff]
  %v310 = vld [vmem:[%s3 + $0x20] sm:$0xff]
  %v311 = vld [vmem:[%s3 + $0x28] sm:$0xff]
  %v312 = vld [vmem:[%s3 + $0x30] sm:$0xff]
  %v313 = vld [vmem:[%s3 + $0x38] sm:$0xff]
  %315 = vset.pattern.permute.xlu0 0
  %316 = vperm.xlu0 %315, %v306
  %v317 = vpop.permute.xlu0 %316
  %320 = vset.pattern.permute.xlu0 0
  %321 = vperm.xlu0 %320, %v307
  %v322 = vpop.permute.xlu0 %321
  %325 = vset.pattern.permute.xlu0 0
  %326 = vperm.xlu0 %325, %v308
  %v327 = vpop.permute.xlu0 %326
  %330 = vset.pattern.permute.xlu0 0
  %331 = vperm.xlu0 %330, %v309
  %v332 = vpop.permute.xlu0 %331
  %335 = vset.pattern.permute.xlu0 0
  %336 = vperm.xlu0 %335, %v310
  %v337 = vpop.permute.xlu0 %336
  %340 = vset.pattern.permute.xlu0 0
  %341 = vperm.xlu0 %340, %v311
  %v342 = vpop.permute.xlu0 %341
  %345 = vset.pattern.permute.xlu0 0
  %346 = vperm.xlu0 %345, %v312
  %v347 = vpop.permute.xlu0 %346
  %350 = vset.pattern.permute.xlu0 0
  %351 = vperm.xlu0 %350, %v313
  %v352 = vpop.permute.xlu0 %351
  %v354 = vmul.f32 %v298, %v317
  %v355 = vmul.f32 %v299, %v322
  %v356 = vmul.f32 %v300, %v327
  %v357 = vmul.f32 %v301, %v332
  %v358 = vmul.f32 %v302, %v337
  %v359 = vmul.f32 %v303, %v342
  %v360 = vmul.f32 %v304, %v347
  %v361 = vmul.f32 %v305, %v352
  %v362 = vld [vmem:[%s4] sm:$0xff]
  %v363 = vld [vmem:[%s4 + $0x8] sm:$0xff]
  %v364 = vld [vmem:[%s4 + $0x10] sm:$0xff]
  %v365 = vld [vmem:[%s4 + $0x18] sm:$0xff]
  %v366 = vld [vmem:[%s4 + $0x20] sm:$0xff]
  %v367 = vld [vmem:[%s4 + $0x28] sm:$0xff]
  %v368 = vld [vmem:[%s4 + $0x30] sm:$0xff]
  %v369 = vld [vmem:[%s4 + $0x38] sm:$0xff]
  %371 = vset.pattern.permute.xlu0 0
  %372 = vperm.xlu0 %371, %v362
  %v373 = vpop.permute.xlu0 %372
  %376 = vset.pattern.permute.xlu0 0
  %377 = vperm.xlu0 %376, %v363
  %v378 = vpop.permute.xlu0 %377
  %381 = vset.pattern.permute.xlu0 0
  %382 = vperm.xlu0 %381, %v364
  %v383 = vpop.permute.xlu0 %382
  %386 = vset.pattern.permute.xlu0 0
  %387 = vperm.xlu0 %386, %v365
  %v388 = vpop.permute.xlu0 %387
  %391 = vset.pattern.permute.xlu0 0
  %392 = vperm.xlu0 %391, %v366
  %v393 = vpop.permute.xlu0 %392
  %396 = vset.pattern.permute.xlu0 0
  %397 = vperm.xlu0 %396, %v367
  %v398 = vpop.permute.xlu0 %397
  %401 = vset.pattern.permute.xlu0 0
  %402 = vperm.xlu0 %401, %v368
  %v403 = vpop.permute.xlu0 %402
  %406 = vset.pattern.permute.xlu0 0
  %407 = vperm.xlu0 %406, %v369
  %v408 = vpop.permute.xlu0 %407
  %v410 = vadd.f32 %v354, %v373
  %v411 = vadd.f32 %v355, %v378
  %v412 = vadd.f32 %v356, %v383
  %v413 = vadd.f32 %v357, %v388
  %v414 = vadd.f32 %v358, %v393
  %v415 = vadd.f32 %v359, %v398
  %v416 = vadd.f32 %v360, %v403
  %v417 = vadd.f32 %v361, %v408
  %vm418 = vcmp.ge.f32.partialorder %v410, 0.0
  %vm419 = vcmp.ge.f32.partialorder %v411, 0.0
  %vm420 = vcmp.ge.f32.partialorder %v412, 0.0
  %vm421 = vcmp.ge.f32.partialorder %v413, 0.0
  %vm422 = vcmp.ge.f32.partialorder %v414, 0.0
  %vm423 = vcmp.ge.f32.partialorder %v415, 0.0
  %vm424 = vcmp.ge.f32.partialorder %v416, 0.0
  %vm425 = vcmp.ge.f32.partialorder %v417, 0.0
  %v426 = vmul.f32 %v410, 0.01
  %v427 = vmul.f32 %v411, 0.01
  %v428 = vmul.f32 %v412, 0.01
  %v429 = vmul.f32 %v413, 0.01
  %v430 = vmul.f32 %v414, 0.01
  %v431 = vmul.f32 %v415, 0.01
  %v432 = vmul.f32 %v416, 0.01
  %v433 = vmul.f32 %v417, 0.01
  %v434 = vsel %vm418, %v410, %v426
  %v435 = vsel %vm419, %v411, %v427
  %v436 = vsel %vm420, %v412, %v428
  %v437 = vsel %vm421, %v413, %v429
  %v438 = vsel %vm422, %v414, %v430
  %v439 = vsel %vm423, %v415, %v431
  %v440 = vsel %vm424, %v416, %v432
  %v441 = vsel %vm425, %v417, %v433
  %442 = vst.msk [vmem:[%s5] sm:$0xff] %vm171, %v434
  %443 = vst.msk [vmem:[%s5 + $0x8] sm:$0xff] %vm171, %v435
  %444 = vst.msk [vmem:[%s5 + $0x10] sm:$0xff] %vm171, %v436
  %445 = vst.msk [vmem:[%s5 + $0x18] sm:$0xff] %vm171, %v437
  %446 = vst.msk [vmem:[%s5 + $0x20] sm:$0xff] %vm171, %v438
  %447 = vst.msk [vmem:[%s5 + $0x28] sm:$0xff] %vm171, %v439
  %448 = vst.msk [vmem:[%s5 + $0x30] sm:$0xff] %vm171, %v440
  %449 = vst.msk [vmem:[%s5 + $0x38] sm:$0xff] %vm171, %v441
  // Predicated region
  $region22: #{cvae_forward.18} parent=0 // pred_check
    _
  $region23: #{cvae_forward.18} parent=0 // pred_check_branch
    %451 = sbr.rel (0) target = $region25
  $region24: #{cvae_forward.18} parent=0 // pred_region
    _
  $region25: #{cvae_forward.18} parent=0 // pred_fallthru
    _
  // Predicated region
  $region26: #{cvae_forward.18} parent=0 // pred_check
    _
  $region27: #{cvae_forward.18} parent=0 // pred_check_branch
    %453 = sbr.rel (0) target = $region29
  $region28: #{cvae_forward.18} parent=0 // pred_region
    _
  $region29: #{cvae_forward.18} parent=0 // pred_fallthru
    _

// kernel: cvae_forward.19
$region0: #{cvae_forward.19}
  #allocation0 [shape = 'u32[]', space=smem, size = 0x4, offset = 0x4, fixed_abs, tag = 'smem constant byte address 0x4 - core index']
  #allocation1 [shape = 'u32[72,128]{1,0:T(1,128)}', space=vmem, size = 0x9000, scoped, tag = 'internal scratch']
  %s0 = inlined_call_operand.vmem [shape: bf16[128,64], index: 0, kind: input, shape index: {}]
  %s1 = inlined_call_operand.vmem [shape: bf16[64,32], index: 1, kind: input, shape index: {}]
  %s2 = inlined_call_operand.vmem [shape: f32[128,1], index: 2, kind: input, shape index: {}]
  %s3 = inlined_call_operand.vmem [shape: f32[128,1], index: 3, kind: input, shape index: {}]
  %s4 = inlined_call_operand.vmem [shape: f32[128,1], index: 4, kind: input, shape index: {}]
  %s5 = inlined_call_operand.vmem [shape: f32[128,32], index: 5, kind: output, shape index: {}]
  %s6 = sld [smem:[#allocation0]]
  $region30: #{cvae_forward.19} parent=0
    _
  %s8 = ssub.s32 1, %s6
  %s9 = scalar_select 0, %s8, %s6
  // Predicated region
  $region2: #{cvae_forward.19} parent=0 // pred_check
    _
  $region3: #{cvae_forward.19} parent=0 // pred_check_branch
    %11 = sbr.rel (0) target = $region5
  $region4: #{cvae_forward.19} parent=0 // pred_region
    _
  $region5: #{cvae_forward.19} parent=0 // pred_fallthru
    _
  // Predicated region
  $region6: #{cvae_forward.19} parent=0 // pred_check
    _
  $region7: #{cvae_forward.19} parent=0 // pred_check_branch
    %13 = sbr.rel (0) target = $region9
  $region8: #{cvae_forward.19} parent=0 // pred_region
    _
  $region9: #{cvae_forward.19} parent=0 // pred_fallthru
    _
  // Predicated region
  $region10: #{cvae_forward.19} parent=0 // pred_check
    _
  $region11: #{cvae_forward.19} parent=0 // pred_check_branch
    %15 = sbr.rel (0) target = $region13
  $region12: #{cvae_forward.19} parent=0 // pred_region
    _
  $region13: #{cvae_forward.19} parent=0 // pred_fallthru
    _
  // Predicated region
  $region14: #{cvae_forward.19} parent=0 // pred_check
    _
  $region15: #{cvae_forward.19} parent=0 // pred_check_branch
    %17 = sbr.rel (0) target = $region17
  $region16: #{cvae_forward.19} parent=0 // pred_region
    _
  $region17: #{cvae_forward.19} parent=0 // pred_fallthru
    _
  // Predicated region
  $region18: #{cvae_forward.19} parent=0 // pred_check
    _
  $region19: #{cvae_forward.19} parent=0 // pred_check_branch
    %19 = sbr.rel (0) target = $region21
  $region20: #{cvae_forward.19} parent=0 // pred_region
    _
  $region21: #{cvae_forward.19} parent=0 // pred_fallthru
    _
  %v21 = vld [vmem:[%s0] sm:$0xf]
  %v22 = vld [vmem:[%s0 + $0x4] sm:$0xf]
  %v23 = vld [vmem:[%s0 + $0x8] sm:$0xf]
  %v24 = vld [vmem:[%s0 + $0xc] sm:$0xf]
  %v25 = vld [vmem:[%s0 + $0x10] sm:$0xf]
  %v26 = vld [vmem:[%s0 + $0x14] sm:$0xf]
  %v27 = vld [vmem:[%s0 + $0x18] sm:$0xf]
  %v28 = vld [vmem:[%s0 + $0x1c] sm:$0xf]
  %v29 = vld [vmem:[%s0 + $0x20] sm:$0xf]
  %v30 = vld [vmem:[%s0 + $0x24] sm:$0xf]
  %v31 = vld [vmem:[%s0 + $0x28] sm:$0xf]
  %v32 = vld [vmem:[%s0 + $0x2c] sm:$0xf]
  %v33 = vld [vmem:[%s0 + $0x30] sm:$0xf]
  %v34 = vld [vmem:[%s0 + $0x34] sm:$0xf]
  %v35 = vld [vmem:[%s0 + $0x38] sm:$0xf]
  %v36 = vld [vmem:[%s0 + $0x3c] sm:$0xf]
  %v37 = vld [vmem:[%s1] sm:$0xf]
  %v38 = vld [vmem:[%s1 + $0x4] sm:$0xf]
  %v39 = vld [vmem:[%s1 + $0x8] sm:$0xf]
  %v40 = vld [vmem:[%s1 + $0xc] sm:$0xf]
  %v41 = vld [vmem:[%s1 + $0x10] sm:$0xf]
  %v42 = vld [vmem:[%s1 + $0x14] sm:$0xf]
  %v43 = vld [vmem:[%s1 + $0x18] sm:$0xf]
  %v44 = vld [vmem:[%s1 + $0x1c] sm:$0xf]
  %v45 = vld [vmem:[%s2] sm:$0xff]
  %v46 = vld [vmem:[%s2 + $0x8] sm:$0xff]
  %v47 = vld [vmem:[%s2 + $0x10] sm:$0xff]
  %v48 = vld [vmem:[%s2 + $0x18] sm:$0xff]
  %v49 = vld [vmem:[%s2 + $0x20] sm:$0xff]
  %v50 = vld [vmem:[%s2 + $0x28] sm:$0xff]
  %v51 = vld [vmem:[%s2 + $0x30] sm:$0xff]
  %v52 = vld [vmem:[%s2 + $0x38] sm:$0xff]
  %v53 = vld [vmem:[%s2 + $0x40] sm:$0xff]
  %v54 = vld [vmem:[%s2 + $0x48] sm:$0xff]
  %v55 = vld [vmem:[%s2 + $0x50] sm:$0xff]
  %v56 = vld [vmem:[%s2 + $0x58] sm:$0xff]
  %v57 = vld [vmem:[%s2 + $0x60] sm:$0xff]
  %v58 = vld [vmem:[%s2 + $0x68] sm:$0xff]
  %v59 = vld [vmem:[%s2 + $0x70] sm:$0xff]
  %v60 = vld [vmem:[%s2 + $0x78] sm:$0xff]
  %62 = vset.pattern.permute.xlu0 0
  %63 = vperm.xlu0 %62, %v45
  %v64 = vpop.permute.xlu0 %63
  %67 = vset.pattern.permute.xlu0 0
  %68 = vperm.xlu0 %67, %v46
  %v69 = vpop.permute.xlu0 %68
  %72 = vset.pattern.permute.xlu0 0
  %73 = vperm.xlu0 %72, %v47
  %v74 = vpop.permute.xlu0 %73
  %77 = vset.pattern.permute.xlu0 0
  %78 = vperm.xlu0 %77, %v48
  %v79 = vpop.permute.xlu0 %78
  %82 = vset.pattern.permute.xlu0 0
  %83 = vperm.xlu0 %82, %v49
  %v84 = vpop.permute.xlu0 %83
  %87 = vset.pattern.permute.xlu0 0
  %88 = vperm.xlu0 %87, %v50
  %v89 = vpop.permute.xlu0 %88
  %92 = vset.pattern.permute.xlu0 0
  %93 = vperm.xlu0 %92, %v51
  %v94 = vpop.permute.xlu0 %93
  %97 = vset.pattern.permute.xlu0 0
  %98 = vperm.xlu0 %97, %v52
  %v99 = vpop.permute.xlu0 %98
  %102 = vset.pattern.permute.xlu0 0
  %103 = vperm.xlu0 %102, %v53
  %v104 = vpop.permute.xlu0 %103
  %107 = vset.pattern.permute.xlu0 0
  %108 = vperm.xlu0 %107, %v54
  %v109 = vpop.permute.xlu0 %108
  %112 = vset.pattern.permute.xlu0 0
  %113 = vperm.xlu0 %112, %v55
  %v114 = vpop.permute.xlu0 %113
  %117 = vset.pattern.permute.xlu0 0
  %118 = vperm.xlu0 %117, %v56
  %v119 = vpop.permute.xlu0 %118
  %122 = vset.pattern.permute.xlu0 0
  %123 = vperm.xlu0 %122, %v57
  %v124 = vpop.permute.xlu0 %123
  %127 = vset.pattern.permute.xlu0 0
  %128 = vperm.xlu0 %127, %v58
  %v129 = vpop.permute.xlu0 %128
  %132 = vset.pattern.permute.xlu0 0
  %133 = vperm.xlu0 %132, %v59
  %v134 = vpop.permute.xlu0 %133
  %137 = vset.pattern.permute.xlu0 0
  %138 = vperm.xlu0 %137, %v60
  %v139 = vpop.permute.xlu0 %138
  %v157 = vunpack.c.l.b16 %v21
  %v158 = vunpack.c.l.b16 %v22
  %v159 = vunpack.c.l.b16 %v23
  %v160 = vunpack.c.l.b16 %v24
  %v161 = vunpack.c.l.b16 %v25
  %v162 = vunpack.c.l.b16 %v26
  %v163 = vunpack.c.l.b16 %v27
  %v164 = vunpack.c.l.b16 %v28
  %v165 = vunpack.c.l.b16 %v29
  %v166 = vunpack.c.l.b16 %v30
  %v167 = vunpack.c.l.b16 %v31
  %v168 = vunpack.c.l.b16 %v32
  %v169 = vunpack.c.l.b16 %v33
  %v170 = vunpack.c.l.b16 %v34
  %v171 = vunpack.c.l.b16 %v35
  %v172 = vunpack.c.l.b16 %v36
  %v173 = vpack.c.b16 %v158, %v157
  %v174 = vpack.c.b16 %v160, %v159
  %v175 = vpack.c.b16 %v162, %v161
  %v176 = vpack.c.b16 %v164, %v163
  %v177 = vpack.c.b16 %v166, %v165
  %v178 = vpack.c.b16 %v168, %v167
  %v179 = vpack.c.b16 %v170, %v169
  %v180 = vpack.c.b16 %v172, %v171
  %v189 = vunpack.c.l.b16 %v37
  %v190 = vunpack.c.l.b16 %v38
  %v191 = vunpack.c.l.b16 %v39
  %v192 = vunpack.c.l.b16 %v40
  %v193 = vunpack.c.l.b16 %v41
  %v194 = vunpack.c.l.b16 %v42
  %v195 = vunpack.c.l.b16 %v43
  %v196 = vunpack.c.l.b16 %v44
  %v197 = vpack.c.b16 %v190, %v189
  %v198 = vpack.c.b16 %v192, %v191
  %v199 = vpack.c.b16 %v194, %v193
  %v200 = vpack.c.b16 %v196, %v195
  %vm205 = vcmask 523264
  %v207 = vsel %vm205, %v173, 0
  %v210 = vsel %vm205, %v174, 0
  %v213 = vsel %vm205, %v175, 0
  %v216 = vsel %vm205, %v176, 0
  %v219 = vsel %vm205, %v177, 0
  %v222 = vsel %vm205, %v178, 0
  %v225 = vsel %vm205, %v179, 0
  %v228 = vsel %vm205, %v180, 0
  %230 = vmatpush.bf16.msra.mxu0 0
  %231 = vmatpush.bf16.msra.mxu0 0
  %232 = vmatpush.bf16.msra.mxu0 0
  %233 = vmatpush.bf16.msra.mxu0 0
  %234 = vmatpush.bf16.msra.mxu0 %v200
  %235 = vmatpush.bf16.msra.mxu0 %v199
  %236 = vmatpush.bf16.msra.mxu0 %v198
  %237 = vmatpush.bf16.msra.mxu0 %v197
  %238 = vmatmul.bf16.gmra.mxu0 %v207
  %v239 = vpop.f32.mrf.mxu0
  %v240 = vadd.f32 %v64, %v239
  %v241 = vpop.f32.mrf.mxu0
  %v242 = vadd.f32 %v69, %v241
  %243 = vmatmul.bf16.gmra.mxu0 %v210
  %v244 = vpop.f32.mrf.mxu0
  %v245 = vadd.f32 %v74, %v244
  %v246 = vpop.f32.mrf.mxu0
  %v247 = vadd.f32 %v79, %v246
  %248 = vmatmul.bf16.gmra.mxu0 %v213
  %v249 = vpop.f32.mrf.mxu0
  %v250 = vadd.f32 %v84, %v249
  %v251 = vpop.f32.mrf.mxu0
  %v252 = vadd.f32 %v89, %v251
  %253 = vmatmul.bf16.gmra.mxu0 %v216
  %v254 = vpop.f32.mrf.mxu0
  %v255 = vadd.f32 %v94, %v254
  %v256 = vpop.f32.mrf.mxu0
  %v257 = vadd.f32 %v99, %v256
  %258 = vmatmul.bf16.gmra.mxu0 %v219
  %v259 = vpop.f32.mrf.mxu0
  %v260 = vadd.f32 %v104, %v259
  %v261 = vpop.f32.mrf.mxu0
  %v262 = vadd.f32 %v109, %v261
  %263 = vmatmul.bf16.gmra.mxu0 %v222
  %v264 = vpop.f32.mrf.mxu0
  %v265 = vadd.f32 %v114, %v264
  %v266 = vpop.f32.mrf.mxu0
  %v267 = vadd.f32 %v119, %v266
  %268 = vmatmul.bf16.gmra.mxu0 %v225
  %v269 = vpop.f32.mrf.mxu0
  %v270 = vadd.f32 %v124, %v269
  %v271 = vpop.f32.mrf.mxu0
  %v272 = vadd.f32 %v129, %v271
  %273 = vmatmul.bf16.gmra.mxu0 %v228
  %v274 = vpop.f32.mrf.mxu0
  %v275 = vadd.f32 %v134, %v274
  %v276 = vpop.f32.mrf.mxu0
  %v277 = vadd.f32 %v139, %v276
  %278 = vdwg.mxu0
  %vm279 = vcmask 261120
  %v280 = vsel %vm279, %v240, 0.0
  %281 = vadd.xlane.f32.xlu0 %v280
  %v282 = vpop.xlane.xlu0 %281
  %v283 = vsel %vm279, %v242, 0.0
  %284 = vadd.xlane.f32.xlu0 %v283
  %v285 = vpop.xlane.xlu0 %284
  %v286 = vsel %vm279, %v245, 0.0
  %287 = vadd.xlane.f32.xlu0 %v286
  %v288 = vpop.xlane.xlu0 %287
  %v289 = vsel %vm279, %v247, 0.0
  %290 = vadd.xlane.f32.xlu0 %v289
  %v291 = vpop.xlane.xlu0 %290
  %v292 = vsel %vm279, %v250, 0.0
  %293 = vadd.xlane.f32.xlu0 %v292
  %v294 = vpop.xlane.xlu0 %293
  %v295 = vsel %vm279, %v252, 0.0
  %296 = vadd.xlane.f32.xlu0 %v295
  %v297 = vpop.xlane.xlu0 %296
  %v298 = vsel %vm279, %v255, 0.0
  %299 = vadd.xlane.f32.xlu0 %v298
  %v300 = vpop.xlane.xlu0 %299
  %v301 = vsel %vm279, %v257, 0.0
  %302 = vadd.xlane.f32.xlu0 %v301
  %v303 = vpop.xlane.xlu0 %302
  %v304 = vsel %vm279, %v260, 0.0
  %305 = vadd.xlane.f32.xlu0 %v304
  %v306 = vpop.xlane.xlu0 %305
  %v307 = vsel %vm279, %v262, 0.0
  %308 = vadd.xlane.f32.xlu0 %v307
  %v309 = vpop.xlane.xlu0 %308
  %v310 = vsel %vm279, %v265, 0.0
  %311 = vadd.xlane.f32.xlu0 %v310
  %v312 = vpop.xlane.xlu0 %311
  %v313 = vsel %vm279, %v267, 0.0
  %314 = vadd.xlane.f32.xlu0 %v313
  %v315 = vpop.xlane.xlu0 %314
  %v316 = vsel %vm279, %v270, 0.0
  %317 = vadd.xlane.f32.xlu0 %v316
  %v318 = vpop.xlane.xlu0 %317
  %v319 = vsel %vm279, %v272, 0.0
  %320 = vadd.xlane.f32.xlu0 %v319
  %v321 = vpop.xlane.xlu0 %320
  %v322 = vsel %vm279, %v275, 0.0
  %323 = vadd.xlane.f32.xlu0 %v322
  %v324 = vpop.xlane.xlu0 %323
  %v325 = vsel %vm279, %v277, 0.0
  %326 = vadd.xlane.f32.xlu0 %v325
  %v327 = vpop.xlane.xlu0 %326
  %v328 = vmul.f32 %v240, %v240
  %v329 = vmul.f32 %v242, %v242
  %v330 = vmul.f32 %v245, %v245
  %v331 = vmul.f32 %v247, %v247
  %v332 = vmul.f32 %v250, %v250
  %v333 = vmul.f32 %v252, %v252
  %v334 = vmul.f32 %v255, %v255
  %v335 = vmul.f32 %v257, %v257
  %v336 = vmul.f32 %v260, %v260
  %v337 = vmul.f32 %v262, %v262
  %v338 = vmul.f32 %v265, %v265
  %v339 = vmul.f32 %v267, %v267
  %v340 = vmul.f32 %v270, %v270
  %v341 = vmul.f32 %v272, %v272
  %v342 = vmul.f32 %v275, %v275
  %v343 = vmul.f32 %v277, %v277
  %v344 = vsel %vm279, %v328, 0.0
  %345 = vadd.xlane.f32.xlu0 %v344
  %v346 = vpop.xlane.xlu0 %345
  %v347 = vsel %vm279, %v329, 0.0
  %348 = vadd.xlane.f32.xlu0 %v347
  %v349 = vpop.xlane.xlu0 %348
  %v350 = vsel %vm279, %v330, 0.0
  %351 = vadd.xlane.f32.xlu0 %v350
  %v352 = vpop.xlane.xlu0 %351
  %v353 = vsel %vm279, %v331, 0.0
  %354 = vadd.xlane.f32.xlu0 %v353
  %v355 = vpop.xlane.xlu0 %354
  %v356 = vsel %vm279, %v332, 0.0
  %357 = vadd.xlane.f32.xlu0 %v356
  %v358 = vpop.xlane.xlu0 %357
  %v359 = vsel %vm279, %v333, 0.0
  %360 = vadd.xlane.f32.xlu0 %v359
  %v361 = vpop.xlane.xlu0 %360
  %v362 = vsel %vm279, %v334, 0.0
  %363 = vadd.xlane.f32.xlu0 %v362
  %v364 = vpop.xlane.xlu0 %363
  %v365 = vsel %vm279, %v335, 0.0
  %366 = vadd.xlane.f32.xlu0 %v365
  %v367 = vpop.xlane.xlu0 %366
  %v368 = vsel %vm279, %v336, 0.0
  %369 = vadd.xlane.f32.xlu0 %v368
  %v370 = vpop.xlane.xlu0 %369
  %v371 = vsel %vm279, %v337, 0.0
  %372 = vadd.xlane.f32.xlu0 %v371
  %v373 = vpop.xlane.xlu0 %372
  %v374 = vsel %vm279, %v338, 0.0
  %375 = vadd.xlane.f32.xlu0 %v374
  %v376 = vpop.xlane.xlu0 %375
  %v377 = vsel %vm279, %v339, 0.0
  %378 = vadd.xlane.f32.xlu0 %v377
  %v379 = vpop.xlane.xlu0 %378
  %v380 = vsel %vm279, %v340, 0.0
  %381 = vadd.xlane.f32.xlu0 %v380
  %v382 = vpop.xlane.xlu0 %381
  %v383 = vsel %vm279, %v341, 0.0
  %384 = vadd.xlane.f32.xlu0 %v383
  %v385 = vpop.xlane.xlu0 %384
  %v386 = vsel %vm279, %v342, 0.0
  %387 = vadd.xlane.f32.xlu0 %v386
  %v388 = vpop.xlane.xlu0 %387
  %v389 = vsel %vm279, %v343, 0.0
  %390 = vadd.xlane.f32.xlu0 %v389
  %v391 = vpop.xlane.xlu0 %390
  %v392 = vadd.f32 %v282, %v294
  %v393 = vadd.f32 %v285, %v297
  %v394 = vadd.f32 %v288, %v300
  %v395 = vadd.f32 %v291, %v303
  %v396 = vadd.f32 %v346, %v358
  %v397 = vadd.f32 %v349, %v361
  %v398 = vadd.f32 %v352, %v364
  %v399 = vadd.f32 %v355, %v367
  %v400 = vadd.f32 %v392, %v306
  %v401 = vadd.f32 %v393, %v309
  %v402 = vadd.f32 %v394, %v312
  %v403 = vadd.f32 %v395, %v315
  %v404 = vadd.f32 %v396, %v370
  %v405 = vadd.f32 %v397, %v373
  %v406 = vadd.f32 %v398, %v376
  %v407 = vadd.f32 %v399, %v379
  %v408 = vadd.f32 %v400, %v318
  %v409 = vadd.f32 %v401, %v321
  %v410 = vadd.f32 %v402, %v324
  %v411 = vadd.f32 %v403, %v327
  %v412 = vadd.f32 %v404, %v382
  %v413 = vadd.f32 %v405, %v385
  %v414 = vadd.f32 %v406, %v388
  %v415 = vadd.f32 %v407, %v391
  %v416 = vmul.f32 %v408, 0.0078125
  %v417 = vmul.f32 %v409, 0.0078125
  %v418 = vmul.f32 %v410, 0.0078125
  %v419 = vmul.f32 %v411, 0.0078125
  %v420 = vmul.f32 %v412, 0.0078125
  %v421 = vmul.f32 %v413, 0.0078125
  %v422 = vmul.f32 %v414, 0.0078125
  %v423 = vmul.f32 %v415, 0.0078125
  %v424 = vmul.f32 %v416, %v416
  %v425 = vmul.f32 %v417, %v417
  %v426 = vmul.f32 %v418, %v418
  %v427 = vmul.f32 %v419, %v419
  %v428 = vsub.f32 %v420, %v424
  %v429 = vsub.f32 %v421, %v425
  %v430 = vsub.f32 %v422, %v426
  %v431 = vsub.f32 %v423, %v427
  %433 = vset.pattern.permute.xlu0 0
  %434 = vperm.xlu0 %433, %v416
  %v435 = vpop.permute.xlu0 %434
  %438 = vset.pattern.permute.xlu0 0
  %439 = vperm.xlu0 %438, %v417
  %v440 = vpop.permute.xlu0 %439
  %443 = vset.pattern.permute.xlu0 0
  %444 = vperm.xlu0 %443, %v418
  %v445 = vpop.permute.xlu0 %444
  %448 = vset.pattern.permute.xlu0 0
  %449 = vperm.xlu0 %448, %v419
  %v450 = vpop.permute.xlu0 %449
  %v452 = vsub.f32 %v240, %v435
  %v453 = vsub.f32 %v242, %v440
  %v454 = vsub.f32 %v245, %v445
  %v455 = vsub.f32 %v247, %v450
  %v456 = vsub.f32 %v250, %v435
  %v457 = vsub.f32 %v252, %v440
  %v458 = vsub.f32 %v255, %v445
  %v459 = vsub.f32 %v257, %v450
  %v460 = vsub.f32 %v260, %v435
  %v461 = vsub.f32 %v262, %v440
  %v462 = vsub.f32 %v265, %v445
  %v463 = vsub.f32 %v267, %v450
  %v464 = vsub.f32 %v270, %v435
  %v465 = vsub.f32 %v272, %v440
  %v466 = vsub.f32 %v275, %v445
  %v467 = vsub.f32 %v277, %v450
  %v468 = vadd.f32 %v428, 1e-05
  %v469 = vadd.f32 %v429, 1e-05
  %v470 = vadd.f32 %v430, 1e-05
  %v471 = vadd.f32 %v431, 1e-05
  %v472 = vrsqrt.pop %v468
  %v473 = vmul.f32 %v472, %v468
  %v474 = vmul.f32 %v473, %v472
  %v475 = vmul.f32 0.5, %v474
  %v476 = vsub.f32 1.5, %v475
  %v477 = vmul.f32 %v472, %v476
  %vm478 = vweird.f32 %v468
  %vm479 = vweird.f32 %v472
  %vm480 = vmor %vm478, %vm479
  %v481 = vsel %vm480, %v472, %v477
  %v482 = vrsqrt.pop %v469
  %v483 = vmul.f32 %v482, %v469
  %v484 = vmul.f32 %v483, %v482
  %v485 = vmul.f32 0.5, %v484
  %v486 = vsub.f32 1.5, %v485
  %v487 = vmul.f32 %v482, %v486
  %vm488 = vweird.f32 %v469
  %vm489 = vweird.f32 %v482
  %vm490 = vmor %vm488, %vm489
  %v491 = vsel %vm490, %v482, %v487
  %v492 = vrsqrt.pop %v470
  %v493 = vmul.f32 %v492, %v470
  %v494 = vmul.f32 %v493, %v492
  %v495 = vmul.f32 0.5, %v494
  %v496 = vsub.f32 1.5, %v495
  %v497 = vmul.f32 %v492, %v496
  %vm498 = vweird.f32 %v470
  %vm499 = vweird.f32 %v492
  %vm500 = vmor %vm498, %vm499
  %v501 = vsel %vm500, %v492, %v497
  %v502 = vrsqrt.pop %v471
  %v503 = vmul.f32 %v502, %v471
  %v504 = vmul.f32 %v503, %v502
  %v505 = vmul.f32 0.5, %v504
  %v506 = vsub.f32 1.5, %v505
  %v507 = vmul.f32 %v502, %v506
  %vm508 = vweird.f32 %v471
  %vm509 = vweird.f32 %v502
  %vm510 = vmor %vm508, %vm509
  %v511 = vsel %vm510, %v502, %v507
  %513 = vset.pattern.permute.xlu0 0
  %514 = vperm.xlu0 %513, %v481
  %v515 = vpop.permute.xlu0 %514
  %518 = vset.pattern.permute.xlu0 0
  %519 = vperm.xlu0 %518, %v491
  %v520 = vpop.permute.xlu0 %519
  %523 = vset.pattern.permute.xlu0 0
  %524 = vperm.xlu0 %523, %v501
  %v525 = vpop.permute.xlu0 %524
  %528 = vset.pattern.permute.xlu0 0
  %529 = vperm.xlu0 %528, %v511
  %v530 = vpop.permute.xlu0 %529
  %v532 = vmul.f32 %v452, %v515
  %v533 = vmul.f32 %v453, %v520
  %v534 = vmul.f32 %v454, %v525
  %v535 = vmul.f32 %v455, %v530
  %v536 = vmul.f32 %v456, %v515
  %v537 = vmul.f32 %v457, %v520
  %v538 = vmul.f32 %v458, %v525
  %v539 = vmul.f32 %v459, %v530
  %v540 = vmul.f32 %v460, %v515
  %v541 = vmul.f32 %v461, %v520
  %v542 = vmul.f32 %v462, %v525
  %v543 = vmul.f32 %v463, %v530
  %v544 = vmul.f32 %v464, %v515
  %v545 = vmul.f32 %v465, %v520
  %v546 = vmul.f32 %v466, %v525
  %v547 = vmul.f32 %v467, %v530
  %v548 = vld [vmem:[%s3] sm:$0xff]
  %v549 = vld [vmem:[%s3 + $0x8] sm:$0xff]
  %v550 = vld [vmem:[%s3 + $0x10] sm:$0xff]
  %v551 = vld [vmem:[%s3 + $0x18] sm:$0xff]
  %v552 = vld [vmem:[%s3 + $0x20] sm:$0xff]
  %v553 = vld [vmem:[%s3 + $0x28] sm:$0xff]
  %v554 = vld [vmem:[%s3 + $0x30] sm:$0xff]
  %v555 = vld [vmem:[%s3 + $0x38] sm:$0xff]
  %v556 = vld [vmem:[%s3 + $0x40] sm:$0xff]
  %v557 = vld [vmem:[%s3 + $0x48] sm:$0xff]
  %v558 = vld [vmem:[%s3 + $0x50] sm:$0xff]
  %v559 = vld [vmem:[%s3 + $0x58] sm:$0xff]
  %v560 = vld [vmem:[%s3 + $0x60] sm:$0xff]
  %v561 = vld [vmem:[%s3 + $0x68] sm:$0xff]
  %v562 = vld [vmem:[%s3 + $0x70] sm:$0xff]
  %v563 = vld [vmem:[%s3 + $0x78] sm:$0xff]
  %565 = vset.pattern.permute.xlu0 0
  %566 = vperm.xlu0 %565, %v548
  %v567 = vpop.permute.xlu0 %566
  %570 = vset.pattern.permute.xlu0 0
  %571 = vperm.xlu0 %570, %v549
  %v572 = vpop.permute.xlu0 %571
  %575 = vset.pattern.permute.xlu0 0
  %576 = vperm.xlu0 %575, %v550
  %v577 = vpop.permute.xlu0 %576
  %580 = vset.pattern.permute.xlu0 0
  %581 = vperm.xlu0 %580, %v551
  %v582 = vpop.permute.xlu0 %581
  %585 = vset.pattern.permute.xlu0 0
  %586 = vperm.xlu0 %585, %v552
  %v587 = vpop.permute.xlu0 %586
  %590 = vset.pattern.permute.xlu0 0
  %591 = vperm.xlu0 %590, %v553
  %v592 = vpop.permute.xlu0 %591
  %595 = vset.pattern.permute.xlu0 0
  %596 = vperm.xlu0 %595, %v554
  %v597 = vpop.permute.xlu0 %596
  %600 = vset.pattern.permute.xlu0 0
  %601 = vperm.xlu0 %600, %v555
  %v602 = vpop.permute.xlu0 %601
  %605 = vset.pattern.permute.xlu0 0
  %606 = vperm.xlu0 %605, %v556
  %v607 = vpop.permute.xlu0 %606
  %610 = vset.pattern.permute.xlu0 0
  %611 = vperm.xlu0 %610, %v557
  %v612 = vpop.permute.xlu0 %611
  %615 = vset.pattern.permute.xlu0 0
  %616 = vperm.xlu0 %615, %v558
  %v617 = vpop.permute.xlu0 %616
  %620 = vset.pattern.permute.xlu0 0
  %621 = vperm.xlu0 %620, %v559
  %v622 = vpop.permute.xlu0 %621
  %625 = vset.pattern.permute.xlu0 0
  %626 = vperm.xlu0 %625, %v560
  %v627 = vpop.permute.xlu0 %626
  %630 = vset.pattern.permute.xlu0 0
  %631 = vperm.xlu0 %630, %v561
  %v632 = vpop.permute.xlu0 %631
  %635 = vset.pattern.permute.xlu0 0
  %636 = vperm.xlu0 %635, %v562
  %v637 = vpop.permute.xlu0 %636
  %640 = vset.pattern.permute.xlu0 0
  %641 = vperm.xlu0 %640, %v563
  %v642 = vpop.permute.xlu0 %641
  %v644 = vmul.f32 %v532, %v567
  %v645 = vmul.f32 %v533, %v572
  %v646 = vmul.f32 %v534, %v577
  %v647 = vmul.f32 %v535, %v582
  %v648 = vmul.f32 %v536, %v587
  %v649 = vmul.f32 %v537, %v592
  %v650 = vmul.f32 %v538, %v597
  %v651 = vmul.f32 %v539, %v602
  %v652 = vmul.f32 %v540, %v607
  %v653 = vmul.f32 %v541, %v612
  %v654 = vmul.f32 %v542, %v617
  %v655 = vmul.f32 %v543, %v622
  %v656 = vmul.f32 %v544, %v627
  %v657 = vmul.f32 %v545, %v632
  %v658 = vmul.f32 %v546, %v637
  %v659 = vmul.f32 %v547, %v642
  %v660 = vld [vmem:[%s4] sm:$0xff]
  %v661 = vld [vmem:[%s4 + $0x8] sm:$0xff]
  %v662 = vld [vmem:[%s4 + $0x10] sm:$0xff]
  %v663 = vld [vmem:[%s4 + $0x18] sm:$0xff]
  %v664 = vld [vmem:[%s4 + $0x20] sm:$0xff]
  %v665 = vld [vmem:[%s4 + $0x28] sm:$0xff]
  %v666 = vld [vmem:[%s4 + $0x30] sm:$0xff]
  %v667 = vld [vmem:[%s4 + $0x38] sm:$0xff]
  %v668 = vld [vmem:[%s4 + $0x40] sm:$0xff]
  %v669 = vld [vmem:[%s4 + $0x48] sm:$0xff]
  %v670 = vld [vmem:[%s4 + $0x50] sm:$0xff]
  %v671 = vld [vmem:[%s4 + $0x58] sm:$0xff]
  %v672 = vld [vmem:[%s4 + $0x60] sm:$0xff]
  %v673 = vld [vmem:[%s4 + $0x68] sm:$0xff]
  %v674 = vld [vmem:[%s4 + $0x70] sm:$0xff]
  %v675 = vld [vmem:[%s4 + $0x78] sm:$0xff]
  %677 = vset.pattern.permute.xlu0 0
  %678 = vperm.xlu0 %677, %v660
  %v679 = vpop.permute.xlu0 %678
  %682 = vset.pattern.permute.xlu0 0
  %683 = vperm.xlu0 %682, %v661
  %v684 = vpop.permute.xlu0 %683
  %687 = vset.pattern.permute.xlu0 0
  %688 = vperm.xlu0 %687, %v662
  %v689 = vpop.permute.xlu0 %688
  %692 = vset.pattern.permute.xlu0 0
  %693 = vperm.xlu0 %692, %v663
  %v694 = vpop.permute.xlu0 %693
  %697 = vset.pattern.permute.xlu0 0
  %698 = vperm.xlu0 %697, %v664
  %v699 = vpop.permute.xlu0 %698
  %702 = vset.pattern.permute.xlu0 0
  %703 = vperm.xlu0 %702, %v665
  %v704 = vpop.permute.xlu0 %703
  %707 = vset.pattern.permute.xlu0 0
  %708 = vperm.xlu0 %707, %v666
  %v709 = vpop.permute.xlu0 %708
  %712 = vset.pattern.permute.xlu0 0
  %713 = vperm.xlu0 %712, %v667
  %v714 = vpop.permute.xlu0 %713
  %717 = vset.pattern.permute.xlu0 0
  %718 = vperm.xlu0 %717, %v668
  %v719 = vpop.permute.xlu0 %718
  %722 = vset.pattern.permute.xlu0 0
  %723 = vperm.xlu0 %722, %v669
  %v724 = vpop.permute.xlu0 %723
  %727 = vset.pattern.permute.xlu0 0
  %728 = vperm.xlu0 %727, %v670
  %v729 = vpop.permute.xlu0 %728
  %732 = vset.pattern.permute.xlu0 0
  %733 = vperm.xlu0 %732, %v671
  %v734 = vpop.permute.xlu0 %733
  %737 = vset.pattern.permute.xlu0 0
  %738 = vperm.xlu0 %737, %v672
  %v739 = vpop.permute.xlu0 %738
  %742 = vset.pattern.permute.xlu0 0
  %743 = vperm.xlu0 %742, %v673
  %v744 = vpop.permute.xlu0 %743
  %747 = vset.pattern.permute.xlu0 0
  %748 = vperm.xlu0 %747, %v674
  %v749 = vpop.permute.xlu0 %748
  %752 = vset.pattern.permute.xlu0 0
  %753 = vperm.xlu0 %752, %v675
  %v754 = vpop.permute.xlu0 %753
  %v756 = vadd.f32 %v644, %v679
  %v757 = vadd.f32 %v645, %v684
  %v758 = vadd.f32 %v646, %v689
  %v759 = vadd.f32 %v647, %v694
  %v760 = vadd.f32 %v648, %v699
  %v761 = vadd.f32 %v649, %v704
  %v762 = vadd.f32 %v650, %v709
  %v763 = vadd.f32 %v651, %v714
  %v764 = vadd.f32 %v652, %v719
  %v765 = vadd.f32 %v653, %v724
  %v766 = vadd.f32 %v654, %v729
  %v767 = vadd.f32 %v655, %v734
  %v768 = vadd.f32 %v656, %v739
  %v769 = vadd.f32 %v657, %v744
  %v770 = vadd.f32 %v658, %v749
  %v771 = vadd.f32 %v659, %v754
  %vm772 = vcmp.ge.f32.partialorder %v756, 0.0
  %vm773 = vcmp.ge.f32.partialorder %v757, 0.0
  %vm774 = vcmp.ge.f32.partialorder %v758, 0.0
  %vm775 = vcmp.ge.f32.partialorder %v759, 0.0
  %vm776 = vcmp.ge.f32.partialorder %v760, 0.0
  %vm777 = vcmp.ge.f32.partialorder %v761, 0.0
  %vm778 = vcmp.ge.f32.partialorder %v762, 0.0
  %vm779 = vcmp.ge.f32.partialorder %v763, 0.0
  %vm780 = vcmp.ge.f32.partialorder %v764, 0.0
  %vm781 = vcmp.ge.f32.partialorder %v765, 0.0
  %vm782 = vcmp.ge.f32.partialorder %v766, 0.0
  %vm783 = vcmp.ge.f32.partialorder %v767, 0.0
  %vm784 = vcmp.ge.f32.partialorder %v768, 0.0
  %vm785 = vcmp.ge.f32.partialorder %v769, 0.0
  %vm786 = vcmp.ge.f32.partialorder %v770, 0.0
  %vm787 = vcmp.ge.f32.partialorder %v771, 0.0
  %v788 = vmul.f32 %v756, 0.01
  %v789 = vmul.f32 %v757, 0.01
  %v790 = vmul.f32 %v758, 0.01
  %v791 = vmul.f32 %v759, 0.01
  %v792 = vmul.f32 %v760, 0.01
  %v793 = vmul.f32 %v761, 0.01
  %v794 = vmul.f32 %v762, 0.01
  %v795 = vmul.f32 %v763, 0.01
  %v796 = vmul.f32 %v764, 0.01
  %v797 = vmul.f32 %v765, 0.01
  %v798 = vmul.f32 %v766, 0.01
  %v799 = vmul.f32 %v767, 0.01
  %v800 = vmul.f32 %v768, 0.01
  %v801 = vmul.f32 %v769, 0.01
  %v802 = vmul.f32 %v770, 0.01
  %v803 = vmul.f32 %v771, 0.01
  %v804 = vsel %vm772, %v756, %v788
  %v805 = vsel %vm773, %v757, %v789
  %v806 = vsel %vm774, %v758, %v790
  %v807 = vsel %vm775, %v759, %v791
  %v808 = vsel %vm776, %v760, %v792
  %v809 = vsel %vm777, %v761, %v793
  %v810 = vsel %vm778, %v762, %v794
  %v811 = vsel %vm779, %v763, %v795
  %v812 = vsel %vm780, %v764, %v796
  %v813 = vsel %vm781, %v765, %v797
  %v814 = vsel %vm782, %v766, %v798
  %v815 = vsel %vm783, %v767, %v799
  %v816 = vsel %vm784, %v768, %v800
  %v817 = vsel %vm785, %v769, %v801
  %v818 = vsel %vm786, %v770, %v802
  %v819 = vsel %vm787, %v771, %v803
  %820 = vst.msk [vmem:[%s5] sm:$0xff] %vm279, %v804
  %821 = vst.msk [vmem:[%s5 + $0x8] sm:$0xff] %vm279, %v805
  %822 = vst.msk [vmem:[%s5 + $0x10] sm:$0xff] %vm279, %v806
  %823 = vst.msk [vmem:[%s5 + $0x18] sm:$0xff] %vm279, %v807
  %824 = vst.msk [vmem:[%s5 + $0x20] sm:$0xff] %vm279, %v808
  %825 = vst.msk [vmem:[%s5 + $0x28] sm:$0xff] %vm279, %v809
  %826 = vst.msk [vmem:[%s5 + $0x30] sm:$0xff] %vm279, %v810
  %827 = vst.msk [vmem:[%s5 + $0x38] sm:$0xff] %vm279, %v811
  %828 = vst.msk [vmem:[%s5 + $0x40] sm:$0xff] %vm279, %v812
  %829 = vst.msk [vmem:[%s5 + $0x48] sm:$0xff] %vm279, %v813
  %830 = vst.msk [vmem:[%s5 + $0x50] sm:$0xff] %vm279, %v814
  %831 = vst.msk [vmem:[%s5 + $0x58] sm:$0xff] %vm279, %v815
  %832 = vst.msk [vmem:[%s5 + $0x60] sm:$0xff] %vm279, %v816
  %833 = vst.msk [vmem:[%s5 + $0x68] sm:$0xff] %vm279, %v817
  %834 = vst.msk [vmem:[%s5 + $0x70] sm:$0xff] %vm279, %v818
  %835 = vst.msk [vmem:[%s5 + $0x78] sm:$0xff] %vm279, %v819
  // Predicated region
  $region22: #{cvae_forward.19} parent=0 // pred_check
    _
  $region23: #{cvae_forward.19} parent=0 // pred_check_branch
    %837 = sbr.rel (0) target = $region25
  $region24: #{cvae_forward.19} parent=0 // pred_region
    _
  $region25: #{cvae_forward.19} parent=0 // pred_fallthru
    _
  // Predicated region
  $region26: #{cvae_forward.19} parent=0 // pred_check
    _
  $region27: #{cvae_forward.19} parent=0 // pred_check_branch
    %839 = sbr.rel (0) target = $region29
  $region28: #{cvae_forward.19} parent=0 // pred_region
    _
  $region29: #{cvae_forward.19} parent=0 // pred_fallthru
    _

// kernel: cvae_forward.20
$region0: #{cvae_forward.20}
  #allocation0 [shape = 'u32[]', space=smem, size = 0x4, offset = 0x4, fixed_abs, tag = 'smem constant byte address 0x4 - core index']
  #allocation1 [shape = 'u32[72,128]{1,0:T(1,128)}', space=vmem, size = 0x9000, scoped, tag = 'internal scratch']
  %s0 = inlined_call_operand.vmem [shape: bf16[128,128], index: 0, kind: input, shape index: {}]
  %s1 = inlined_call_operand.vmem [shape: bf16[128,128], index: 1, kind: input, shape index: {}]
  %s2 = inlined_call_operand.vmem [shape: f32[128,1], index: 2, kind: input, shape index: {}]
  %s3 = inlined_call_operand.vmem [shape: f32[128,1], index: 3, kind: input, shape index: {}]
  %s4 = inlined_call_operand.vmem [shape: f32[128,1], index: 4, kind: input, shape index: {}]
  %s5 = inlined_call_operand.vmem [shape: f32[128,128], index: 5, kind: output, shape index: {}]
  %s6 = sld [smem:[#allocation0]]
  $region30: #{cvae_forward.20} parent=0
    _
  %s8 = ssub.s32 1, %s6
  %s9 = scalar_select 0, %s8, %s6
  // Predicated region
  $region2: #{cvae_forward.20} parent=0 // pred_check
    _
  $region3: #{cvae_forward.20} parent=0 // pred_check_branch
    %11 = sbr.rel (0) target = $region5
  $region4: #{cvae_forward.20} parent=0 // pred_region
    _
  $region5: #{cvae_forward.20} parent=0 // pred_fallthru
    _
  // Predicated region
  $region6: #{cvae_forward.20} parent=0 // pred_check
    _
  $region7: #{cvae_forward.20} parent=0 // pred_check_branch
    %13 = sbr.rel (0) target = $region9
  $region8: #{cvae_forward.20} parent=0 // pred_region
    _
  $region9: #{cvae_forward.20} parent=0 // pred_fallthru
    _
  // Predicated region
  $region10: #{cvae_forward.20} parent=0 // pred_check
    _
  $region11: #{cvae_forward.20} parent=0 // pred_check_branch
    %15 = sbr.rel (0) target = $region13
  $region12: #{cvae_forward.20} parent=0 // pred_region
    _
  $region13: #{cvae_forward.20} parent=0 // pred_fallthru
    _
  // Predicated region
  $region14: #{cvae_forward.20} parent=0 // pred_check
    _
  $region15: #{cvae_forward.20} parent=0 // pred_check_branch
    %17 = sbr.rel (0) target = $region17
  $region16: #{cvae_forward.20} parent=0 // pred_region
    _
  $region17: #{cvae_forward.20} parent=0 // pred_fallthru
    _
  // Predicated region
  $region18: #{cvae_forward.20} parent=0 // pred_check
    _
  $region19: #{cvae_forward.20} parent=0 // pred_check_branch
    %19 = sbr.rel (0) target = $region21
  $region20: #{cvae_forward.20} parent=0 // pred_region
    _
  $region21: #{cvae_forward.20} parent=0 // pred_fallthru
    _
  %v20 = vld [vmem:[%s0] sm:$0xf]
  %v21 = vld [vmem:[%s0 + $0x4] sm:$0xf]
  %v22 = vld [vmem:[%s0 + $0x8] sm:$0xf]
  %v23 = vld [vmem:[%s0 + $0xc] sm:$0xf]
  %v24 = vld [vmem:[%s0 + $0x10] sm:$0xf]
  %v25 = vld [vmem:[%s0 + $0x14] sm:$0xf]
  %v26 = vld [vmem:[%s0 + $0x18] sm:$0xf]
  %v27 = vld [vmem:[%s0 + $0x1c] sm:$0xf]
  %v28 = vld [vmem:[%s0 + $0x20] sm:$0xf]
  %v29 = vld [vmem:[%s0 + $0x24] sm:$0xf]
  %v30 = vld [vmem:[%s0 + $0x28] sm:$0xf]
  %v31 = vld [vmem:[%s0 + $0x2c] sm:$0xf]
  %v32 = vld [vmem:[%s0 + $0x30] sm:$0xf]
  %v33 = vld [vmem:[%s0 + $0x34] sm:$0xf]
  %v34 = vld [vmem:[%s0 + $0x38] sm:$0xf]
  %v35 = vld [vmem:[%s0 + $0x3c] sm:$0xf]
  %v36 = vld [vmem:[%s1] sm:$0xf]
  %v37 = vld [vmem:[%s1 + $0x4] sm:$0xf]
  %v38 = vld [vmem:[%s1 + $0x8] sm:$0xf]
  %v39 = vld [vmem:[%s1 + $0xc] sm:$0xf]
  %v40 = vld [vmem:[%s1 + $0x10] sm:$0xf]
  %v41 = vld [vmem:[%s1 + $0x14] sm:$0xf]
  %v42 = vld [vmem:[%s1 + $0x18] sm:$0xf]
  %v43 = vld [vmem:[%s1 + $0x1c] sm:$0xf]
  %v44 = vld [vmem:[%s1 + $0x20] sm:$0xf]
  %v45 = vld [vmem:[%s1 + $0x24] sm:$0xf]
  %v46 = vld [vmem:[%s1 + $0x28] sm:$0xf]
  %v47 = vld [vmem:[%s1 + $0x2c] sm:$0xf]
  %v48 = vld [vmem:[%s1 + $0x30] sm:$0xf]
  %v49 = vld [vmem:[%s1 + $0x34] sm:$0xf]
  %v50 = vld [vmem:[%s1 + $0x38] sm:$0xf]
  %v51 = vld [vmem:[%s1 + $0x3c] sm:$0xf]
  %v52 = vld [vmem:[%s2] sm:$0xff]
  %v53 = vld [vmem:[%s2 + $0x8] sm:$0xff]
  %v54 = vld [vmem:[%s2 + $0x10] sm:$0xff]
  %v55 = vld [vmem:[%s2 + $0x18] sm:$0xff]
  %v56 = vld [vmem:[%s2 + $0x20] sm:$0xff]
  %v57 = vld [vmem:[%s2 + $0x28] sm:$0xff]
  %v58 = vld [vmem:[%s2 + $0x30] sm:$0xff]
  %v59 = vld [vmem:[%s2 + $0x38] sm:$0xff]
  %v60 = vld [vmem:[%s2 + $0x40] sm:$0xff]
  %v61 = vld [vmem:[%s2 + $0x48] sm:$0xff]
  %v62 = vld [vmem:[%s2 + $0x50] sm:$0xff]
  %v63 = vld [vmem:[%s2 + $0x58] sm:$0xff]
  %v64 = vld [vmem:[%s2 + $0x60] sm:$0xff]
  %v65 = vld [vmem:[%s2 + $0x68] sm:$0xff]
  %v66 = vld [vmem:[%s2 + $0x70] sm:$0xff]
  %v67 = vld [vmem:[%s2 + $0x78] sm:$0xff]
  %69 = vset.pattern.permute.xlu0 0
  %70 = vperm.xlu0 %69, %v52
  %v71 = vpop.permute.xlu0 %70
  %74 = vset.pattern.permute.xlu0 0
  %75 = vperm.xlu0 %74, %v53
  %v76 = vpop.permute.xlu0 %75
  %79 = vset.pattern.permute.xlu0 0
  %80 = vperm.xlu0 %79, %v54
  %v81 = vpop.permute.xlu0 %80
  %84 = vset.pattern.permute.xlu0 0
  %85 = vperm.xlu0 %84, %v55
  %v86 = vpop.permute.xlu0 %85
  %89 = vset.pattern.permute.xlu0 0
  %90 = vperm.xlu0 %89, %v56
  %v91 = vpop.permute.xlu0 %90
  %94 = vset.pattern.permute.xlu0 0
  %95 = vperm.xlu0 %94, %v57
  %v96 = vpop.permute.xlu0 %95
  %99 = vset.pattern.permute.xlu0 0
  %100 = vperm.xlu0 %99, %v58
  %v101 = vpop.permute.xlu0 %100
  %104 = vset.pattern.permute.xlu0 0
  %105 = vperm.xlu0 %104, %v59
  %v106 = vpop.permute.xlu0 %105
  %109 = vset.pattern.permute.xlu0 0
  %110 = vperm.xlu0 %109, %v60
  %v111 = vpop.permute.xlu0 %110
  %114 = vset.pattern.permute.xlu0 0
  %115 = vperm.xlu0 %114, %v61
  %v116 = vpop.permute.xlu0 %115
  %119 = vset.pattern.permute.xlu0 0
  %120 = vperm.xlu0 %119, %v62
  %v121 = vpop.permute.xlu0 %120
  %124 = vset.pattern.permute.xlu0 0
  %125 = vperm.xlu0 %124, %v63
  %v126 = vpop.permute.xlu0 %125
  %129 = vset.pattern.permute.xlu0 0
  %130 = vperm.xlu0 %129, %v64
  %v131 = vpop.permute.xlu0 %130
  %134 = vset.pattern.permute.xlu0 0
  %135 = vperm.xlu0 %134, %v65
  %v136 = vpop.permute.xlu0 %135
  %139 = vset.pattern.permute.xlu0 0
  %140 = vperm.xlu0 %139, %v66
  %v141 = vpop.permute.xlu0 %140
  %144 = vset.pattern.permute.xlu0 0
  %145 = vperm.xlu0 %144, %v67
  %v146 = vpop.permute.xlu0 %145
  %v164 = vunpack.c.l.b16 %v20
  %v165 = vunpack.c.l.b16 %v21
  %v166 = vunpack.c.l.b16 %v22
  %v167 = vunpack.c.l.b16 %v23
  %v168 = vunpack.c.l.b16 %v24
  %v169 = vunpack.c.l.b16 %v25
  %v170 = vunpack.c.l.b16 %v26
  %v171 = vunpack.c.l.b16 %v27
  %v172 = vunpack.c.l.b16 %v28
  %v173 = vunpack.c.l.b16 %v29
  %v174 = vunpack.c.l.b16 %v30
  %v175 = vunpack.c.l.b16 %v31
  %v176 = vunpack.c.l.b16 %v32
  %v177 = vunpack.c.l.b16 %v33
  %v178 = vunpack.c.l.b16 %v34
  %v179 = vunpack.c.l.b16 %v35
  %v180 = vpack.c.b16 %v165, %v164
  %v181 = vpack.c.b16 %v167, %v166
  %v182 = vpack.c.b16 %v169, %v168
  %v183 = vpack.c.b16 %v171, %v170
  %v184 = vpack.c.b16 %v173, %v172
  %v185 = vpack.c.b16 %v175, %v174
  %v186 = vpack.c.b16 %v177, %v176
  %v187 = vpack.c.b16 %v179, %v178
  %v212 = vunpack.c.l.b16 %v36
  %v213 = vunpack.c.l.b16 %v37
  %v214 = vunpack.c.l.b16 %v38
  %v215 = vunpack.c.l.b16 %v39
  %v216 = vunpack.c.l.b16 %v40
  %v217 = vunpack.c.l.b16 %v41
  %v218 = vunpack.c.l.b16 %v42
  %v219 = vunpack.c.l.b16 %v43
  %v220 = vunpack.c.l.b16 %v44
  %v221 = vunpack.c.l.b16 %v45
  %v222 = vunpack.c.l.b16 %v46
  %v223 = vunpack.c.l.b16 %v47
  %v224 = vunpack.c.l.b16 %v48
  %v225 = vunpack.c.l.b16 %v49
  %v226 = vunpack.c.l.b16 %v50
  %v227 = vunpack.c.l.b16 %v51
  %v228 = vpack.c.b16 %v213, %v212
  %v229 = vpack.c.b16 %v215, %v214
  %v230 = vpack.c.b16 %v217, %v216
  %v231 = vpack.c.b16 %v219, %v218
  %v232 = vpack.c.b16 %v221, %v220
  %v233 = vpack.c.b16 %v223, %v222
  %v234 = vpack.c.b16 %v225, %v224
  %v235 = vpack.c.b16 %v227, %v226
  %244 = vmatpush.bf16.msra.mxu0 %v235
  %245 = vmatpush.bf16.msra.mxu0 %v234
  %246 = vmatpush.bf16.msra.mxu0 %v233
  %247 = vmatpush.bf16.msra.mxu0 %v232
  %248 = vmatpush.bf16.msra.mxu0 %v231
  %249 = vmatpush.bf16.msra.mxu0 %v230
  %250 = vmatpush.bf16.msra.mxu0 %v229
  %251 = vmatpush.bf16.msra.mxu0 %v228
  %252 = vmatmul.bf16.gmra.mxu0 %v180
  %v253 = vpop.f32.mrf.mxu0
  %v254 = vadd.f32 %v71, %v253
  %v255 = vpop.f32.mrf.mxu0
  %v256 = vadd.f32 %v76, %v255
  %257 = vmatmul.bf16.gmra.mxu0 %v181
  %v258 = vpop.f32.mrf.mxu0
  %v259 = vadd.f32 %v81, %v258
  %v260 = vpop.f32.mrf.mxu0
  %v261 = vadd.f32 %v86, %v260
  %262 = vmatmul.bf16.gmra.mxu0 %v182
  %v263 = vpop.f32.mrf.mxu0
  %v264 = vadd.f32 %v91, %v263
  %v265 = vpop.f32.mrf.mxu0
  %v266 = vadd.f32 %v96, %v265
  %267 = vmatmul.bf16.gmra.mxu0 %v183
  %v268 = vpop.f32.mrf.mxu0
  %v269 = vadd.f32 %v101, %v268
  %v270 = vpop.f32.mrf.mxu0
  %v271 = vadd.f32 %v106, %v270
  %272 = vmatmul.bf16.gmra.mxu0 %v184
  %v273 = vpop.f32.mrf.mxu0
  %v274 = vadd.f32 %v111, %v273
  %v275 = vpop.f32.mrf.mxu0
  %v276 = vadd.f32 %v116, %v275
  %277 = vmatmul.bf16.gmra.mxu0 %v185
  %v278 = vpop.f32.mrf.mxu0
  %v279 = vadd.f32 %v121, %v278
  %v280 = vpop.f32.mrf.mxu0
  %v281 = vadd.f32 %v126, %v280
  %282 = vmatmul.bf16.gmra.mxu0 %v186
  %v283 = vpop.f32.mrf.mxu0
  %v284 = vadd.f32 %v131, %v283
  %v285 = vpop.f32.mrf.mxu0
  %v286 = vadd.f32 %v136, %v285
  %287 = vmatmul.bf16.gmra.mxu0 %v187
  %v288 = vpop.f32.mrf.mxu0
  %v289 = vadd.f32 %v141, %v288
  %v290 = vpop.f32.mrf.mxu0
  %v291 = vadd.f32 %v146, %v290
  %292 = vdwg.mxu0
  %293 = vadd.xlane.f32.xlu0 %v254
  %v294 = vpop.xlane.xlu0 %293
  %295 = vadd.xlane.f32.xlu0 %v256
  %v296 = vpop.xlane.xlu0 %295
  %297 = vadd.xlane.f32.xlu0 %v259
  %v298 = vpop.xlane.xlu0 %297
  %299 = vadd.xlane.f32.xlu0 %v261
  %v300 = vpop.xlane.xlu0 %299
  %301 = vadd.xlane.f32.xlu0 %v264
  %v302 = vpop.xlane.xlu0 %301
  %303 = vadd.xlane.f32.xlu0 %v266
  %v304 = vpop.xlane.xlu0 %303
  %305 = vadd.xlane.f32.xlu0 %v269
  %v306 = vpop.xlane.xlu0 %305
  %307 = vadd.xlane.f32.xlu0 %v271
  %v308 = vpop.xlane.xlu0 %307
  %309 = vadd.xlane.f32.xlu0 %v274
  %v310 = vpop.xlane.xlu0 %309
  %311 = vadd.xlane.f32.xlu0 %v276
  %v312 = vpop.xlane.xlu0 %311
  %313 = vadd.xlane.f32.xlu0 %v279
  %v314 = vpop.xlane.xlu0 %313
  %315 = vadd.xlane.f32.xlu0 %v281
  %v316 = vpop.xlane.xlu0 %315
  %317 = vadd.xlane.f32.xlu0 %v284
  %v318 = vpop.xlane.xlu0 %317
  %319 = vadd.xlane.f32.xlu0 %v286
  %v320 = vpop.xlane.xlu0 %319
  %321 = vadd.xlane.f32.xlu0 %v289
  %v322 = vpop.xlane.xlu0 %321
  %323 = vadd.xlane.f32.xlu0 %v291
  %v324 = vpop.xlane.xlu0 %323
  %v325 = vmul.f32 %v254, %v254
  %v326 = vmul.f32 %v256, %v256
  %v327 = vmul.f32 %v259, %v259
  %v328 = vmul.f32 %v261, %v261
  %v329 = vmul.f32 %v264, %v264
  %v330 = vmul.f32 %v266, %v266
  %v331 = vmul.f32 %v269, %v269
  %v332 = vmul.f32 %v271, %v271
  %v333 = vmul.f32 %v274, %v274
  %v334 = vmul.f32 %v276, %v276
  %v335 = vmul.f32 %v279, %v279
  %v336 = vmul.f32 %v281, %v281
  %v337 = vmul.f32 %v284, %v284
  %v338 = vmul.f32 %v286, %v286
  %v339 = vmul.f32 %v289, %v289
  %v340 = vmul.f32 %v291, %v291
  %341 = vadd.xlane.f32.xlu0 %v325
  %v342 = vpop.xlane.xlu0 %341
  %343 = vadd.xlane.f32.xlu0 %v326
  %v344 = vpop.xlane.xlu0 %343
  %345 = vadd.xlane.f32.xlu0 %v327
  %v346 = vpop.xlane.xlu0 %345
  %347 = vadd.xlane.f32.xlu0 %v328
  %v348 = vpop.xlane.xlu0 %347
  %349 = vadd.xlane.f32.xlu0 %v329
  %v350 = vpop.xlane.xlu0 %349
  %351 = vadd.xlane.f32.xlu0 %v330
  %v352 = vpop.xlane.xlu0 %351
  %353 = vadd.xlane.f32.xlu0 %v331
  %v354 = vpop.xlane.xlu0 %353
  %355 = vadd.xlane.f32.xlu0 %v332
  %v356 = vpop.xlane.xlu0 %355
  %357 = vadd.xlane.f32.xlu0 %v333
  %v358 = vpop.xlane.xlu0 %357
  %359 = vadd.xlane.f32.xlu0 %v334
  %v360 = vpop.xlane.xlu0 %359
  %361 = vadd.xlane.f32.xlu0 %v335
  %v362 = vpop.xlane.xlu0 %361
  %363 = vadd.xlane.f32.xlu0 %v336
  %v364 = vpop.xlane.xlu0 %363
  %365 = vadd.xlane.f32.xlu0 %v337
  %v366 = vpop.xlane.xlu0 %365
  %367 = vadd.xlane.f32.xlu0 %v338
  %v368 = vpop.xlane.xlu0 %367
  %369 = vadd.xlane.f32.xlu0 %v339
  %v370 = vpop.xlane.xlu0 %369
  %371 = vadd.xlane.f32.xlu0 %v340
  %v372 = vpop.xlane.xlu0 %371
  %v373 = vadd.f32 %v294, %v302
  %v374 = vadd.f32 %v296, %v304
  %v375 = vadd.f32 %v298, %v306
  %v376 = vadd.f32 %v300, %v308
  %v377 = vadd.f32 %v342, %v350
  %v378 = vadd.f32 %v344, %v352
  %v379 = vadd.f32 %v346, %v354
  %v380 = vadd.f32 %v348, %v356
  %v381 = vadd.f32 %v373, %v310
  %v382 = vadd.f32 %v374, %v312
  %v383 = vadd.f32 %v375, %v314
  %v384 = vadd.f32 %v376, %v316
  %v385 = vadd.f32 %v377, %v358
  %v386 = vadd.f32 %v378, %v360
  %v387 = vadd.f32 %v379, %v362
  %v388 = vadd.f32 %v380, %v364
  %v389 = vadd.f32 %v381, %v318
  %v390 = vadd.f32 %v382, %v320
  %v391 = vadd.f32 %v383, %v322
  %v392 = vadd.f32 %v384, %v324
  %v393 = vadd.f32 %v385, %v366
  %v394 = vadd.f32 %v386, %v368
  %v395 = vadd.f32 %v387, %v370
  %v396 = vadd.f32 %v388, %v372
  %v397 = vmul.f32 %v389, 0.001953125
  %v398 = vmul.f32 %v390, 0.001953125
  %v399 = vmul.f32 %v391, 0.001953125
  %v400 = vmul.f32 %v392, 0.001953125
  %v401 = vmul.f32 %v393, 0.001953125
  %v402 = vmul.f32 %v394, 0.001953125
  %v403 = vmul.f32 %v395, 0.001953125
  %v404 = vmul.f32 %v396, 0.001953125
  %v405 = vmul.f32 %v397, %v397
  %v406 = vmul.f32 %v398, %v398
  %v407 = vmul.f32 %v399, %v399
  %v408 = vmul.f32 %v400, %v400
  %v409 = vsub.f32 %v401, %v405
  %v410 = vsub.f32 %v402, %v406
  %v411 = vsub.f32 %v403, %v407
  %v412 = vsub.f32 %v404, %v408
  %414 = vset.pattern.permute.xlu0 0
  %415 = vperm.xlu0 %414, %v397
  %v416 = vpop.permute.xlu0 %415
  %419 = vset.pattern.permute.xlu0 0
  %420 = vperm.xlu0 %419, %v398
  %v421 = vpop.permute.xlu0 %420
  %424 = vset.pattern.permute.xlu0 0
  %425 = vperm.xlu0 %424, %v399
  %v426 = vpop.permute.xlu0 %425
  %429 = vset.pattern.permute.xlu0 0
  %430 = vperm.xlu0 %429, %v400
  %v431 = vpop.permute.xlu0 %430
  %v433 = vsub.f32 %v254, %v416
  %v434 = vsub.f32 %v256, %v421
  %v435 = vsub.f32 %v259, %v426
  %v436 = vsub.f32 %v261, %v431
  %v437 = vsub.f32 %v264, %v416
  %v438 = vsub.f32 %v266, %v421
  %v439 = vsub.f32 %v269, %v426
  %v440 = vsub.f32 %v271, %v431
  %v441 = vsub.f32 %v274, %v416
  %v442 = vsub.f32 %v276, %v421
  %v443 = vsub.f32 %v279, %v426
  %v444 = vsub.f32 %v281, %v431
  %v445 = vsub.f32 %v284, %v416
  %v446 = vsub.f32 %v286, %v421
  %v447 = vsub.f32 %v289, %v426
  %v448 = vsub.f32 %v291, %v431
  %v449 = vadd.f32 %v409, 1e-05
  %v450 = vadd.f32 %v410, 1e-05
  %v451 = vadd.f32 %v411, 1e-05
  %v452 = vadd.f32 %v412, 1e-05
  %v453 = vrsqrt.pop %v449
  %v454 = vmul.f32 %v453, %v449
  %v455 = vmul.f32 %v454, %v453
  %v456 = vmul.f32 0.5, %v455
  %v457 = vsub.f32 1.5, %v456
  %v458 = vmul.f32 %v453, %v457
  %vm459 = vweird.f32 %v449
  %vm460 = vweird.f32 %v453
  %vm461 = vmor %vm459, %vm460
  %v462 = vsel %vm461, %v453, %v458
  %v463 = vrsqrt.pop %v450
  %v464 = vmul.f32 %v463, %v450
  %v465 = vmul.f32 %v464, %v463
  %v466 = vmul.f32 0.5, %v465
  %v467 = vsub.f32 1.5, %v466
  %v468 = vmul.f32 %v463, %v467
  %vm469 = vweird.f32 %v450
  %vm470 = vweird.f32 %v463
  %vm471 = vmor %vm469, %vm470
  %v472 = vsel %vm471, %v463, %v468
  %v473 = vrsqrt.pop %v451
  %v474 = vmul.f32 %v473, %v451
  %v475 = vmul.f32 %v474, %v473
  %v476 = vmul.f32 0.5, %v475
  %v477 = vsub.f32 1.5, %v476
  %v478 = vmul.f32 %v473, %v477
  %vm479 = vweird.f32 %v451
  %vm480 = vweird.f32 %v473
  %vm481 = vmor %vm479, %vm480
  %v482 = vsel %vm481, %v473, %v478
  %v483 = vrsqrt.pop %v452
  %v484 = vmul.f32 %v483, %v452
  %v485 = vmul.f32 %v484, %v483
  %v486 = vmul.f32 0.5, %v485
  %v487 = vsub.f32 1.5, %v486
  %v488 = vmul.f32 %v483, %v487
  %vm489 = vweird.f32 %v452
  %vm490 = vweird.f32 %v483
  %vm491 = vmor %vm489, %vm490
  %v492 = vsel %vm491, %v483, %v488
  %494 = vset.pattern.permute.xlu0 0
  %495 = vperm.xlu0 %494, %v462
  %v496 = vpop.permute.xlu0 %495
  %499 = vset.pattern.permute.xlu0 0
  %500 = vperm.xlu0 %499, %v472
  %v501 = vpop.permute.xlu0 %500
  %504 = vset.pattern.permute.xlu0 0
  %505 = vperm.xlu0 %504, %v482
  %v506 = vpop.permute.xlu0 %505
  %509 = vset.pattern.permute.xlu0 0
  %510 = vperm.xlu0 %509, %v492
  %v511 = vpop.permute.xlu0 %510
  %v513 = vmul.f32 %v433, %v496
  %v514 = vmul.f32 %v434, %v501
  %v515 = vmul.f32 %v435, %v506
  %v516 = vmul.f32 %v436, %v511
  %v517 = vmul.f32 %v437, %v496
  %v518 = vmul.f32 %v438, %v501
  %v519 = vmul.f32 %v439, %v506
  %v520 = vmul.f32 %v440, %v511
  %v521 = vmul.f32 %v441, %v496
  %v522 = vmul.f32 %v442, %v501
  %v523 = vmul.f32 %v443, %v506
  %v524 = vmul.f32 %v444, %v511
  %v525 = vmul.f32 %v445, %v496
  %v526 = vmul.f32 %v446, %v501
  %v527 = vmul.f32 %v447, %v506
  %v528 = vmul.f32 %v448, %v511
  %v529 = vld [vmem:[%s3] sm:$0xff]
  %v530 = vld [vmem:[%s3 + $0x8] sm:$0xff]
  %v531 = vld [vmem:[%s3 + $0x10] sm:$0xff]
  %v532 = vld [vmem:[%s3 + $0x18] sm:$0xff]
  %v533 = vld [vmem:[%s3 + $0x20] sm:$0xff]
  %v534 = vld [vmem:[%s3 + $0x28] sm:$0xff]
  %v535 = vld [vmem:[%s3 + $0x30] sm:$0xff]
  %v536 = vld [vmem:[%s3 + $0x38] sm:$0xff]
  %v537 = vld [vmem:[%s3 + $0x40] sm:$0xff]
  %v538 = vld [vmem:[%s3 + $0x48] sm:$0xff]
  %v539 = vld [vmem:[%s3 + $0x50] sm:$0xff]
  %v540 = vld [vmem:[%s3 + $0x58] sm:$0xff]
  %v541 = vld [vmem:[%s3 + $0x60] sm:$0xff]
  %v542 = vld [vmem:[%s3 + $0x68] sm:$0xff]
  %v543 = vld [vmem:[%s3 + $0x70] sm:$0xff]
  %v544 = vld [vmem:[%s3 + $0x78] sm:$0xff]
  %546 = vset.pattern.permute.xlu0 0
  %547 = vperm.xlu0 %546, %v529
  %v548 = vpop.permute.xlu0 %547
  %551 = vset.pattern.permute.xlu0 0
  %552 = vperm.xlu0 %551, %v530
  %v553 = vpop.permute.xlu0 %552
  %556 = vset.pattern.permute.xlu0 0
  %557 = vperm.xlu0 %556, %v531
  %v558 = vpop.permute.xlu0 %557
  %561 = vset.pattern.permute.xlu0 0
  %562 = vperm.xlu0 %561, %v532
  %v563 = vpop.permute.xlu0 %562
  %566 = vset.pattern.permute.xlu0 0
  %567 = vperm.xlu0 %566, %v533
  %v568 = vpop.permute.xlu0 %567
  %571 = vset.pattern.permute.xlu0 0
  %572 = vperm.xlu0 %571, %v534
  %v573 = vpop.permute.xlu0 %572
  %576 = vset.pattern.permute.xlu0 0
  %577 = vperm.xlu0 %576, %v535
  %v578 = vpop.permute.xlu0 %577
  %581 = vset.pattern.permute.xlu0 0
  %582 = vperm.xlu0 %581, %v536
  %v583 = vpop.permute.xlu0 %582
  %586 = vset.pattern.permute.xlu0 0
  %587 = vperm.xlu0 %586, %v537
  %v588 = vpop.permute.xlu0 %587
  %591 = vset.pattern.permute.xlu0 0
  %592 = vperm.xlu0 %591, %v538
  %v593 = vpop.permute.xlu0 %592
  %596 = vset.pattern.permute.xlu0 0
  %597 = vperm.xlu0 %596, %v539
  %v598 = vpop.permute.xlu0 %597
  %601 = vset.pattern.permute.xlu0 0
  %602 = vperm.xlu0 %601, %v540
  %v603 = vpop.permute.xlu0 %602
  %606 = vset.pattern.permute.xlu0 0
  %607 = vperm.xlu0 %606, %v541
  %v608 = vpop.permute.xlu0 %607
  %611 = vset.pattern.permute.xlu0 0
  %612 = vperm.xlu0 %611, %v542
  %v613 = vpop.permute.xlu0 %612
  %616 = vset.pattern.permute.xlu0 0
  %617 = vperm.xlu0 %616, %v543
  %v618 = vpop.permute.xlu0 %617
  %621 = vset.pattern.permute.xlu0 0
  %622 = vperm.xlu0 %621, %v544
  %v623 = vpop.permute.xlu0 %622
  %v625 = vmul.f32 %v513, %v548
  %v626 = vmul.f32 %v514, %v553
  %v627 = vmul.f32 %v515, %v558
  %v628 = vmul.f32 %v516, %v563
  %v629 = vmul.f32 %v517, %v568
  %v630 = vmul.f32 %v518, %v573
  %v631 = vmul.f32 %v519, %v578
  %v632 = vmul.f32 %v520, %v583
  %v633 = vmul.f32 %v521, %v588
  %v634 = vmul.f32 %v522, %v593
  %v635 = vmul.f32 %v523, %v598
  %v636 = vmul.f32 %v524, %v603
  %v637 = vmul.f32 %v525, %v608
  %v638 = vmul.f32 %v526, %v613
  %v639 = vmul.f32 %v527, %v618
  %v640 = vmul.f32 %v528, %v623
  %v641 = vld [vmem:[%s4] sm:$0xff]
  %v642 = vld [vmem:[%s4 + $0x8] sm:$0xff]
  %v643 = vld [vmem:[%s4 + $0x10] sm:$0xff]
  %v644 = vld [vmem:[%s4 + $0x18] sm:$0xff]
  %v645 = vld [vmem:[%s4 + $0x20] sm:$0xff]
  %v646 = vld [vmem:[%s4 + $0x28] sm:$0xff]
  %v647 = vld [vmem:[%s4 + $0x30] sm:$0xff]
  %v648 = vld [vmem:[%s4 + $0x38] sm:$0xff]
  %v649 = vld [vmem:[%s4 + $0x40] sm:$0xff]
  %v650 = vld [vmem:[%s4 + $0x48] sm:$0xff]
  %v651 = vld [vmem:[%s4 + $0x50] sm:$0xff]
  %v652 = vld [vmem:[%s4 + $0x58] sm:$0xff]
  %v653 = vld [vmem:[%s4 + $0x60] sm:$0xff]
  %v654 = vld [vmem:[%s4 + $0x68] sm:$0xff]
  %v655 = vld [vmem:[%s4 + $0x70] sm:$0xff]
  %v656 = vld [vmem:[%s4 + $0x78] sm:$0xff]
  %658 = vset.pattern.permute.xlu0 0
  %659 = vperm.xlu0 %658, %v641
  %v660 = vpop.permute.xlu0 %659
  %663 = vset.pattern.permute.xlu0 0
  %664 = vperm.xlu0 %663, %v642
  %v665 = vpop.permute.xlu0 %664
  %668 = vset.pattern.permute.xlu0 0
  %669 = vperm.xlu0 %668, %v643
  %v670 = vpop.permute.xlu0 %669
  %673 = vset.pattern.permute.xlu0 0
  %674 = vperm.xlu0 %673, %v644
  %v675 = vpop.permute.xlu0 %674
  %678 = vset.pattern.permute.xlu0 0
  %679 = vperm.xlu0 %678, %v645
  %v680 = vpop.permute.xlu0 %679
  %683 = vset.pattern.permute.xlu0 0
  %684 = vperm.xlu0 %683, %v646
  %v685 = vpop.permute.xlu0 %684
  %688 = vset.pattern.permute.xlu0 0
  %689 = vperm.xlu0 %688, %v647
  %v690 = vpop.permute.xlu0 %689
  %693 = vset.pattern.permute.xlu0 0
  %694 = vperm.xlu0 %693, %v648
  %v695 = vpop.permute.xlu0 %694
  %698 = vset.pattern.permute.xlu0 0
  %699 = vperm.xlu0 %698, %v649
  %v700 = vpop.permute.xlu0 %699
  %703 = vset.pattern.permute.xlu0 0
  %704 = vperm.xlu0 %703, %v650
  %v705 = vpop.permute.xlu0 %704
  %708 = vset.pattern.permute.xlu0 0
  %709 = vperm.xlu0 %708, %v651
  %v710 = vpop.permute.xlu0 %709
  %713 = vset.pattern.permute.xlu0 0
  %714 = vperm.xlu0 %713, %v652
  %v715 = vpop.permute.xlu0 %714
  %718 = vset.pattern.permute.xlu0 0
  %719 = vperm.xlu0 %718, %v653
  %v720 = vpop.permute.xlu0 %719
  %723 = vset.pattern.permute.xlu0 0
  %724 = vperm.xlu0 %723, %v654
  %v725 = vpop.permute.xlu0 %724
  %728 = vset.pattern.permute.xlu0 0
  %729 = vperm.xlu0 %728, %v655
  %v730 = vpop.permute.xlu0 %729
  %733 = vset.pattern.permute.xlu0 0
  %734 = vperm.xlu0 %733, %v656
  %v735 = vpop.permute.xlu0 %734
  %v737 = vadd.f32 %v625, %v660
  %v738 = vadd.f32 %v626, %v665
  %v739 = vadd.f32 %v627, %v670
  %v740 = vadd.f32 %v628, %v675
  %v741 = vadd.f32 %v629, %v680
  %v742 = vadd.f32 %v630, %v685
  %v743 = vadd.f32 %v631, %v690
  %v744 = vadd.f32 %v632, %v695
  %v745 = vadd.f32 %v633, %v700
  %v746 = vadd.f32 %v634, %v705
  %v747 = vadd.f32 %v635, %v710
  %v748 = vadd.f32 %v636, %v715
  %v749 = vadd.f32 %v637, %v720
  %v750 = vadd.f32 %v638, %v725
  %v751 = vadd.f32 %v639, %v730
  %v752 = vadd.f32 %v640, %v735
  %vm753 = vcmp.ge.f32.partialorder %v737, 0.0
  %vm754 = vcmp.ge.f32.partialorder %v738, 0.0
  %vm755 = vcmp.ge.f32.partialorder %v739, 0.0
  %vm756 = vcmp.ge.f32.partialorder %v740, 0.0
  %vm757 = vcmp.ge.f32.partialorder %v741, 0.0
  %vm758 = vcmp.ge.f32.partialorder %v742, 0.0
  %vm759 = vcmp.ge.f32.partialorder %v743, 0.0
  %vm760 = vcmp.ge.f32.partialorder %v744, 0.0
  %vm761 = vcmp.ge.f32.partialorder %v745, 0.0
  %vm762 = vcmp.ge.f32.partialorder %v746, 0.0
  %vm763 = vcmp.ge.f32.partialorder %v747, 0.0
  %vm764 = vcmp.ge.f32.partialorder %v748, 0.0
  %vm765 = vcmp.ge.f32.partialorder %v749, 0.0
  %vm766 = vcmp.ge.f32.partialorder %v750, 0.0
  %vm767 = vcmp.ge.f32.partialorder %v751, 0.0
  %vm768 = vcmp.ge.f32.partialorder %v752, 0.0
  %v769 = vmul.f32 %v737, 0.01
  %v770 = vmul.f32 %v738, 0.01
  %v771 = vmul.f32 %v739, 0.01
  %v772 = vmul.f32 %v740, 0.01
  %v773 = vmul.f32 %v741, 0.01
  %v774 = vmul.f32 %v742, 0.01
  %v775 = vmul.f32 %v743, 0.01
  %v776 = vmul.f32 %v744, 0.01
  %v777 = vmul.f32 %v745, 0.01
  %v778 = vmul.f32 %v746, 0.01
  %v779 = vmul.f32 %v747, 0.01
  %v780 = vmul.f32 %v748, 0.01
  %v781 = vmul.f32 %v749, 0.01
  %v782 = vmul.f32 %v750, 0.01
  %v783 = vmul.f32 %v751, 0.01
  %v784 = vmul.f32 %v752, 0.01
  %v785 = vsel %vm753, %v737, %v769
  %v786 = vsel %vm754, %v738, %v770
  %v787 = vsel %vm755, %v739, %v771
  %v788 = vsel %vm756, %v740, %v772
  %v789 = vsel %vm757, %v741, %v773
  %v790 = vsel %vm758, %v742, %v774
  %v791 = vsel %vm759, %v743, %v775
  %v792 = vsel %vm760, %v744, %v776
  %v793 = vsel %vm761, %v745, %v777
  %v794 = vsel %vm762, %v746, %v778
  %v795 = vsel %vm763, %v747, %v779
  %v796 = vsel %vm764, %v748, %v780
  %v797 = vsel %vm765, %v749, %v781
  %v798 = vsel %vm766, %v750, %v782
  %v799 = vsel %vm767, %v751, %v783
  %v800 = vsel %vm768, %v752, %v784
  %801 = vst [vmem:[%s5] sm:$0xff] %v785
  %802 = vst [vmem:[%s5 + $0x8] sm:$0xff] %v786
  %803 = vst [vmem:[%s5 + $0x10] sm:$0xff] %v787
  %804 = vst [vmem:[%s5 + $0x18] sm:$0xff] %v788
  %805 = vst [vmem:[%s5 + $0x20] sm:$0xff] %v789
  %806 = vst [vmem:[%s5 + $0x28] sm:$0xff] %v790
  %807 = vst [vmem:[%s5 + $0x30] sm:$0xff] %v791
  %808 = vst [vmem:[%s5 + $0x38] sm:$0xff] %v792
  %809 = vst [vmem:[%s5 + $0x40] sm:$0xff] %v793
  %810 = vst [vmem:[%s5 + $0x48] sm:$0xff] %v794
  %811 = vst [vmem:[%s5 + $0x50] sm:$0xff] %v795
  %812 = vst [vmem:[%s5 + $0x58] sm:$0xff] %v796
  %813 = vst [vmem:[%s5 + $0x60] sm:$0xff] %v797
  %814 = vst [vmem:[%s5 + $0x68] sm:$0xff] %v798
  %815 = vst [vmem:[%s5 + $0x70] sm:$0xff] %v799
  %816 = vst [vmem:[%s5 + $0x78] sm:$0xff] %v800
  // Predicated region
  $region22: #{cvae_forward.20} parent=0 // pred_check
    _
  $region23: #{cvae_forward.20} parent=0 // pred_check_branch
    %818 = sbr.rel (0) target = $region25
  $region24: #{cvae_forward.20} parent=0 // pred_region
    _
  $region25: #{cvae_forward.20} parent=0 // pred_fallthru
    _
  // Predicated region
  $region26: #{cvae_forward.20} parent=0 // pred_check
    _
  $region27: #{cvae_forward.20} parent=0 // pred_check_branch
    %820 = sbr.rel (0) target = $region29
  $region28: #{cvae_forward.20} parent=0 // pred_region
    _
  $region29: #{cvae_forward.20} parent=0 // pred_fallthru
    _

// kernel: cvae_forward.21
$region0: #{cvae_forward.21}
  #allocation0 [shape = 'u32[]', space=smem, size = 0x4, offset = 0x4, fixed_abs, tag = 'smem constant byte address 0x4 - core index']
  #allocation1 [shape = 'u32[72,128]{1,0:T(1,128)}', space=vmem, size = 0x9000, scoped, tag = 'internal scratch']
  %s0 = inlined_call_operand.vmem [shape: bf16[3,288], index: 0, kind: input, shape index: {}]
  %s1 = inlined_call_operand.vmem [shape: bf16[288,512], index: 1, kind: input, shape index: {}]
  %s2 = inlined_call_operand.vmem [shape: f32[3,1], index: 2, kind: input, shape index: {}]
  %s3 = inlined_call_operand.vmem [shape: f32[3,512], index: 3, kind: output, shape index: {}]
  %s4 = sld [smem:[#allocation0]]
  $region22: #{cvae_forward.21} parent=0
    _
  %s6 = ssub.s32 1, %s4
  %s7 = scalar_select 0, %s6, %s4
  // Predicated region
  $region2: #{cvae_forward.21} parent=0 // pred_check
    _
  $region3: #{cvae_forward.21} parent=0 // pred_check_branch
    %9 = sbr.rel (0) target = $region5
  $region4: #{cvae_forward.21} parent=0 // pred_region
    _
  $region5: #{cvae_forward.21} parent=0 // pred_fallthru
    _
  // Predicated region
  $region6: #{cvae_forward.21} parent=0 // pred_check
    _
  $region7: #{cvae_forward.21} parent=0 // pred_check_branch
    %11 = sbr.rel (0) target = $region9
  $region8: #{cvae_forward.21} parent=0 // pred_region
    _
  $region9: #{cvae_forward.21} parent=0 // pred_fallthru
    _
  // Predicated region
  $region10: #{cvae_forward.21} parent=0 // pred_check
    _
  $region11: #{cvae_forward.21} parent=0 // pred_check_branch
    %13 = sbr.rel (0) target = $region13
  $region12: #{cvae_forward.21} parent=0 // pred_region
    _
  $region13: #{cvae_forward.21} parent=0 // pred_fallthru
    _
  %v15 = vld [vmem:[%s0] sm:$0x3f]
  %v16 = vld [vmem:[%s1] sm:$0xff]
  %v17 = vld [vmem:[%s1 + $0x8] sm:$0xff]
  %v18 = vld [vmem:[%s1 + $0x10] sm:$0xff]
  %v19 = vld [vmem:[%s1 + $0x18] sm:$0xff]
  %v20 = vld [vmem:[%s1 + $0x20] sm:$0xff]
  %v21 = vld [vmem:[%s1 + $0x28] sm:$0xff]
  %v22 = vld [vmem:[%s1 + $0x30] sm:$0xff]
  %v23 = vld [vmem:[%s1 + $0x38] sm:$0xff]
  %v24 = vld [vmem:[%s1 + $0x40] sm:$0xff]
  %v25 = vld [vmem:[%s1 + $0x48] sm:$0xff]
  %v26 = vld [vmem:[%s1 + $0x50] sm:$0xff]
  %v27 = vld [vmem:[%s1 + $0x58] sm:$0xff]
  %v28 = vld [vmem:[%s1 + $0x60] sm:$0xff]
  %v29 = vld [vmem:[%s1 + $0x68] sm:$0xff]
  %v30 = vld [vmem:[%s1 + $0x70] sm:$0xff]
  %v31 = vld [vmem:[%s1 + $0x78] sm:$0xff]
  %v32 = vld [vmem:[%s1 + $0x80] sm:$0xff]
  %v33 = vld [vmem:[%s1 + $0x88] sm:$0xff]
  %v34 = vld [vmem:[%s1 + $0x90] sm:$0xff]
  %v35 = vld [vmem:[%s1 + $0x98] sm:$0xff]
  %v36 = vld [vmem:[%s1 + $0xa0] sm:$0xff]
  %v37 = vld [vmem:[%s1 + $0xa8] sm:$0xff]
  %v38 = vld [vmem:[%s1 + $0xb0] sm:$0xff]
  %v39 = vld [vmem:[%s1 + $0xb8] sm:$0xff]
  %v40 = vld [vmem:[%s1 + $0xc0] sm:$0xff]
  %v41 = vld [vmem:[%s1 + $0xc8] sm:$0xff]
  %v42 = vld [vmem:[%s1 + $0xd0] sm:$0xff]
  %v43 = vld [vmem:[%s1 + $0xd8] sm:$0xff]
  %v44 = vld [vmem:[%s1 + $0xe0] sm:$0xff]
  %v45 = vld [vmem:[%s1 + $0xe8] sm:$0xff]
  %v46 = vld [vmem:[%s1 + $0xf0] sm:$0xff]
  %v47 = vld [vmem:[%s1 + $0xf8] sm:$0xff]
  %v48 = vld [vmem:[%s1 + $0x100] sm:$0xff]
  %v49 = vld [vmem:[%s1 + $0x108] sm:$0xff]
  %v50 = vld [vmem:[%s1 + $0x110] sm:$0xff]
  %v51 = vld [vmem:[%s1 + $0x118] sm:$0xff]
  %v52 = vld [vmem:[%s1 + $0x120] sm:$0xff]
  %v53 = vld [vmem:[%s1 + $0x128] sm:$0xff]
  %v54 = vld [vmem:[%s1 + $0x130] sm:$0xff]
  %v55 = vld [vmem:[%s1 + $0x138] sm:$0xff]
  %v56 = vld [vmem:[%s1 + $0x140] sm:$0xff]
  %v57 = vld [vmem:[%s1 + $0x148] sm:$0xff]
  %v58 = vld [vmem:[%s1 + $0x150] sm:$0xff]
  %v59 = vld [vmem:[%s1 + $0x158] sm:$0xff]
  %v60 = vld [vmem:[%s1 + $0x160] sm:$0xff]
  %v61 = vld [vmem:[%s1 + $0x168] sm:$0xff]
  %v62 = vld [vmem:[%s1 + $0x170] sm:$0xff]
  %v63 = vld [vmem:[%s1 + $0x178] sm:$0xff]
  %v64 = vld [vmem:[%s1 + $0x180] sm:$0xff]
  %v65 = vld [vmem:[%s1 + $0x188] sm:$0xff]
  %v66 = vld [vmem:[%s1 + $0x190] sm:$0xff]
  %v67 = vld [vmem:[%s1 + $0x198] sm:$0xff]
  %v68 = vld [vmem:[%s1 + $0x1a0] sm:$0xff]
  %v69 = vld [vmem:[%s1 + $0x1a8] sm:$0xff]
  %v70 = vld [vmem:[%s1 + $0x1b0] sm:$0xff]
  %v71 = vld [vmem:[%s1 + $0x1b8] sm:$0xff]
  %v72 = vld [vmem:[%s1 + $0x1c0] sm:$0xff]
  %v73 = vld [vmem:[%s1 + $0x1c8] sm:$0xff]
  %v74 = vld [vmem:[%s1 + $0x1d0] sm:$0xff]
  %v75 = vld [vmem:[%s1 + $0x1d8] sm:$0xff]
  %v76 = vld [vmem:[%s1 + $0x1e0] sm:$0xff]
  %v77 = vld [vmem:[%s1 + $0x1e8] sm:$0xff]
  %v78 = vld [vmem:[%s1 + $0x1f0] sm:$0xff]
  %v79 = vld [vmem:[%s1 + $0x1f8] sm:$0xff]
  %v80 = vld [vmem:[%s1 + $0x200] sm:$0xff]
  %v81 = vld [vmem:[%s1 + $0x208] sm:$0xff]
  %v82 = vld [vmem:[%s1 + $0x210] sm:$0xff]
  %v83 = vld [vmem:[%s1 + $0x218] sm:$0xff]
  %v84 = vld [vmem:[%s1 + $0x220] sm:$0xff]
  %v85 = vld [vmem:[%s1 + $0x228] sm:$0xff]
  %v86 = vld [vmem:[%s1 + $0x230] sm:$0xff]
  %v87 = vld [vmem:[%s1 + $0x238] sm:$0xff]
  %v88 = vld [vmem:[%s2] sm:$0x7]
  %90 = vset.pattern.permute.xlu0 0
  %91 = vperm.xlu0 %90, %v88
  %v92 = vpop.permute.xlu0 %91
  %95 = vst [vmem:[#allocation1] ss:$4 sm:$0xff] %v15
  %v96 = vld.sshfl [vmem:[#allocation1] sm:$0xff pattern:$0x73625140]
  %v97 = vld.sshfl [vmem:[#allocation1 + $0x8] sm:$0xff pattern:$0x73625140]
  %v98 = vld.sshfl [vmem:[#allocation1 + $0x10] sm:$0xff pattern:$0x73625140]
  %v173 = vunpack.c.l.b16 %v16
  %v174 = vunpack.c.h.b16 %v16
  %v175 = vunpack.c.l.b16 %v17
  %v176 = vunpack.c.h.b16 %v17
  %v177 = vunpack.c.l.b16 %v18
  %v178 = vunpack.c.h.b16 %v18
  %v179 = vunpack.c.l.b16 %v19
  %v180 = vunpack.c.h.b16 %v19
  %v181 = vunpack.c.l.b16 %v20
  %v182 = vunpack.c.h.b16 %v20
  %v183 = vunpack.c.l.b16 %v21
  %v184 = vunpack.c.h.b16 %v21
  %v185 = vunpack.c.l.b16 %v22
  %v186 = vunpack.c.h.b16 %v22
  %v187 = vunpack.c.l.b16 %v23
  %v188 = vunpack.c.h.b16 %v23
  %v189 = vunpack.c.l.b16 %v24
  %v190 = vunpack.c.h.b16 %v24
  %v191 = vunpack.c.l.b16 %v25
  %v192 = vunpack.c.h.b16 %v25
  %v193 = vunpack.c.l.b16 %v26
  %v194 = vunpack.c.h.b16 %v26
  %v195 = vunpack.c.l.b16 %v27
  %v196 = vunpack.c.h.b16 %v27
  %v197 = vunpack.c.l.b16 %v28
  %v198 = vunpack.c.h.b16 %v28
  %v199 = vunpack.c.l.b16 %v29
  %v200 = vunpack.c.h.b16 %v29
  %v201 = vunpack.c.l.b16 %v30
  %v202 = vunpack.c.h.b16 %v30
  %v203 = vunpack.c.l.b16 %v31
  %v204 = vunpack.c.h.b16 %v31
  %v205 = vunpack.c.l.b16 %v32
  %v206 = vunpack.c.h.b16 %v32
  %v207 = vunpack.c.l.b16 %v33
  %v208 = vunpack.c.h.b16 %v33
  %v209 = vunpack.c.l.b16 %v34
  %v210 = vunpack.c.h.b16 %v34
  %v211 = vunpack.c.l.b16 %v35
  %v212 = vunpack.c.h.b16 %v35
  %v213 = vunpack.c.l.b16 %v36
  %v214 = vunpack.c.h.b16 %v36
  %v215 = vunpack.c.l.b16 %v37
  %v216 = vunpack.c.h.b16 %v37
  %v217 = vunpack.c.l.b16 %v38
  %v218 = vunpack.c.h.b16 %v38
  %v219 = vunpack.c.l.b16 %v39
  %v220 = vunpack.c.h.b16 %v39
  %v221 = vunpack.c.l.b16 %v40
  %v222 = vunpack.c.h.b16 %v40
  %v223 = vunpack.c.l.b16 %v41
  %v224 = vunpack.c.h.b16 %v41
  %v225 = vunpack.c.l.b16 %v42
  %v226 = vunpack.c.h.b16 %v42
  %v227 = vunpack.c.l.b16 %v43
  %v228 = vunpack.c.h.b16 %v43
  %v229 = vunpack.c.l.b16 %v44
  %v230 = vunpack.c.h.b16 %v44
  %v231 = vunpack.c.l.b16 %v45
  %v232 = vunpack.c.h.b16 %v45
  %v233 = vunpack.c.l.b16 %v46
  %v234 = vunpack.c.h.b16 %v46
  %v235 = vunpack.c.l.b16 %v47
  %v236 = vunpack.c.h.b16 %v47
  %v237 = vunpack.c.l.b16 %v48
  %v238 = vunpack.c.h.b16 %v48
  %v239 = vunpack.c.l.b16 %v49
  %v240 = vunpack.c.h.b16 %v49
  %v241 = vunpack.c.l.b16 %v50
  %v242 = vunpack.c.h.b16 %v50
  %v243 = vunpack.c.l.b16 %v51
  %v244 = vunpack.c.h.b16 %v51
  %v245 = vunpack.c.l.b16 %v52
  %v246 = vunpack.c.h.b16 %v52
  %v247 = vunpack.c.l.b16 %v53
  %v248 = vunpack.c.h.b16 %v53
  %v249 = vunpack.c.l.b16 %v54
  %v250 = vunpack.c.h.b16 %v54
  %v251 = vunpack.c.l.b16 %v55
  %v252 = vunpack.c.h.b16 %v55
  %v253 = vunpack.c.l.b16 %v56
  %v254 = vunpack.c.h.b16 %v56
  %v255 = vunpack.c.l.b16 %v57
  %v256 = vunpack.c.h.b16 %v57
  %v257 = vunpack.c.l.b16 %v58
  %v258 = vunpack.c.h.b16 %v58
  %v259 = vunpack.c.l.b16 %v59
  %v260 = vunpack.c.h.b16 %v59
  %v261 = vunpack.c.l.b16 %v60
  %v262 = vunpack.c.h.b16 %v60
  %v263 = vunpack.c.l.b16 %v61
  %v264 = vunpack.c.h.b16 %v61
  %v265 = vunpack.c.l.b16 %v62
  %v266 = vunpack.c.h.b16 %v62
  %v267 = vunpack.c.l.b16 %v63
  %v268 = vunpack.c.h.b16 %v63
  %v269 = vunpack.c.l.b16 %v64
  %v270 = vunpack.c.h.b16 %v64
  %v271 = vunpack.c.l.b16 %v65
  %v272 = vunpack.c.h.b16 %v65
  %v273 = vunpack.c.l.b16 %v66
  %v274 = vunpack.c.h.b16 %v66
  %v275 = vunpack.c.l.b16 %v67
  %v276 = vunpack.c.h.b16 %v67
  %v277 = vunpack.c.l.b16 %v68
  %v278 = vunpack.c.h.b16 %v68
  %v279 = vunpack.c.l.b16 %v69
  %v280 = vunpack.c.h.b16 %v69
  %v281 = vunpack.c.l.b16 %v70
  %v282 = vunpack.c.h.b16 %v70
  %v283 = vunpack.c.l.b16 %v71
  %v284 = vunpack.c.h.b16 %v71
  %v285 = vunpack.c.l.b16 %v72
  %v286 = vunpack.c.h.b16 %v72
  %v287 = vunpack.c.l.b16 %v73
  %v288 = vunpack.c.h.b16 %v73
  %v289 = vunpack.c.l.b16 %v74
  %v290 = vunpack.c.h.b16 %v74
  %v291 = vunpack.c.l.b16 %v75
  %v292 = vunpack.c.h.b16 %v75
  %v293 = vunpack.c.l.b16 %v76
  %v294 = vunpack.c.h.b16 %v76
  %v295 = vunpack.c.l.b16 %v77
  %v296 = vunpack.c.h.b16 %v77
  %v297 = vunpack.c.l.b16 %v78
  %v298 = vunpack.c.h.b16 %v78
  %v299 = vunpack.c.l.b16 %v79
  %v300 = vunpack.c.h.b16 %v79
  %v301 = vunpack.c.l.b16 %v80
  %v302 = vunpack.c.h.b16 %v80
  %v303 = vunpack.c.l.b16 %v81
  %v304 = vunpack.c.h.b16 %v81
  %v305 = vunpack.c.l.b16 %v82
  %v306 = vunpack.c.h.b16 %v82
  %v307 = vunpack.c.l.b16 %v83
  %v308 = vunpack.c.h.b16 %v83
  %v309 = vunpack.c.l.b16 %v84
  %v310 = vunpack.c.h.b16 %v84
  %v311 = vunpack.c.l.b16 %v85
  %v312 = vunpack.c.h.b16 %v85
  %v313 = vunpack.c.l.b16 %v86
  %v314 = vunpack.c.h.b16 %v86
  %v315 = vunpack.c.l.b16 %v87
  %v316 = vunpack.c.h.b16 %v87
  %v317 = vpack.c.b16 %v177, %v173
  %v318 = vpack.c.b16 %v178, %v174
  %v319 = vpack.c.b16 %v179, %v175
  %v320 = vpack.c.b16 %v180, %v176
  %v321 = vpack.c.b16 %v185, %v181
  %v322 = vpack.c.b16 %v186, %v182
  %v323 = vpack.c.b16 %v187, %v183
  %v324 = vpack.c.b16 %v188, %v184
  %v325 = vpack.c.b16 %v193, %v189
  %v326 = vpack.c.b16 %v194, %v190
  %v327 = vpack.c.b16 %v195, %v191
  %v328 = vpack.c.b16 %v196, %v192
  %v329 = vpack.c.b16 %v201, %v197
  %v330 = vpack.c.b16 %v202, %v198
  %v331 = vpack.c.b16 %v203, %v199
  %v332 = vpack.c.b16 %v204, %v200
  %v333 = vpack.c.b16 %v209, %v205
  %v334 = vpack.c.b16 %v210, %v206
  %v335 = vpack.c.b16 %v211, %v207
  %v336 = vpack.c.b16 %v212, %v208
  %v337 = vpack.c.b16 %v217, %v213
  %v338 = vpack.c.b16 %v218, %v214
  %v339 = vpack.c.b16 %v219, %v215
  %v340 = vpack.c.b16 %v220, %v216
  %v341 = vpack.c.b16 %v225, %v221
  %v342 = vpack.c.b16 %v226, %v222
  %v343 = vpack.c.b16 %v227, %v223
  %v344 = vpack.c.b16 %v228, %v224
  %v345 = vpack.c.b16 %v233, %v229
  %v346 = vpack.c.b16 %v234, %v230
  %v347 = vpack.c.b16 %v235, %v231
  %v348 = vpack.c.b16 %v236, %v232
  %v349 = vpack.c.b16 %v241, %v237
  %v350 = vpack.c.b16 %v242, %v238
  %v351 = vpack.c.b16 %v243, %v239
  %v352 = vpack.c.b16 %v244, %v240
  %v353 = vpack.c.b16 %v249, %v245
  %v354 = vpack.c.b16 %v250, %v246
  %v355 = vpack.c.b16 %v251, %v247
  %v356 = vpack.c.b16 %v252, %v248
  %v357 = vpack.c.b16 %v257, %v253
  %v358 = vpack.c.b16 %v258, %v254
  %v359 = vpack.c.b16 %v259, %v255
  %v360 = vpack.c.b16 %v260, %v256
  %v361 = vpack.c.b16 %v265, %v261
  %v362 = vpack.c.b16 %v266, %v262
  %v363 = vpack.c.b16 %v267, %v263
  %v364 = vpack.c.b16 %v268, %v264
  %v365 = vpack.c.b16 %v273, %v269
  %v366 = vpack.c.b16 %v274, %v270
  %v367 = vpack.c.b16 %v275, %v271
  %v368 = vpack.c.b16 %v276, %v272
  %v369 = vpack.c.b16 %v281, %v277
  %v370 = vpack.c.b16 %v282, %v278
  %v371 = vpack.c.b16 %v283, %v279
  %v372 = vpack.c.b16 %v284, %v280
  %v373 = vpack.c.b16 %v289, %v285
  %v374 = vpack.c.b16 %v290, %v286
  %v375 = vpack.c.b16 %v291, %v287
  %v376 = vpack.c.b16 %v292, %v288
  %v377 = vpack.c.b16 %v297, %v293
  %v378 = vpack.c.b16 %v298, %v294
  %v379 = vpack.c.b16 %v299, %v295
  %v380 = vpack.c.b16 %v300, %v296
  %v381 = vpack.c.b16 %v305, %v301
  %v382 = vpack.c.b16 %v306, %v302
  %v383 = vpack.c.b16 %v307, %v303
  %v384 = vpack.c.b16 %v308, %v304
  %v385 = vpack.c.b16 %v313, %v309
  %v386 = vpack.c.b16 %v314, %v310
  %v387 = vpack.c.b16 %v315, %v311
  %v388 = vpack.c.b16 %v316, %v312
  %vm461 = vcmask 261120
  %v462 = vsel %vm461, %v98, 0
  %464 = vmatpush.bf16.msra.mxu0 %v345
  %465 = vmatpush.bf16.msra.mxu0 %v341
  %466 = vmatpush.bf16.msra.mxu0 %v337
  %467 = vmatpush.bf16.msra.mxu0 %v333
  %468 = vmatpush.bf16.msra.mxu0 %v329
  %469 = vmatpush.bf16.msra.mxu0 %v325
  %470 = vmatpush.bf16.msra.mxu0 %v321
  %471 = vmatpush.bf16.msra.mxu0 %v317
  %472 = vmatmul.bf16.gmra.mxu0 %v96
  %v473 = vpop.f32.mrf.mxu0
  %v474 = vadd.f32 %v92, %v473
  %v475 = vpop.f32.mrf.mxu0
  %476 = vdwg.mxu0
  %477 = vmatpush.bf16.msra.mxu0 %v377
  %478 = vmatpush.bf16.msra.mxu0 %v373
  %479 = vmatpush.bf16.msra.mxu0 %v369
  %480 = vmatpush.bf16.msra.mxu0 %v365
  %481 = vmatpush.bf16.msra.mxu0 %v361
  %482 = vmatpush.bf16.msra.mxu0 %v357
  %483 = vmatpush.bf16.msra.mxu0 %v353
  %484 = vmatpush.bf16.msra.mxu0 %v349
  %485 = vmatmul.bf16.gmra.mxu0 %v97
  %v486 = vpop.f32.mrf.mxu0
  %v487 = vadd.f32 %v474, %v486
  %v488 = vpop.f32.mrf.mxu0
  %489 = vdwg.mxu0
  %490 = vmatpush.bf16.msra.mxu0 0
  %491 = vmatpush.bf16.msra.mxu0 0
  %492 = vmatpush.bf16.msra.mxu0 0
  %493 = vmatpush.bf16.msra.mxu0 0
  %494 = vmatpush.bf16.msra.mxu0 0
  %495 = vmatpush.bf16.msra.mxu0 0
  %496 = vmatpush.bf16.msra.mxu0 %v385
  %497 = vmatpush.bf16.msra.mxu0 %v381
  %498 = vmatmul.bf16.gmra.mxu0 %v462
  %v499 = vpop.f32.mrf.mxu0
  %v500 = vadd.f32 %v487, %v499
  %v501 = vpop.f32.mrf.mxu0
  %502 = vdwg.mxu0
  %503 = vmatpush.bf16.msra.mxu0 %v346
  %504 = vmatpush.bf16.msra.mxu0 %v342
  %505 = vmatpush.bf16.msra.mxu0 %v338
  %506 = vmatpush.bf16.msra.mxu0 %v334
  %507 = vmatpush.bf16.msra.mxu0 %v330
  %508 = vmatpush.bf16.msra.mxu0 %v326
  %509 = vmatpush.bf16.msra.mxu0 %v322
  %510 = vmatpush.bf16.msra.mxu0 %v318
  %511 = vmatmul.bf16.gmra.mxu0 %v96
  %v512 = vpop.f32.mrf.mxu0
  %v513 = vadd.f32 %v92, %v512
  %v514 = vpop.f32.mrf.mxu0
  %515 = vdwg.mxu0
  %516 = vmatpush.bf16.msra.mxu0 %v378
  %517 = vmatpush.bf16.msra.mxu0 %v374
  %518 = vmatpush.bf16.msra.mxu0 %v370
  %519 = vmatpush.bf16.msra.mxu0 %v366
  %520 = vmatpush.bf16.msra.mxu0 %v362
  %521 = vmatpush.bf16.msra.mxu0 %v358
  %522 = vmatpush.bf16.msra.mxu0 %v354
  %523 = vmatpush.bf16.msra.mxu0 %v350
  %524 = vmatmul.bf16.gmra.mxu0 %v97
  %v525 = vpop.f32.mrf.mxu0
  %v526 = vadd.f32 %v513, %v525
  %v527 = vpop.f32.mrf.mxu0
  %528 = vdwg.mxu0
  %529 = vmatpush.bf16.msra.mxu0 0
  %530 = vmatpush.bf16.msra.mxu0 0
  %531 = vmatpush.bf16.msra.mxu0 0
  %532 = vmatpush.bf16.msra.mxu0 0
  %533 = vmatpush.bf16.msra.mxu0 0
  %534 = vmatpush.bf16.msra.mxu0 0
  %535 = vmatpush.bf16.msra.mxu0 %v386
  %536 = vmatpush.bf16.msra.mxu0 %v382
  %537 = vmatmul.bf16.gmra.mxu0 %v462
  %v538 = vpop.f32.mrf.mxu0
  %v539 = vadd.f32 %v526, %v538
  %v540 = vpop.f32.mrf.mxu0
  %541 = vdwg.mxu0
  %542 = vmatpush.bf16.msra.mxu0 %v347
  %543 = vmatpush.bf16.msra.mxu0 %v343
  %544 = vmatpush.bf16.msra.mxu0 %v339
  %545 = vmatpush.bf16.msra.mxu0 %v335
  %546 = vmatpush.bf16.msra.mxu0 %v331
  %547 = vmatpush.bf16.msra.mxu0 %v327
  %548 = vmatpush.bf16.msra.mxu0 %v323
  %549 = vmatpush.bf16.msra.mxu0 %v319
  %550 = vmatmul.bf16.gmra.mxu0 %v96
  %v551 = vpop.f32.mrf.mxu0
  %v552 = vadd.f32 %v92, %v551
  %v553 = vpop.f32.mrf.mxu0
  %554 = vdwg.mxu0
  %555 = vmatpush.bf16.msra.mxu0 %v379
  %556 = vmatpush.bf16.msra.mxu0 %v375
  %557 = vmatpush.bf16.msra.mxu0 %v371
  %558 = vmatpush.bf16.msra.mxu0 %v367
  %559 = vmatpush.bf16.msra.mxu0 %v363
  %560 = vmatpush.bf16.msra.mxu0 %v359
  %561 = vmatpush.bf16.msra.mxu0 %v355
  %562 = vmatpush.bf16.msra.mxu0 %v351
  %563 = vmatmul.bf16.gmra.mxu0 %v97
  %v564 = vpop.f32.mrf.mxu0
  %v565 = vadd.f32 %v552, %v564
  %v566 = vpop.f32.mrf.mxu0
  %567 = vdwg.mxu0
  %568 = vmatpush.bf16.msra.mxu0 0
  %569 = vmatpush.bf16.msra.mxu0 0
  %570 = vmatpush.bf16.msra.mxu0 0
  %571 = vmatpush.bf16.msra.mxu0 0
  %572 = vmatpush.bf16.msra.mxu0 0
  %573 = vmatpush.bf16.msra.mxu0 0
  %574 = vmatpush.bf16.msra.mxu0 %v387
  %575 = vmatpush.bf16.msra.mxu0 %v383
  %576 = vmatmul.bf16.gmra.mxu0 %v462
  %v577 = vpop.f32.mrf.mxu0
  %v578 = vadd.f32 %v565, %v577
  %v579 = vpop.f32.mrf.mxu0
  %580 = vdwg.mxu0
  %581 = vmatpush.bf16.msra.mxu0 %v348
  %582 = vmatpush.bf16.msra.mxu0 %v344
  %583 = vmatpush.bf16.msra.mxu0 %v340
  %584 = vmatpush.bf16.msra.mxu0 %v336
  %585 = vmatpush.bf16.msra.mxu0 %v332
  %586 = vmatpush.bf16.msra.mxu0 %v328
  %587 = vmatpush.bf16.msra.mxu0 %v324
  %588 = vmatpush.bf16.msra.mxu0 %v320
  %589 = vmatmul.bf16.gmra.mxu0 %v96
  %v590 = vpop.f32.mrf.mxu0
  %v591 = vadd.f32 %v92, %v590
  %v592 = vpop.f32.mrf.mxu0
  %593 = vdwg.mxu0
  %594 = vmatpush.bf16.msra.mxu0 %v380
  %595 = vmatpush.bf16.msra.mxu0 %v376
  %596 = vmatpush.bf16.msra.mxu0 %v372
  %597 = vmatpush.bf16.msra.mxu0 %v368
  %598 = vmatpush.bf16.msra.mxu0 %v364
  %599 = vmatpush.bf16.msra.mxu0 %v360
  %600 = vmatpush.bf16.msra.mxu0 %v356
  %601 = vmatpush.bf16.msra.mxu0 %v352
  %602 = vmatmul.bf16.gmra.mxu0 %v97
  %v603 = vpop.f32.mrf.mxu0
  %v604 = vadd.f32 %v591, %v603
  %v605 = vpop.f32.mrf.mxu0
  %606 = vdwg.mxu0
  %607 = vmatpush.bf16.msra.mxu0 0
  %608 = vmatpush.bf16.msra.mxu0 0
  %609 = vmatpush.bf16.msra.mxu0 0
  %610 = vmatpush.bf16.msra.mxu0 0
  %611 = vmatpush.bf16.msra.mxu0 0
  %612 = vmatpush.bf16.msra.mxu0 0
  %613 = vmatpush.bf16.msra.mxu0 %v388
  %614 = vmatpush.bf16.msra.mxu0 %v384
  %615 = vmatmul.bf16.gmra.mxu0 %v462
  %v616 = vpop.f32.mrf.mxu0
  %v617 = vadd.f32 %v604, %v616
  %v618 = vpop.f32.mrf.mxu0
  %619 = vdwg.mxu0
  %v620 = vtanh.pop %v500
  %v621 = vtanh.pop %v539
  %v622 = vtanh.pop %v578
  %v623 = vtanh.pop %v617
  %v628 = vrot.slane %v621, 4
  %v629 = vrot.slane %v623, 4
  %vm630 = vcmask 1043456
  %v631 = vsel %vm630, %v620, %v628
  %v632 = vsel %vm630, %v622, %v629
  %635 = vst [vmem:[%s3] sm:$0x77] %v631
  %636 = vst [vmem:[%s3 + $0x8] sm:$0x77] %v632
  // Predicated region
  $region14: #{cvae_forward.21} parent=0 // pred_check
    _
  $region15: #{cvae_forward.21} parent=0 // pred_check_branch
    %638 = sbr.rel (0) target = $region17
  $region16: #{cvae_forward.21} parent=0 // pred_region
    _
  $region17: #{cvae_forward.21} parent=0 // pred_fallthru
    _
  // Predicated region
  $region18: #{cvae_forward.21} parent=0 // pred_check
    _
  $region19: #{cvae_forward.21} parent=0 // pred_check_branch
    %640 = sbr.rel (0) target = $region21
  $region20: #{cvae_forward.21} parent=0 // pred_region
    _
  $region21: #{cvae_forward.21} parent=0 // pred_fallthru
    _

</llo_original>
